<compile_context>
chip_gen: v5e
topology: v5e:2x2
jax: 0.10.0
libtpu: 0.0.40
codegen_flags: <defaults>
</compile_context>

<pallas_src>
import functools

import jax
import jax.numpy as jnp
from jax.experimental import pallas as pl
from jax.experimental.pallas import tpu as pltpu

LN_EPS = 1e-5          # PyTorch nn.LayerNorm default
NEG_INF = -1e30        # additive mask for padded KV positions

# Per-layer parameters, stacked over layers along a leading axis; weights are
# stored pre-transposed to (In, Out).
STACKED_ORDER = (
    "sa_wq", "sa_wk", "sa_wv", "sa_wo", "sa_bq", "sa_bk", "sa_bv", "sa_bo",
    "ca_wq", "ca_wk", "ca_wv", "ca_wo", "ca_bq", "ca_bk", "ca_bv", "ca_bo",
    "w1", "b1", "w2", "b2",
    "g1", "be1", "g2", "be2", "g3", "be3",
)
_WEIGHT_NAMES = {"sa_wq", "sa_wk", "sa_wv", "sa_wo",
                 "ca_wq", "ca_wk", "ca_wv", "ca_wo", "w1", "w2"}


# ---------------------------------------------------------------------------
# Fused forward kernel (one grid step = one decoder layer of one batch block)
# ---------------------------------------------------------------------------
def _fused_kernel(num_heads,
                  txt_ref, img_ref, pool_ref, smask_ref, xmask_ref,
                  tproj_w, tproj_b, vproj_w, vproj_b, out_w, out_b,
                  *rest):
    n_stacked = len(STACKED_ORDER)
    lrefs = dict(zip(STACKED_ORDER, rest[:n_stacked]))   # (1, ...) layer slabs
    logits_ref = rest[n_stacked]
    x_scr, mem_scr = rest[n_stacked + 1], rest[n_stacked + 2]

    BN, Tp, Et = txt_ref.shape
    Sp, Ev = img_ref.shape[1], img_ref.shape[2]
    D = tproj_w.shape[1]
    H = num_heads
    Dh = D // H
    scale = 1.0 / float(Dh) ** 0.5
    cdt = tproj_w.dtype                 # MXU input dtype (bf16 by default)
    l = pl.program_id(1)                # layer index ('arbitrary' grid axis)

    def dense(x, w, b):
        # x: (M, In), w: (In, Out) pre-transposed, b: (1, Out) f32
        return jnp.dot(x.astype(w.dtype), w,
                       preferred_element_type=jnp.float32) + b

    def layer_norm(x, g, b):
        mu = jnp.mean(x, axis=-1, keepdims=True)
        xc = x - mu
        var = jnp.mean(xc * xc, axis=-1, keepdims=True)
        return xc * jax.lax.rsqrt(var + LN_EPS) * g + b

    def mha(q_rows, q_len, kv_rows, kv_len, kv_mask,
            wq, wk, wv, wo, bq, bk, bv, bo):
        # Full-width Q/K/V projections over ALL (batch*seq) rows: 3 MXU matmuls.
        q = dense(q_rows, wq, bq) * scale        # fold 1/sqrt(Dh) into q
        k = dense(kv_rows, wk, bk)
        v = dense(kv_rows, wv, bv)
        q3 = q.reshape(BN, q_len, D).astype(cdt)
        k3 = k.reshape(BN, kv_len, D).astype(cdt)
        v3 = v.reshape(BN, kv_len, D).astype(cdt)
        heads = []
        for h in range(H):  # static unroll; score/PV math batched over N
            lo = h * Dh
            qh = q3[:, :, lo:lo + Dh]
            kh = k3[:, :, lo:lo + Dh]
            vh = v3[:, :, lo:lo + Dh]
            s = jnp.einsum('nqd,nkd->nqk', qh, kh,
                           preferred_element_type=jnp.float32)
            s = s + kv_mask                                  # mask padded keys
            s = s - jnp.max(s, axis=-1, keepdims=True)
            p = jnp.exp(s)                                   # f32 softmax stats
            inv = pl.reciprocal(jnp.sum(p, axis=-1, keepdims=True),
                                approx=True)
            heads.append(jnp.einsum('nqk,nkd->nqd', p.astype(cdt), vh,
                                    preferred_element_type=jnp.float32) * inv)
        # Single (D, D) output projection on the lane-concatenated head outputs
        # (replaces H tiny K=Dh matmuls + H-1 accumulator adds).
        attn = jnp.concatenate(heads, axis=-1).reshape(BN * q_len, D)
        return dense(attn, wo, bo)

    # --- layer 0: fused text / vision input projections -> scratch ----------
    @pl.when(l == 0)
    def _():
        x_scr[...] = dense(txt_ref[...].reshape(BN * Tp, Et),
                           tproj_w[...], tproj_b[...])
        mem_scr[...] = dense(img_ref[...].reshape(BN * Sp, Ev),
                             vproj_w[...], vproj_b[...]).astype(mem_scr.dtype)

    # --- one TransformerDecoderLayer (dropout = identity, eval mode) --------
    x = x_scr[...]                       # residual stream, f32
    mem = mem_scr[...]                   # encoded image memory, bf16
    smask = smask_ref[...]               # (1, Tp) additive self-attn key mask
    xmask = xmask_ref[...]               # (1, Sp) additive cross-attn key mask

    sa = mha(x, Tp, x, Tp, smask,
             lrefs["sa_wq"][0], lrefs["sa_wk"][0], lrefs["sa_wv"][0],
             lrefs["sa_wo"][0], lrefs["sa_bq"][0], lrefs["sa_bk"][0],
             lrefs["sa_bv"][0], lrefs["sa_bo"][0])
    x = layer_norm(x + sa, lrefs["g1"][0], lrefs["be1"][0])

    ca = mha(x, Tp, mem, Sp, xmask,
             lrefs["ca_wq"][0], lrefs["ca_wk"][0], lrefs["ca_wv"][0],
             lrefs["ca_wo"][0], lrefs["ca_bq"][0], lrefs["ca_bk"][0],
             lrefs["ca_bv"][0], lrefs["ca_bo"][0])
    x = layer_norm(x + ca, lrefs["g2"][0], lrefs["be2"][0])

    # FFN: ReLU + immediate bf16 cast so the (M, d_ff) slab feeding the second
    # matmul is half-width.  TODO(synk): row-chunk the d_ff intermediate for
    # very large batch blocks.
    h1 = jnp.maximum(dense(x, lrefs["w1"][0], lrefs["b1"][0]), 0.0).astype(cdt)
    ff = dense(h1, lrefs["w2"][0], lrefs["b2"][0])
    x = layer_norm(x + ff, lrefs["g3"][0], lrefs["be3"][0])
    x_scr[...] = x

    # --- last layer: fused EOS pooling + output head -------------------------
    @pl.when(l == pl.num_programs(1) - 1)
    def _():
        x3 = x.reshape(BN, Tp, D)
        pooled = jnp.sum(x3 * pool_ref[...][:, :, None], axis=1)   # (BN, D)
        logits_ref[...] = dense(pooled, out_w[...], out_b[...])


# ---------------------------------------------------------------------------
# pallas_call wrapper
# ---------------------------------------------------------------------------
def _fused_forward(txt, img, pool, smask, xmask, packed, *,
                   num_heads, batch_block=None):
    N, Tp, Et = txt.shape
    Sp, Ev = img.shape[1], img.shape[2]
    D = packed["text_proj_w"].shape[1]
    out_dim = packed["out_w"].shape[1]
    d_ff = packed["w1"].shape[2]
    L = packed["sa_wq"].shape[0]
    cdt = packed["text_proj_w"].dtype
    assert D % num_heads == 0

    if batch_block is None:
        # v7x megacore: prefer >=2 'parallel' grid steps, but only while each
        # block keeps >= 256 rows (batch_block * Tp) so the big dense / FFN
        # matmuls stay in the MXU-bound regime (~240 rows v5e, ~310 v7x,
        # ~680 v6e break-even).  Otherwise run the whole batch as one block.
        if N % 2 == 0 and (N // 2) % 8 == 0 and (N // 2) * Tp >= 256:
            batch_block = N // 2
        else:
            batch_block = N
    assert N % batch_block == 0
    assert batch_block == N or batch_block % 8 == 0, (
        "batch_block must equal N or be a multiple of 8")
    nb = N // batch_block
    bb = batch_block

    const_keys = ("text_proj_w", "text_proj_b", "vis_proj_w", "vis_proj_b",
                  "out_w", "out_b")
    const_args = [packed[k] for k in const_keys]
    layer_args = [packed[k] for k in STACKED_ORDER]

    def const_spec(a):   # fetched once, resident across the whole grid
        return pl.BlockSpec(a.shape, lambda b, l, _nd=a.ndim: (0,) * _nd)

    def layer_spec(a):   # one layer's slab per 'arbitrary' step (streamed)
        blk = (1,) + a.shape[1:]
        nd = a.ndim
        return pl.BlockSpec(blk,
                            lambda b, l, _nd=nd: (l,) + (0,) * (_nd - 1))

    in_specs = [
        pl.BlockSpec((bb, Tp, Et), lambda b, l: (b, 0, 0)),
        pl.BlockSpec((bb, Sp, Ev), lambda b, l: (b, 0, 0)),
        pl.BlockSpec((bb, Tp), lambda b, l: (b, 0)),
        pl.BlockSpec((1, Tp), lambda b, l: (0, 0)),
        pl.BlockSpec((1, Sp), lambda b, l: (0, 0)),
    ] + [const_spec(a) for a in const_args] + [layer_spec(a) for a in layer_args]

    scratch_shapes = [
        pltpu.VMEM((bb * Tp, D), jnp.float32),   # residual stream
        pltpu.VMEM((bb * Sp, D), cdt),           # encoded image memory
    ]

    # --- cost estimate (advisory, helps XLA schedule around the custom call) -
    flops = 2 * nb * (
        bb * Tp * Et * D + bb * Sp * Ev * D
        + L * (4 * bb * Tp * D * D                  # self-attn q,k,v,out proj
               + 2 * bb * Tp * Tp * D               # self-attn scores + PV
               + 2 * bb * Tp * D * D                # cross-attn q, out proj
               + 2 * bb * Sp * D * D                # cross-attn k, v proj
               + 2 * bb * Tp * Sp * D               # cross-attn scores + PV
               + 2 * bb * Tp * D * d_ff)            # FFN
        + bb * D * out_dim)
    transcendentals = nb * L * bb * num_heads * Tp * (Tp + Sp)
    weight_bytes = sum(int(a.size) * a.dtype.itemsize
                       for a in const_args + layer_args)
    io_bytes = (int(txt.size) * txt.dtype.itemsize
                + int(img.size) * img.dtype.itemsize
                + int(pool.size) * 4 + N * out_dim * 4)
    cost = pl.CostEstimate(flops=int(flops),
                           transcendentals=int(transcendentals),
                           bytes_accessed=int(weight_bytes * nb + io_bytes))

    # --- explicit scoped-VMEM budget -----------------------------------------
    per_layer_bytes = sum(
        int(packed[k].size // L) * packed[k].dtype.itemsize
        for k in STACKED_ORDER)
    const_bytes = sum(int(a.size) * a.dtype.itemsize for a in const_args)
    cdt_bytes = jnp.dtype(cdt).itemsize
    block_in_bytes = ((bb * Tp * Et + bb * Sp * Ev) * cdt_bytes
                      + bb * Tp * 4 + (Tp + Sp) * 4)
    scratch_bytes = bb * Tp * D * 4 + bb * Sp * D * cdt_bytes
    act_bytes = bb * Tp * (6 * d_ff + 24 * D) + bb * Tp * max(Tp, Sp) * 8
    est = (2 * per_layer_bytes + 2 * const_bytes + 2 * block_in_bytes
           + scratch_bytes + act_bytes + 2 * bb * out_dim * 4)
    vmem_limit = int(min(max(32 * 2**20, int(1.5 * est) + 4 * 2**20),
                         128 * 2**20))

    return pl.pallas_call(
        functools.partial(_fused_kernel, num_heads),
        grid=(nb, L),
        out_shape=jax.ShapeDtypeStruct((N, out_dim), jnp.float32),
        in_specs=in_specs,
        out_specs=pl.BlockSpec((bb, out_dim), lambda b, l: (b, 0)),
        scratch_shapes=scratch_shapes,
        compiler_params=pltpu.CompilerParams(
            dimension_semantics=("parallel", "arbitrary"),
            vmem_limit_bytes=vmem_limit),
        cost_estimate=cost,
    )(txt, img, pool, smask, xmask, *const_args, *layer_args)


# ---------------------------------------------------------------------------
# Parameter init (PyTorch layout) + one-time packing for the kernel
# ---------------------------------------------------------------------------
def init_params(key, *, e_text, e_vis, d_model, d_ff, num_layers, out_dim):
    keys = iter(jax.random.split(key, 128))

    def w(shape):
        return 0.02 * jax.random.normal(next(keys), shape, dtype=jnp.float32)

    def zeros(shape):
        return jnp.zeros(shape, jnp.float32)

    def ones(shape):
        return jnp.ones(shape, jnp.float32)

    layers = []
    for _ in range(num_layers):
        lp = {}
        for pre in ("sa", "ca"):  # self_attn / multihead_attn
            for nm in ("wq", "wk", "wv", "wo"):
                lp[f"{pre}_{nm}"] = w((d_model, d_model))
            for nm in ("bq", "bk", "bv", "bo"):
                lp[f"{pre}_{nm}"] = zeros((1, d_model))
        lp["w1"] = w((d_ff, d_model)); lp["b1"] = zeros((1, d_ff))
        lp["w2"] = w((d_model, d_ff)); lp["b2"] = zeros((1, d_model))
        for i in (1, 2, 3):
            lp[f"g{i}"] = ones((1, d_model))
            lp[f"be{i}"] = zeros((1, d_model))
        layers.append(lp)

    return {
        "layers": layers,
        "text_proj_w": w((d_model, e_text)), "text_proj_b": zeros((1, d_model)),
        "vis_proj_w": w((d_model, e_vis)), "vis_proj_b": zeros((1, d_model)),
        "out_w": w((out_dim, d_model)), "out_b": zeros((1, out_dim)),
    }


def pack_params(params, compute_dtype=jnp.bfloat16):
    """Transpose weights to (In, Out), cast to the MXU input dtype, and stack
    per-layer parameters along a leading layer axis (streamed per grid step)."""
    def tw(w):  # PyTorch (Out, In) -> (In, Out)
        return jnp.asarray(w, compute_dtype).T

    packed = {
        "text_proj_w": tw(params["text_proj_w"]),
        "text_proj_b": jnp.asarray(params["text_proj_b"], jnp.float32),
        "vis_proj_w": tw(params["vis_proj_w"]),
        "vis_proj_b": jnp.asarray(params["vis_proj_b"], jnp.float32),
        "out_w": tw(params["out_w"]),
        "out_b": jnp.asarray(params["out_b"], jnp.float32),
    }
    layers = params["layers"]
    for name in STACKED_ORDER:
        if name in _WEIGHT_NAMES:
            packed[name] = jnp.stack([tw(lp[name]) for lp in layers])
        else:
            packed[name] = jnp.stack(
                [jnp.asarray(lp[name], jnp.float32) for lp in layers])
    return packed


# ---------------------------------------------------------------------------
# Forward pass (mirrors VqaTransformerDecoder.forward after the CLIP towers)
# ---------------------------------------------------------------------------
def vqa_transformer_decoder_forward(text_features, image_features, input_ids,
                                    packed_params, *, num_heads, eos_token_id,
                                    batch_block=None):
    N, T, _ = text_features.shape
    S = image_features.shape[1]
    cdt = packed_params["text_proj_w"].dtype

    # Pad sequence lengths to sublane multiples so in-kernel reshapes are free
    # views; padded KV positions are removed from the softmax via an additive
    # mask (padded query rows never feed the pooled output).
    def round_up(v, m):
        return (v + m - 1) // m * m

    Tp, Sp = round_up(T, 8), round_up(S, 8)
    txt = jnp.pad(text_features, ((0, 0), (0, Tp - T), (0, 0))).astype(cdt)
    img = jnp.pad(image_features, ((0, 0), (0, Sp - S), (0, 0))).astype(cdt)
    smask = jnp.where(jnp.arange(Tp) < T, 0.0, NEG_INF)[None, :].astype(jnp.float32)
    xmask = jnp.where(jnp.arange(Sp) < S, 0.0, NEG_INF)[None, :].astype(jnp.float32)

    # EOS pooling index -> 2-D one-hot selector (fused into the kernel as a
    # masked reduction instead of a separate gather launch).
    ids = input_ids.astype(jnp.int32)
    if eos_token_id == 2:
        idx = jnp.argmax(ids, axis=-1)
    else:
        idx = jnp.argmax((ids == eos_token_id).astype(jnp.int32), axis=-1)
    pool = jax.nn.one_hot(idx, Tp, dtype=jnp.float32)          # (N, Tp)

    logits = _fused_forward(txt, img, pool, smask, xmask, packed_params,
                            num_heads=num_heads, batch_block=batch_block)

    # Mirrors PyTorch `.squeeze()` (squeezes all size-1 dims, incl. out_dim=1).
    return jnp.squeeze(logits)
    # TODO(synk): BCE/CE loss branch (labels) not implemented; forward is
    # called with labels=None, returning logits only.  Dropout is identity
    # (eval mode).


# ---------------------------------------------------------------------------
if __name__ == "__main__":
    # Small shapes consistent with the module.
    N, T, S = 2, 8, 10                  # batch, text seq, image patch seq
    E_TEXT, E_VIS = 48, 64              # text_embed_dim, vision_embed_dim
    D_MODEL, D_FF = 32, 64              # projection_dim, dim_feedforward
    NUM_HEADS, NUM_LAYERS = 4, 2
    NUM_LABELS = 2                      # -> output_dim = 1
    EOS_TOKEN_ID = 5                    # != 2, so "first eos" pooling branch

    key = jax.random.PRNGKey(0)
    k_text, k_img, k_ids, k_params = jax.random.split(key, 4)

    text_features = jax.random.normal(k_text, (N, T, E_TEXT), jnp.float32)
    image_features = jax.random.normal(k_img, (N, S, E_VIS), jnp.float32)
    input_ids = jax.random.randint(k_ids, (N, T), 0, 5)
    input_ids = input_ids.at[:, T - 1].set(EOS_TOKEN_ID)  # guarantee an EOS

    params = init_params(
        k_params,
        e_text=E_TEXT, e_vis=E_VIS, d_model=D_MODEL, d_ff=D_FF,
        num_layers=NUM_LAYERS, out_dim=1 if NUM_LABELS == 2 else NUM_LABELS,
    )
    packed = pack_params(params, compute_dtype=jnp.bfloat16)

    logits = vqa_transformer_decoder_forward(
        text_features, image_features, input_ids, packed,
        num_heads=NUM_HEADS, eos_token_id=EOS_TOKEN_ID,
    )
    jax.block_until_ready(logits)
    assert logits.shape == (N,)
    print("KERNEL_OK")
</pallas_src>

<mosaic_0001>
module attributes {stable_mosaic.version = 11 : i64} {
  func.func @_fused_kernel(%arg0: i32, %arg1: i32, %arg2: memref<2x8x48xbf16, #tpu.memory_space<vmem>>, %arg3: memref<2x16x64xbf16, #tpu.memory_space<vmem>>, %arg4: memref<2x8xf32, #tpu.memory_space<vmem>>, %arg5: memref<1x8xf32, #tpu.memory_space<vmem>>, %arg6: memref<1x16xf32, #tpu.memory_space<vmem>>, %arg7: memref<48x32xbf16, #tpu.memory_space<vmem>>, %arg8: memref<1x32xf32, #tpu.memory_space<vmem>>, %arg9: memref<64x32xbf16, #tpu.memory_space<vmem>>, %arg10: memref<1x32xf32, #tpu.memory_space<vmem>>, %arg11: memref<32x1xbf16, #tpu.memory_space<vmem>>, %arg12: memref<1x1xf32, #tpu.memory_space<vmem>>, %arg13: memref<1x32x32xbf16, #tpu.memory_space<vmem>>, %arg14: memref<1x32x32xbf16, #tpu.memory_space<vmem>>, %arg15: memref<1x32x32xbf16, #tpu.memory_space<vmem>>, %arg16: memref<1x32x32xbf16, #tpu.memory_space<vmem>>, %arg17: memref<1x1x32xf32, #tpu.memory_space<vmem>>, %arg18: memref<1x1x32xf32, #tpu.memory_space<vmem>>, %arg19: memref<1x1x32xf32, #tpu.memory_space<vmem>>, %arg20: memref<1x1x32xf32, #tpu.memory_space<vmem>>, %arg21: memref<1x32x32xbf16, #tpu.memory_space<vmem>>, %arg22: memref<1x32x32xbf16, #tpu.memory_space<vmem>>, %arg23: memref<1x32x32xbf16, #tpu.memory_space<vmem>>, %arg24: memref<1x32x32xbf16, #tpu.memory_space<vmem>>, %arg25: memref<1x1x32xf32, #tpu.memory_space<vmem>>, %arg26: memref<1x1x32xf32, #tpu.memory_space<vmem>>, %arg27: memref<1x1x32xf32, #tpu.memory_space<vmem>>, %arg28: memref<1x1x32xf32, #tpu.memory_space<vmem>>, %arg29: memref<1x32x64xbf16, #tpu.memory_space<vmem>>, %arg30: memref<1x1x64xf32, #tpu.memory_space<vmem>>, %arg31: memref<1x64x32xbf16, #tpu.memory_space<vmem>>, %arg32: memref<1x1x32xf32, #tpu.memory_space<vmem>>, %arg33: memref<1x1x32xf32, #tpu.memory_space<vmem>>, %arg34: memref<1x1x32xf32, #tpu.memory_space<vmem>>, %arg35: memref<1x1x32xf32, #tpu.memory_space<vmem>>, %arg36: memref<1x1x32xf32, #tpu.memory_space<vmem>>, %arg37: memref<1x1x32xf32, #tpu.memory_space<vmem>>, %arg38: memref<1x1x32xf32, #tpu.memory_space<vmem>>, %arg39: memref<2x1xf32, #tpu.memory_space<vmem>>, %arg40: memref<16x32xf32, #tpu.memory_space<vmem>>, %arg41: memref<32x32xbf16, #tpu.memory_space<vmem>>) attributes {dimension_semantics = [#tpu.dimension_semantics<parallel>, #tpu.dimension_semantics<arbitrary>], iteration_bounds = array<i64: 1, 2>, scalar_prefetch = 0 : i64, scratch_operands = 2 : i64, tpu.core_type = #tpu.core_type<tc>, window_params = [{transform_indices = @transform_0, window_bounds = array<i64: 2, 8, 48>}, {transform_indices = @transform_1, window_bounds = array<i64: 2, 16, 64>}, {transform_indices = @transform_2, window_bounds = array<i64: 2, 8>}, {pipeline_mode = #tpu.pipeline_mode<synchronous>, transform_indices = @transform_3, window_bounds = array<i64: 1, 8>}, {pipeline_mode = #tpu.pipeline_mode<synchronous>, transform_indices = @transform_4, window_bounds = array<i64: 1, 16>}, {pipeline_mode = #tpu.pipeline_mode<synchronous>, transform_indices = @transform_5, window_bounds = array<i64: 48, 32>}, {pipeline_mode = #tpu.pipeline_mode<synchronous>, transform_indices = @transform_6, window_bounds = array<i64: 1, 32>}, {pipeline_mode = #tpu.pipeline_mode<synchronous>, transform_indices = @transform_7, window_bounds = array<i64: 64, 32>}, {pipeline_mode = #tpu.pipeline_mode<synchronous>, transform_indices = @transform_8, window_bounds = array<i64: 1, 32>}, {pipeline_mode = #tpu.pipeline_mode<synchronous>, transform_indices = @transform_9, window_bounds = array<i64: 32, 1>}, {pipeline_mode = #tpu.pipeline_mode<synchronous>, transform_indices = @transform_10, window_bounds = array<i64: 1, 1>}, {transform_indices = @transform_11, window_bounds = array<i64: 1, 32, 32>}, {transform_indices = @transform_12, window_bounds = array<i64: 1, 32, 32>}, {transform_indices = @transform_13, window_bounds = array<i64: 1, 32, 32>}, {transform_indices = @transform_14, window_bounds = array<i64: 1, 32, 32>}, {transform_indices = @transform_15, window_bounds = array<i64: 1, 1, 32>}, {transform_indices = @transform_16, window_bounds = array<i64: 1, 1, 32>}, {transform_indices = @transform_17, window_bounds = array<i64: 1, 1, 32>}, {transform_indices = @transform_18, window_bounds = array<i64: 1, 1, 32>}, {transform_indices = @transform_19, window_bounds = array<i64: 1, 32, 32>}, {transform_indices = @transform_20, window_bounds = array<i64: 1, 32, 32>}, {transform_indices = @transform_21, window_bounds = array<i64: 1, 32, 32>}, {transform_indices = @transform_22, window_bounds = array<i64: 1, 32, 32>}, {transform_indices = @transform_23, window_bounds = array<i64: 1, 1, 32>}, {transform_indices = @transform_24, window_bounds = array<i64: 1, 1, 32>}, {transform_indices = @transform_25, window_bounds = array<i64: 1, 1, 32>}, {transform_indices = @transform_26, window_bounds = array<i64: 1, 1, 32>}, {transform_indices = @transform_27, window_bounds = array<i64: 1, 32, 64>}, {transform_indices = @transform_28, window_bounds = array<i64: 1, 1, 64>}, {transform_indices = @transform_29, window_bounds = array<i64: 1, 64, 32>}, {transform_indices = @transform_30, window_bounds = array<i64: 1, 1, 32>}, {transform_indices = @transform_31, window_bounds = array<i64: 1, 1, 32>}, {transform_indices = @transform_32, window_bounds = array<i64: 1, 1, 32>}, {transform_indices = @transform_33, window_bounds = array<i64: 1, 1, 32>}, {transform_indices = @transform_34, window_bounds = array<i64: 1, 1, 32>}, {transform_indices = @transform_35, window_bounds = array<i64: 1, 1, 32>}, {transform_indices = @transform_36, window_bounds = array<i64: 1, 1, 32>}, {transform_indices = @transform_37, window_bounds = array<i64: 2, 1>}]} {
    %c0_i32 = arith.constant 0 : i32
    %0 = arith.cmpi eq, %arg1, %c0_i32 : i32
    %1 = arith.extui %0 : i1 to i32
    %c0_i32_0 = arith.constant 0 : i32
    %2 = arith.cmpi ne, %1, %c0_i32_0 : i32
    scf.if %2 {
      %c0_148 = arith.constant 0 : index
      %c0_149 = arith.constant 0 : index
      %c0_150 = arith.constant 0 : index
      %338 = vector.load %arg2[%c0_148, %c0_149, %c0_150] : memref<2x8x48xbf16, #tpu.memory_space<vmem>>, vector<2x8x48xbf16>
      %339 = vector.shape_cast %338 : vector<2x8x48xbf16> to vector<16x48xbf16>
      %c0_151 = arith.constant 0 : index
      %c0_152 = arith.constant 0 : index
      %340 = vector.load %arg7[%c0_151, %c0_152] : memref<48x32xbf16, #tpu.memory_space<vmem>>, vector<48x32xbf16>
      %c0_153 = arith.constant 0 : index
      %c0_154 = arith.constant 0 : index
      %341 = vector.load %arg8[%c0_153, %c0_154] : memref<1x32xf32, #tpu.memory_space<vmem>>, vector<1x32xf32>
      %cst_155 = arith.constant dense<0.000000e+00> : vector<16x32xf32>
      %342 = tpu.matmul %339, %340, %cst_155 {dimension_numbers = #tpu.dot_dimension_numbers<[1], [0], [0], [1], [0, 0, 1, 1], [], []>} : vector<16x48xbf16>, vector<48x32xbf16>, vector<16x32xf32> -> vector<16x32xf32>
      %343 = vector.broadcast %341 : vector<1x32xf32> to vector<16x32xf32>
      %344 = arith.addf %342, %343 : vector<16x32xf32>
      %c0_156 = arith.constant 0 : index
      %c0_157 = arith.constant 0 : index
      %345 = vector.load %arg40[%c0_156, %c0_157] : memref<16x32xf32, #tpu.memory_space<vmem>>, vector<16x32xf32>
      tpu.vector_store %arg40[%c0_156, %c0_157], %344 {strides = array<i32>} : memref<16x32xf32, #tpu.memory_space<vmem>>, vector<16x32xf32>,
      %c0_158 = arith.constant 0 : index
      %c0_159 = arith.constant 0 : index
      %c0_160 = arith.constant 0 : index
      %346 = vector.load %arg3[%c0_158, %c0_159, %c0_160] : memref<2x16x64xbf16, #tpu.memory_space<vmem>>, vector<2x16x64xbf16>
      %347 = vector.shape_cast %346 : vector<2x16x64xbf16> to vector<32x64xbf16>
      %c0_161 = arith.constant 0 : index
      %c0_162 = arith.constant 0 : index
      %348 = vector.load %arg9[%c0_161, %c0_162] : memref<64x32xbf16, #tpu.memory_space<vmem>>, vector<64x32xbf16>
      %c0_163 = arith.constant 0 : index
      %c0_164 = arith.constant 0 : index
      %349 = vector.load %arg10[%c0_163, %c0_164] : memref<1x32xf32, #tpu.memory_space<vmem>>, vector<1x32xf32>
      %cst_165 = arith.constant dense<0.000000e+00> : vector<32x32xf32>
      %350 = tpu.matmul %347, %348, %cst_165 {dimension_numbers = #tpu.dot_dimension_numbers<[1], [0], [0], [1], [0, 0, 1, 1], [], []>} : vector<32x64xbf16>, vector<64x32xbf16>, vector<32x32xf32> -> vector<32x32xf32>
      %351 = vector.broadcast %349 : vector<1x32xf32> to vector<32x32xf32>
      %352 = arith.addf %350, %351 : vector<32x32xf32>
      %353 = arith.truncf %352 : vector<32x32xf32> to vector<32x32xbf16>
      %c0_166 = arith.constant 0 : index
      %c0_167 = arith.constant 0 : index
      %354 = vector.load %arg41[%c0_166, %c0_167] : memref<32x32xbf16, #tpu.memory_space<vmem>>, vector<32x32xbf16>
      tpu.vector_store %arg41[%c0_166, %c0_167], %353 {strides = array<i32>} : memref<32x32xbf16, #tpu.memory_space<vmem>>, vector<32x32xbf16>,
    } else {
    }
    %c0 = arith.constant 0 : index
    %c0_1 = arith.constant 0 : index
    %3 = vector.load %arg40[%c0, %c0_1] : memref<16x32xf32, #tpu.memory_space<vmem>>, vector<16x32xf32>
    %c0_2 = arith.constant 0 : index
    %c0_3 = arith.constant 0 : index
    %4 = vector.load %arg41[%c0_2, %c0_3] : memref<32x32xbf16, #tpu.memory_space<vmem>>, vector<32x32xbf16>
    %c0_4 = arith.constant 0 : index
    %c0_5 = arith.constant 0 : index
    %5 = vector.load %arg5[%c0_4, %c0_5] : memref<1x8xf32, #tpu.memory_space<vmem>>, vector<1x8xf32>
    %c0_6 = arith.constant 0 : index
    %c0_7 = arith.constant 0 : index
    %6 = vector.load %arg6[%c0_6, %c0_7] : memref<1x16xf32, #tpu.memory_space<vmem>>, vector<1x16xf32>
    %c0_8 = arith.constant 0 : index
    %c0_9 = arith.constant 0 : index
    %c0_10 = arith.constant 0 : index
    %7 = vector.load %arg13[%c0_8, %c0_9, %c0_10] : memref<1x32x32xbf16, #tpu.memory_space<vmem>>, vector<1x32x32xbf16>
    %8 = vector.shape_cast %7 : vector<1x32x32xbf16> to vector<32x32xbf16>
    %c0_11 = arith.constant 0 : index
    %c0_12 = arith.constant 0 : index
    %c0_13 = arith.constant 0 : index
    %9 = vector.load %arg14[%c0_11, %c0_12, %c0_13] : memref<1x32x32xbf16, #tpu.memory_space<vmem>>, vector<1x32x32xbf16>
    %10 = vector.shape_cast %9 : vector<1x32x32xbf16> to vector<32x32xbf16>
    %c0_14 = arith.constant 0 : index
    %c0_15 = arith.constant 0 : index
    %c0_16 = arith.constant 0 : index
    %11 = vector.load %arg15[%c0_14, %c0_15, %c0_16] : memref<1x32x32xbf16, #tpu.memory_space<vmem>>, vector<1x32x32xbf16>
    %12 = vector.shape_cast %11 : vector<1x32x32xbf16> to vector<32x32xbf16>
    %c0_17 = arith.constant 0 : index
    %c0_18 = arith.constant 0 : index
    %c0_19 = arith.constant 0 : index
    %13 = vector.load %arg16[%c0_17, %c0_18, %c0_19] : memref<1x32x32xbf16, #tpu.memory_space<vmem>>, vector<1x32x32xbf16>
    %14 = vector.shape_cast %13 : vector<1x32x32xbf16> to vector<32x32xbf16>
    %c0_20 = arith.constant 0 : index
    %c0_21 = arith.constant 0 : index
    %c0_22 = arith.constant 0 : index
    %15 = vector.load %arg17[%c0_20, %c0_21, %c0_22] : memref<1x1x32xf32, #tpu.memory_space<vmem>>, vector<1x1x32xf32>
    %16 = vector.shape_cast %15 : vector<1x1x32xf32> to vector<1x32xf32>
    %c0_23 = arith.constant 0 : index
    %c0_24 = arith.constant 0 : index
    %c0_25 = arith.constant 0 : index
    %17 = vector.load %arg18[%c0_23, %c0_24, %c0_25] : memref<1x1x32xf32, #tpu.memory_space<vmem>>, vector<1x1x32xf32>
    %18 = vector.shape_cast %17 : vector<1x1x32xf32> to vector<1x32xf32>
    %c0_26 = arith.constant 0 : index
    %c0_27 = arith.constant 0 : index
    %c0_28 = arith.constant 0 : index
    %19 = vector.load %arg19[%c0_26, %c0_27, %c0_28] : memref<1x1x32xf32, #tpu.memory_space<vmem>>, vector<1x1x32xf32>
    %20 = vector.shape_cast %19 : vector<1x1x32xf32> to vector<1x32xf32>
    %c0_29 = arith.constant 0 : index
    %c0_30 = arith.constant 0 : index
    %c0_31 = arith.constant 0 : index
    %21 = vector.load %arg20[%c0_29, %c0_30, %c0_31] : memref<1x1x32xf32, #tpu.memory_space<vmem>>, vector<1x1x32xf32>
    %22 = vector.shape_cast %21 : vector<1x1x32xf32> to vector<1x32xf32>
    %23 = arith.truncf %3 : vector<16x32xf32> to vector<16x32xbf16>
    %cst = arith.constant dense<0.000000e+00> : vector<16x32xf32>
    %24 = tpu.matmul %23, %8, %cst {dimension_numbers = #tpu.dot_dimension_numbers<[1], [0], [0], [1], [0, 0, 1, 1], [], []>} : vector<16x32xbf16>, vector<32x32xbf16>, vector<16x32xf32> -> vector<16x32xf32>
    %25 = vector.broadcast %16 : vector<1x32xf32> to vector<16x32xf32>
    %26 = arith.addf %24, %25 : vector<16x32xf32>
    %cst_32 = arith.constant 0.353553385 : f32
    %27 = vector.broadcast %cst_32 : f32 to vector<16x32xf32>
    %28 = arith.mulf %26, %27 : vector<16x32xf32>
    %29 = arith.truncf %3 : vector<16x32xf32> to vector<16x32xbf16>
    %cst_33 = arith.constant dense<0.000000e+00> : vector<16x32xf32>
    %30 = tpu.matmul %29, %10, %cst_33 {dimension_numbers = #tpu.dot_dimension_numbers<[1], [0], [0], [1], [0, 0, 1, 1], [], []>} : vector<16x32xbf16>, vector<32x32xbf16>, vector<16x32xf32> -> vector<16x32xf32>
    %31 = vector.broadcast %18 : vector<1x32xf32> to vector<16x32xf32>
    %32 = arith.addf %30, %31 : vector<16x32xf32>
    %33 = arith.truncf %3 : vector<16x32xf32> to vector<16x32xbf16>
    %cst_34 = arith.constant dense<0.000000e+00> : vector<16x32xf32>
    %34 = tpu.matmul %33, %12, %cst_34 {dimension_numbers = #tpu.dot_dimension_numbers<[1], [0], [0], [1], [0, 0, 1, 1], [], []>} : vector<16x32xbf16>, vector<32x32xbf16>, vector<16x32xf32> -> vector<16x32xf32>
    %35 = vector.broadcast %20 : vector<1x32xf32> to vector<16x32xf32>
    %36 = arith.addf %34, %35 : vector<16x32xf32>
    %37 = vector.shape_cast %28 : vector<16x32xf32> to vector<2x8x32xf32>
    %38 = arith.truncf %37 : vector<2x8x32xf32> to vector<2x8x32xbf16>
    %39 = vector.shape_cast %32 : vector<16x32xf32> to vector<2x8x32xf32>
    %40 = arith.truncf %39 : vector<2x8x32xf32> to vector<2x8x32xbf16>
    %41 = vector.shape_cast %36 : vector<16x32xf32> to vector<2x8x32xf32>
    %42 = arith.truncf %41 : vector<2x8x32xf32> to vector<2x8x32xbf16>
    %43 = vector.extract_strided_slice %38 {offsets = [0, 0, 0], sizes = [2, 8, 8], strides = [1, 1, 1]} : vector<2x8x32xbf16> to vector<2x8x8xbf16>
    %44 = vector.extract_strided_slice %40 {offsets = [0, 0, 0], sizes = [2, 8, 8], strides = [1, 1, 1]} : vector<2x8x32xbf16> to vector<2x8x8xbf16>
    %45 = vector.extract_strided_slice %42 {offsets = [0, 0, 0], sizes = [2, 8, 8], strides = [1, 1, 1]} : vector<2x8x32xbf16> to vector<2x8x8xbf16>
    "tpu.trace_start"() <{level = 10 : i32, message = "nqd,nkd->nqk"}> : () -> ()
    %cst_35 = arith.constant dense<0.000000e+00> : vector<2x8x8xf32>
    %46 = tpu.matmul %43, %44, %cst_35 {dimension_numbers = #tpu.dot_dimension_numbers<[2], [2], [1], [1], [0, 0, 0, 1, 1, 1], [0], [0]>} : vector<2x8x8xbf16>, vector<2x8x8xbf16>, vector<2x8x8xf32> -> vector<2x8x8xf32>
    "tpu.trace_stop"() : () -> ()
    %47 = vector.shape_cast %5 : vector<1x8xf32> to vector<1x1x8xf32>
    %48 = vector.broadcast %47 : vector<1x1x8xf32> to vector<2x8x8xf32>
    %49 = arith.addf %46, %48 : vector<2x8x8xf32>
    %cst_36 = arith.constant dense<0xFF800000> : vector<2x8xf32>
    %50 = vector.multi_reduction <maximumf>, %49, %cst_36 [2] : vector<2x8x8xf32> to vector<2x8xf32>
    %51 = vector.shape_cast %50 : vector<2x8xf32> to vector<2x8x1xf32>
    %52 = vector.broadcast %51 : vector<2x8x1xf32> to vector<2x8x8xf32>
    %53 = arith.subf %49, %52 : vector<2x8x8xf32>
    %54 = math.exp %53 : vector<2x8x8xf32>
    %cst_37 = arith.constant dense<0.000000e+00> : vector<2x8xf32>
    %55 = vector.multi_reduction <add>, %54, %cst_37 [2] : vector<2x8x8xf32> to vector<2x8xf32>
    %56 = vector.shape_cast %55 : vector<2x8xf32> to vector<2x8x1xf32>
    %57 = tpu.reciprocal %56 {approx = true} : vector<2x8x1xf32> -> vector<2x8x1xf32>
    %58 = arith.truncf %54 : vector<2x8x8xf32> to vector<2x8x8xbf16>
    "tpu.trace_start"() <{level = 10 : i32, message = "nqk,nkd->nqd"}> : () -> ()
    %cst_38 = arith.constant dense<0.000000e+00> : vector<2x8x8xf32>
    %59 = tpu.matmul %58, %45, %cst_38 {dimension_numbers = #tpu.dot_dimension_numbers<[2], [1], [1], [2], [0, 0, 0, 1, 1, 2], [0], [0]>} : vector<2x8x8xbf16>, vector<2x8x8xbf16>, vector<2x8x8xf32> -> vector<2x8x8xf32>
    "tpu.trace_stop"() : () -> ()
    %60 = vector.broadcast %57 : vector<2x8x1xf32> to vector<2x8x8xf32>
    %61 = arith.mulf %59, %60 : vector<2x8x8xf32>
    %62 = vector.extract_strided_slice %38 {offsets = [0, 0, 8], sizes = [2, 8, 8], strides = [1, 1, 1]} : vector<2x8x32xbf16> to vector<2x8x8xbf16>
    %63 = vector.extract_strided_slice %40 {offsets = [0, 0, 8], sizes = [2, 8, 8], strides = [1, 1, 1]} : vector<2x8x32xbf16> to vector<2x8x8xbf16>
    %64 = vector.extract_strided_slice %42 {offsets = [0, 0, 8], sizes = [2, 8, 8], strides = [1, 1, 1]} : vector<2x8x32xbf16> to vector<2x8x8xbf16>
    "tpu.trace_start"() <{level = 10 : i32, message = "nqd,nkd->nqk"}> : () -> ()
    %cst_39 = arith.constant dense<0.000000e+00> : vector<2x8x8xf32>
    %65 = tpu.matmul %62, %63, %cst_39 {dimension_numbers = #tpu.dot_dimension_numbers<[2], [2], [1], [1], [0, 0, 0, 1, 1, 1], [0], [0]>} : vector<2x8x8xbf16>, vector<2x8x8xbf16>, vector<2x8x8xf32> -> vector<2x8x8xf32>
    "tpu.trace_stop"() : () -> ()
    %66 = vector.shape_cast %5 : vector<1x8xf32> to vector<1x1x8xf32>
    %67 = vector.broadcast %66 : vector<1x1x8xf32> to vector<2x8x8xf32>
    %68 = arith.addf %65, %67 : vector<2x8x8xf32>
    %cst_40 = arith.constant dense<0xFF800000> : vector<2x8xf32>
    %69 = vector.multi_reduction <maximumf>, %68, %cst_40 [2] : vector<2x8x8xf32> to vector<2x8xf32>
    %70 = vector.shape_cast %69 : vector<2x8xf32> to vector<2x8x1xf32>
    %71 = vector.broadcast %70 : vector<2x8x1xf32> to vector<2x8x8xf32>
    %72 = arith.subf %68, %71 : vector<2x8x8xf32>
    %73 = math.exp %72 : vector<2x8x8xf32>
    %cst_41 = arith.constant dense<0.000000e+00> : vector<2x8xf32>
    %74 = vector.multi_reduction <add>, %73, %cst_41 [2] : vector<2x8x8xf32> to vector<2x8xf32>
    %75 = vector.shape_cast %74 : vector<2x8xf32> to vector<2x8x1xf32>
    %76 = tpu.reciprocal %75 {approx = true} : vector<2x8x1xf32> -> vector<2x8x1xf32>
    %77 = arith.truncf %73 : vector<2x8x8xf32> to vector<2x8x8xbf16>
    "tpu.trace_start"() <{level = 10 : i32, message = "nqk,nkd->nqd"}> : () -> ()
    %cst_42 = arith.constant dense<0.000000e+00> : vector<2x8x8xf32>
    %78 = tpu.matmul %77, %64, %cst_42 {dimension_numbers = #tpu.dot_dimension_numbers<[2], [1], [1], [2], [0, 0, 0, 1, 1, 2], [0], [0]>} : vector<2x8x8xbf16>, vector<2x8x8xbf16>, vector<2x8x8xf32> -> vector<2x8x8xf32>
    "tpu.trace_stop"() : () -> ()
    %79 = vector.broadcast %76 : vector<2x8x1xf32> to vector<2x8x8xf32>
    %80 = arith.mulf %78, %79 : vector<2x8x8xf32>
    %81 = vector.extract_strided_slice %38 {offsets = [0, 0, 16], sizes = [2, 8, 8], strides = [1, 1, 1]} : vector<2x8x32xbf16> to vector<2x8x8xbf16>
    %82 = vector.extract_strided_slice %40 {offsets = [0, 0, 16], sizes = [2, 8, 8], strides = [1, 1, 1]} : vector<2x8x32xbf16> to vector<2x8x8xbf16>
    %83 = vector.extract_strided_slice %42 {offsets = [0, 0, 16], sizes = [2, 8, 8], strides = [1, 1, 1]} : vector<2x8x32xbf16> to vector<2x8x8xbf16>
    "tpu.trace_start"() <{level = 10 : i32, message = "nqd,nkd->nqk"}> : () -> ()
    %cst_43 = arith.constant dense<0.000000e+00> : vector<2x8x8xf32>
    %84 = tpu.matmul %81, %82, %cst_43 {dimension_numbers = #tpu.dot_dimension_numbers<[2], [2], [1], [1], [0, 0, 0, 1, 1, 1], [0], [0]>} : vector<2x8x8xbf16>, vector<2x8x8xbf16>, vector<2x8x8xf32> -> vector<2x8x8xf32>
    "tpu.trace_stop"() : () -> ()
    %85 = vector.shape_cast %5 : vector<1x8xf32> to vector<1x1x8xf32>
    %86 = vector.broadcast %85 : vector<1x1x8xf32> to vector<2x8x8xf32>
    %87 = arith.addf %84, %86 : vector<2x8x8xf32>
    %cst_44 = arith.constant dense<0xFF800000> : vector<2x8xf32>
    %88 = vector.multi_reduction <maximumf>, %87, %cst_44 [2] : vector<2x8x8xf32> to vector<2x8xf32>
    %89 = vector.shape_cast %88 : vector<2x8xf32> to vector<2x8x1xf32>
    %90 = vector.broadcast %89 : vector<2x8x1xf32> to vector<2x8x8xf32>
    %91 = arith.subf %87, %90 : vector<2x8x8xf32>
    %92 = math.exp %91 : vector<2x8x8xf32>
    %cst_45 = arith.constant dense<0.000000e+00> : vector<2x8xf32>
    %93 = vector.multi_reduction <add>, %92, %cst_45 [2] : vector<2x8x8xf32> to vector<2x8xf32>
    %94 = vector.shape_cast %93 : vector<2x8xf32> to vector<2x8x1xf32>
    %95 = tpu.reciprocal %94 {approx = true} : vector<2x8x1xf32> -> vector<2x8x1xf32>
    %96 = arith.truncf %92 : vector<2x8x8xf32> to vector<2x8x8xbf16>
    "tpu.trace_start"() <{level = 10 : i32, message = "nqk,nkd->nqd"}> : () -> ()
    %cst_46 = arith.constant dense<0.000000e+00> : vector<2x8x8xf32>
    %97 = tpu.matmul %96, %83, %cst_46 {dimension_numbers = #tpu.dot_dimension_numbers<[2], [1], [1], [2], [0, 0, 0, 1, 1, 2], [0], [0]>} : vector<2x8x8xbf16>, vector<2x8x8xbf16>, vector<2x8x8xf32> -> vector<2x8x8xf32>
    "tpu.trace_stop"() : () -> ()
    %98 = vector.broadcast %95 : vector<2x8x1xf32> to vector<2x8x8xf32>
    %99 = arith.mulf %97, %98 : vector<2x8x8xf32>
    %100 = vector.extract_strided_slice %38 {offsets = [0, 0, 24], sizes = [2, 8, 8], strides = [1, 1, 1]} : vector<2x8x32xbf16> to vector<2x8x8xbf16>
    %101 = vector.extract_strided_slice %40 {offsets = [0, 0, 24], sizes = [2, 8, 8], strides = [1, 1, 1]} : vector<2x8x32xbf16> to vector<2x8x8xbf16>
    %102 = vector.extract_strided_slice %42 {offsets = [0, 0, 24], sizes = [2, 8, 8], strides = [1, 1, 1]} : vector<2x8x32xbf16> to vector<2x8x8xbf16>
    "tpu.trace_start"() <{level = 10 : i32, message = "nqd,nkd->nqk"}> : () -> ()
    %cst_47 = arith.constant dense<0.000000e+00> : vector<2x8x8xf32>
    %103 = tpu.matmul %100, %101, %cst_47 {dimension_numbers = #tpu.dot_dimension_numbers<[2], [2], [1], [1], [0, 0, 0, 1, 1, 1], [0], [0]>} : vector<2x8x8xbf16>, vector<2x8x8xbf16>, vector<2x8x8xf32> -> vector<2x8x8xf32>
    "tpu.trace_stop"() : () -> ()
    %104 = vector.shape_cast %5 : vector<1x8xf32> to vector<1x1x8xf32>
    %105 = vector.broadcast %104 : vector<1x1x8xf32> to vector<2x8x8xf32>
    %106 = arith.addf %103, %105 : vector<2x8x8xf32>
    %cst_48 = arith.constant dense<0xFF800000> : vector<2x8xf32>
    %107 = vector.multi_reduction <maximumf>, %106, %cst_48 [2] : vector<2x8x8xf32> to vector<2x8xf32>
    %108 = vector.shape_cast %107 : vector<2x8xf32> to vector<2x8x1xf32>
    %109 = vector.broadcast %108 : vector<2x8x1xf32> to vector<2x8x8xf32>
    %110 = arith.subf %106, %109 : vector<2x8x8xf32>
    %111 = math.exp %110 : vector<2x8x8xf32>
    %cst_49 = arith.constant dense<0.000000e+00> : vector<2x8xf32>
    %112 = vector.multi_reduction <add>, %111, %cst_49 [2] : vector<2x8x8xf32> to vector<2x8xf32>
    %113 = vector.shape_cast %112 : vector<2x8xf32> to vector<2x8x1xf32>
    %114 = tpu.reciprocal %113 {approx = true} : vector<2x8x1xf32> -> vector<2x8x1xf32>
    %115 = arith.truncf %111 : vector<2x8x8xf32> to vector<2x8x8xbf16>
    "tpu.trace_start"() <{level = 10 : i32, message = "nqk,nkd->nqd"}> : () -> ()
    %cst_50 = arith.constant dense<0.000000e+00> : vector<2x8x8xf32>
    %116 = tpu.matmul %115, %102, %cst_50 {dimension_numbers = #tpu.dot_dimension_numbers<[2], [1], [1], [2], [0, 0, 0, 1, 1, 2], [0], [0]>} : vector<2x8x8xbf16>, vector<2x8x8xbf16>, vector<2x8x8xf32> -> vector<2x8x8xf32>
    "tpu.trace_stop"() : () -> ()
    %117 = vector.broadcast %114 : vector<2x8x1xf32> to vector<2x8x8xf32>
    %118 = arith.mulf %116, %117 : vector<2x8x8xf32>
    %119 = tpu.concatenate %61, %80, %99, %118 in 2 : vector<2x8x8xf32>, vector<2x8x8xf32>, vector<2x8x8xf32>, vector<2x8x8xf32> -> vector<2x8x32xf32>
    %120 = vector.shape_cast %119 : vector<2x8x32xf32> to vector<16x32xf32>
    %121 = arith.truncf %120 : vector<16x32xf32> to vector<16x32xbf16>
    %cst_51 = arith.constant dense<0.000000e+00> : vector<16x32xf32>
    %122 = tpu.matmul %121, %14, %cst_51 {dimension_numbers = #tpu.dot_dimension_numbers<[1], [0], [0], [1], [0, 0, 1, 1], [], []>} : vector<16x32xbf16>, vector<32x32xbf16>, vector<16x32xf32> -> vector<16x32xf32>
    %123 = vector.broadcast %22 : vector<1x32xf32> to vector<16x32xf32>
    %124 = arith.addf %122, %123 : vector<16x32xf32>
    %125 = arith.addf %3, %124 : vector<16x32xf32>
    %c0_52 = arith.constant 0 : index
    %c0_53 = arith.constant 0 : index
    %c0_54 = arith.constant 0 : index
    %126 = vector.load %arg33[%c0_52, %c0_53, %c0_54] : memref<1x1x32xf32, #tpu.memory_space<vmem>>, vector<1x1x32xf32>
    %127 = vector.shape_cast %126 : vector<1x1x32xf32> to vector<1x32xf32>
    %c0_55 = arith.constant 0 : index
    %c0_56 = arith.constant 0 : index
    %c0_57 = arith.constant 0 : index
    %128 = vector.load %arg34[%c0_55, %c0_56, %c0_57] : memref<1x1x32xf32, #tpu.memory_space<vmem>>, vector<1x1x32xf32>
    %129 = vector.shape_cast %128 : vector<1x1x32xf32> to vector<1x32xf32>
    %cst_58 = arith.constant dense<0.000000e+00> : vector<16xf32>
    %130 = vector.multi_reduction <add>, %125, %cst_58 [1] : vector<16x32xf32> to vector<16xf32>
    %131 = vector.shape_cast %130 : vector<16xf32> to vector<16x1xf32>
    %cst_59 = arith.constant 3.200000e+01 : f32
    %132 = vector.broadcast %cst_59 : f32 to vector<16x1xf32>
    %133 = arith.divf %131, %132 : vector<16x1xf32>
    %134 = vector.broadcast %133 : vector<16x1xf32> to vector<16x32xf32>
    %135 = arith.subf %125, %134 : vector<16x32xf32>
    %136 = arith.mulf %135, %135 : vector<16x32xf32>
    %cst_60 = arith.constant dense<0.000000e+00> : vector<16xf32>
    %137 = vector.multi_reduction <add>, %136, %cst_60 [1] : vector<16x32xf32> to vector<16xf32>
    %138 = vector.shape_cast %137 : vector<16xf32> to vector<16x1xf32>
    %cst_61 = arith.constant 3.200000e+01 : f32
    %139 = vector.broadcast %cst_61 : f32 to vector<16x1xf32>
    %140 = arith.divf %138, %139 : vector<16x1xf32>
    %cst_62 = arith.constant 9.99999974E-6 : f32
    %141 = vector.broadcast %cst_62 : f32 to vector<16x1xf32>
    %142 = arith.addf %140, %141 : vector<16x1xf32>
    %143 = math.rsqrt %142 : vector<16x1xf32>
    %144 = vector.broadcast %143 : vector<16x1xf32> to vector<16x32xf32>
    %145 = arith.mulf %135, %144 : vector<16x32xf32>
    %146 = vector.broadcast %127 : vector<1x32xf32> to vector<16x32xf32>
    %147 = arith.mulf %145, %146 : vector<16x32xf32>
    %148 = vector.broadcast %129 : vector<1x32xf32> to vector<16x32xf32>
    %149 = arith.addf %147, %148 : vector<16x32xf32>
    %c0_63 = arith.constant 0 : index
    %c0_64 = arith.constant 0 : index
    %c0_65 = arith.constant 0 : index
    %150 = vector.load %arg21[%c0_63, %c0_64, %c0_65] : memref<1x32x32xbf16, #tpu.memory_space<vmem>>, vector<1x32x32xbf16>
    %151 = vector.shape_cast %150 : vector<1x32x32xbf16> to vector<32x32xbf16>
    %c0_66 = arith.constant 0 : index
    %c0_67 = arith.constant 0 : index
    %c0_68 = arith.constant 0 : index
    %152 = vector.load %arg22[%c0_66, %c0_67, %c0_68] : memref<1x32x32xbf16, #tpu.memory_space<vmem>>, vector<1x32x32xbf16>
    %153 = vector.shape_cast %152 : vector<1x32x32xbf16> to vector<32x32xbf16>
    %c0_69 = arith.constant 0 : index
    %c0_70 = arith.constant 0 : index
    %c0_71 = arith.constant 0 : index
    %154 = vector.load %arg23[%c0_69, %c0_70, %c0_71] : memref<1x32x32xbf16, #tpu.memory_space<vmem>>, vector<1x32x32xbf16>
    %155 = vector.shape_cast %154 : vector<1x32x32xbf16> to vector<32x32xbf16>
    %c0_72 = arith.constant 0 : index
    %c0_73 = arith.constant 0 : index
    %c0_74 = arith.constant 0 : index
    %156 = vector.load %arg24[%c0_72, %c0_73, %c0_74] : memref<1x32x32xbf16, #tpu.memory_space<vmem>>, vector<1x32x32xbf16>
    %157 = vector.shape_cast %156 : vector<1x32x32xbf16> to vector<32x32xbf16>
    %c0_75 = arith.constant 0 : index
    %c0_76 = arith.constant 0 : index
    %c0_77 = arith.constant 0 : index
    %158 = vector.load %arg25[%c0_75, %c0_76, %c0_77] : memref<1x1x32xf32, #tpu.memory_space<vmem>>, vector<1x1x32xf32>
    %159 = vector.shape_cast %158 : vector<1x1x32xf32> to vector<1x32xf32>
    %c0_78 = arith.constant 0 : index
    %c0_79 = arith.constant 0 : index
    %c0_80 = arith.constant 0 : index
    %160 = vector.load %arg26[%c0_78, %c0_79, %c0_80] : memref<1x1x32xf32, #tpu.memory_space<vmem>>, vector<1x1x32xf32>
    %161 = vector.shape_cast %160 : vector<1x1x32xf32> to vector<1x32xf32>
    %c0_81 = arith.constant 0 : index
    %c0_82 = arith.constant 0 : index
    %c0_83 = arith.constant 0 : index
    %162 = vector.load %arg27[%c0_81, %c0_82, %c0_83] : memref<1x1x32xf32, #tpu.memory_space<vmem>>, vector<1x1x32xf32>
    %163 = vector.shape_cast %162 : vector<1x1x32xf32> to vector<1x32xf32>
    %c0_84 = arith.constant 0 : index
    %c0_85 = arith.constant 0 : index
    %c0_86 = arith.constant 0 : index
    %164 = vector.load %arg28[%c0_84, %c0_85, %c0_86] : memref<1x1x32xf32, #tpu.memory_space<vmem>>, vector<1x1x32xf32>
    %165 = vector.shape_cast %164 : vector<1x1x32xf32> to vector<1x32xf32>
    %166 = arith.truncf %149 : vector<16x32xf32> to vector<16x32xbf16>
    %cst_87 = arith.constant dense<0.000000e+00> : vector<16x32xf32>
    %167 = tpu.matmul %166, %151, %cst_87 {dimension_numbers = #tpu.dot_dimension_numbers<[1], [0], [0], [1], [0, 0, 1, 1], [], []>} : vector<16x32xbf16>, vector<32x32xbf16>, vector<16x32xf32> -> vector<16x32xf32>
    %168 = vector.broadcast %159 : vector<1x32xf32> to vector<16x32xf32>
    %169 = arith.addf %167, %168 : vector<16x32xf32>
    %cst_88 = arith.constant 0.353553385 : f32
    %170 = vector.broadcast %cst_88 : f32 to vector<16x32xf32>
    %171 = arith.mulf %169, %170 : vector<16x32xf32>
    %cst_89 = arith.constant dense<0.000000e+00> : vector<32x32xf32>
    %172 = tpu.matmul %4, %153, %cst_89 {dimension_numbers = #tpu.dot_dimension_numbers<[1], [0], [0], [1], [0, 0, 1, 1], [], []>} : vector<32x32xbf16>, vector<32x32xbf16>, vector<32x32xf32> -> vector<32x32xf32>
    %173 = vector.broadcast %161 : vector<1x32xf32> to vector<32x32xf32>
    %174 = arith.addf %172, %173 : vector<32x32xf32>
    %cst_90 = arith.constant dense<0.000000e+00> : vector<32x32xf32>
    %175 = tpu.matmul %4, %155, %cst_90 {dimension_numbers = #tpu.dot_dimension_numbers<[1], [0], [0], [1], [0, 0, 1, 1], [], []>} : vector<32x32xbf16>, vector<32x32xbf16>, vector<32x32xf32> -> vector<32x32xf32>
    %176 = vector.broadcast %163 : vector<1x32xf32> to vector<32x32xf32>
    %177 = arith.addf %175, %176 : vector<32x32xf32>
    %178 = vector.shape_cast %171 : vector<16x32xf32> to vector<2x8x32xf32>
    %179 = arith.truncf %178 : vector<2x8x32xf32> to vector<2x8x32xbf16>
    %180 = vector.shape_cast %174 : vector<32x32xf32> to vector<2x16x32xf32>
    %181 = arith.truncf %180 : vector<2x16x32xf32> to vector<2x16x32xbf16>
    %182 = vector.shape_cast %177 : vector<32x32xf32> to vector<2x16x32xf32>
    %183 = arith.truncf %182 : vector<2x16x32xf32> to vector<2x16x32xbf16>
    %184 = vector.extract_strided_slice %179 {offsets = [0, 0, 0], sizes = [2, 8, 8], strides = [1, 1, 1]} : vector<2x8x32xbf16> to vector<2x8x8xbf16>
    %185 = vector.extract_strided_slice %181 {offsets = [0, 0, 0], sizes = [2, 16, 8], strides = [1, 1, 1]} : vector<2x16x32xbf16> to vector<2x16x8xbf16>
    %186 = vector.extract_strided_slice %183 {offsets = [0, 0, 0], sizes = [2, 16, 8], strides = [1, 1, 1]} : vector<2x16x32xbf16> to vector<2x16x8xbf16>
    "tpu.trace_start"() <{level = 10 : i32, message = "nqd,nkd->nqk"}> : () -> ()
    %cst_91 = arith.constant dense<0.000000e+00> : vector<2x8x16xf32>
    %187 = tpu.matmul %184, %185, %cst_91 {dimension_numbers = #tpu.dot_dimension_numbers<[2], [2], [1], [1], [0, 0, 0, 1, 1, 1], [0], [0]>} : vector<2x8x8xbf16>, vector<2x16x8xbf16>, vector<2x8x16xf32> -> vector<2x8x16xf32>
    "tpu.trace_stop"() : () -> ()
    %188 = vector.shape_cast %6 : vector<1x16xf32> to vector<1x1x16xf32>
    %189 = vector.broadcast %188 : vector<1x1x16xf32> to vector<2x8x16xf32>
    %190 = arith.addf %187, %189 : vector<2x8x16xf32>
    %cst_92 = arith.constant dense<0xFF800000> : vector<2x8xf32>
    %191 = vector.multi_reduction <maximumf>, %190, %cst_92 [2] : vector<2x8x16xf32> to vector<2x8xf32>
    %192 = vector.shape_cast %191 : vector<2x8xf32> to vector<2x8x1xf32>
    %193 = vector.broadcast %192 : vector<2x8x1xf32> to vector<2x8x16xf32>
    %194 = arith.subf %190, %193 : vector<2x8x16xf32>
    %195 = math.exp %194 : vector<2x8x16xf32>
    %cst_93 = arith.constant dense<0.000000e+00> : vector<2x8xf32>
    %196 = vector.multi_reduction <add>, %195, %cst_93 [2] : vector<2x8x16xf32> to vector<2x8xf32>
    %197 = vector.shape_cast %196 : vector<2x8xf32> to vector<2x8x1xf32>
    %198 = tpu.reciprocal %197 {approx = true} : vector<2x8x1xf32> -> vector<2x8x1xf32>
    %199 = arith.truncf %195 : vector<2x8x16xf32> to vector<2x8x16xbf16>
    "tpu.trace_start"() <{level = 10 : i32, message = "nqk,nkd->nqd"}> : () -> ()
    %cst_94 = arith.constant dense<0.000000e+00> : vector<2x8x8xf32>
    %200 = tpu.matmul %199, %186, %cst_94 {dimension_numbers = #tpu.dot_dimension_numbers<[2], [1], [1], [2], [0, 0, 0, 1, 1, 2], [0], [0]>} : vector<2x8x16xbf16>, vector<2x16x8xbf16>, vector<2x8x8xf32> -> vector<2x8x8xf32>
    "tpu.trace_stop"() : () -> ()
    %201 = vector.broadcast %198 : vector<2x8x1xf32> to vector<2x8x8xf32>
    %202 = arith.mulf %200, %201 : vector<2x8x8xf32>
    %203 = vector.extract_strided_slice %179 {offsets = [0, 0, 8], sizes = [2, 8, 8], strides = [1, 1, 1]} : vector<2x8x32xbf16> to vector<2x8x8xbf16>
    %204 = vector.extract_strided_slice %181 {offsets = [0, 0, 8], sizes = [2, 16, 8], strides = [1, 1, 1]} : vector<2x16x32xbf16> to vector<2x16x8xbf16>
    %205 = vector.extract_strided_slice %183 {offsets = [0, 0, 8], sizes = [2, 16, 8], strides = [1, 1, 1]} : vector<2x16x32xbf16> to vector<2x16x8xbf16>
    "tpu.trace_start"() <{level = 10 : i32, message = "nqd,nkd->nqk"}> : () -> ()
    %cst_95 = arith.constant dense<0.000000e+00> : vector<2x8x16xf32>
    %206 = tpu.matmul %203, %204, %cst_95 {dimension_numbers = #tpu.dot_dimension_numbers<[2], [2], [1], [1], [0, 0, 0, 1, 1, 1], [0], [0]>} : vector<2x8x8xbf16>, vector<2x16x8xbf16>, vector<2x8x16xf32> -> vector<2x8x16xf32>
    "tpu.trace_stop"() : () -> ()
    %207 = vector.shape_cast %6 : vector<1x16xf32> to vector<1x1x16xf32>
    %208 = vector.broadcast %207 : vector<1x1x16xf32> to vector<2x8x16xf32>
    %209 = arith.addf %206, %208 : vector<2x8x16xf32>
    %cst_96 = arith.constant dense<0xFF800000> : vector<2x8xf32>
    %210 = vector.multi_reduction <maximumf>, %209, %cst_96 [2] : vector<2x8x16xf32> to vector<2x8xf32>
    %211 = vector.shape_cast %210 : vector<2x8xf32> to vector<2x8x1xf32>
    %212 = vector.broadcast %211 : vector<2x8x1xf32> to vector<2x8x16xf32>
    %213 = arith.subf %209, %212 : vector<2x8x16xf32>
    %214 = math.exp %213 : vector<2x8x16xf32>
    %cst_97 = arith.constant dense<0.000000e+00> : vector<2x8xf32>
    %215 = vector.multi_reduction <add>, %214, %cst_97 [2] : vector<2x8x16xf32> to vector<2x8xf32>
    %216 = vector.shape_cast %215 : vector<2x8xf32> to vector<2x8x1xf32>
    %217 = tpu.reciprocal %216 {approx = true} : vector<2x8x1xf32> -> vector<2x8x1xf32>
    %218 = arith.truncf %214 : vector<2x8x16xf32> to vector<2x8x16xbf16>
    "tpu.trace_start"() <{level = 10 : i32, message = "nqk,nkd->nqd"}> : () -> ()
    %cst_98 = arith.constant dense<0.000000e+00> : vector<2x8x8xf32>
    %219 = tpu.matmul %218, %205, %cst_98 {dimension_numbers = #tpu.dot_dimension_numbers<[2], [1], [1], [2], [0, 0, 0, 1, 1, 2], [0], [0]>} : vector<2x8x16xbf16>, vector<2x16x8xbf16>, vector<2x8x8xf32> -> vector<2x8x8xf32>
    "tpu.trace_stop"() : () -> ()
    %220 = vector.broadcast %217 : vector<2x8x1xf32> to vector<2x8x8xf32>
    %221 = arith.mulf %219, %220 : vector<2x8x8xf32>
    %222 = vector.extract_strided_slice %179 {offsets = [0, 0, 16], sizes = [2, 8, 8], strides = [1, 1, 1]} : vector<2x8x32xbf16> to vector<2x8x8xbf16>
    %223 = vector.extract_strided_slice %181 {offsets = [0, 0, 16], sizes = [2, 16, 8], strides = [1, 1, 1]} : vector<2x16x32xbf16> to vector<2x16x8xbf16>
    %224 = vector.extract_strided_slice %183 {offsets = [0, 0, 16], sizes = [2, 16, 8], strides = [1, 1, 1]} : vector<2x16x32xbf16> to vector<2x16x8xbf16>
    "tpu.trace_start"() <{level = 10 : i32, message = "nqd,nkd->nqk"}> : () -> ()
    %cst_99 = arith.constant dense<0.000000e+00> : vector<2x8x16xf32>
    %225 = tpu.matmul %222, %223, %cst_99 {dimension_numbers = #tpu.dot_dimension_numbers<[2], [2], [1], [1], [0, 0, 0, 1, 1, 1], [0], [0]>} : vector<2x8x8xbf16>, vector<2x16x8xbf16>, vector<2x8x16xf32> -> vector<2x8x16xf32>
    "tpu.trace_stop"() : () -> ()
    %226 = vector.shape_cast %6 : vector<1x16xf32> to vector<1x1x16xf32>
    %227 = vector.broadcast %226 : vector<1x1x16xf32> to vector<2x8x16xf32>
    %228 = arith.addf %225, %227 : vector<2x8x16xf32>
    %cst_100 = arith.constant dense<0xFF800000> : vector<2x8xf32>
    %229 = vector.multi_reduction <maximumf>, %228, %cst_100 [2] : vector<2x8x16xf32> to vector<2x8xf32>
    %230 = vector.shape_cast %229 : vector<2x8xf32> to vector<2x8x1xf32>
    %231 = vector.broadcast %230 : vector<2x8x1xf32> to vector<2x8x16xf32>
    %232 = arith.subf %228, %231 : vector<2x8x16xf32>
    %233 = math.exp %232 : vector<2x8x16xf32>
    %cst_101 = arith.constant dense<0.000000e+00> : vector<2x8xf32>
    %234 = vector.multi_reduction <add>, %233, %cst_101 [2] : vector<2x8x16xf32> to vector<2x8xf32>
    %235 = vector.shape_cast %234 : vector<2x8xf32> to vector<2x8x1xf32>
    %236 = tpu.reciprocal %235 {approx = true} : vector<2x8x1xf32> -> vector<2x8x1xf32>
    %237 = arith.truncf %233 : vector<2x8x16xf32> to vector<2x8x16xbf16>
    "tpu.trace_start"() <{level = 10 : i32, message = "nqk,nkd->nqd"}> : () -> ()
    %cst_102 = arith.constant dense<0.000000e+00> : vector<2x8x8xf32>
    %238 = tpu.matmul %237, %224, %cst_102 {dimension_numbers = #tpu.dot_dimension_numbers<[2], [1], [1], [2], [0, 0, 0, 1, 1, 2], [0], [0]>} : vector<2x8x16xbf16>, vector<2x16x8xbf16>, vector<2x8x8xf32> -> vector<2x8x8xf32>
    "tpu.trace_stop"() : () -> ()
    %239 = vector.broadcast %236 : vector<2x8x1xf32> to vector<2x8x8xf32>
    %240 = arith.mulf %238, %239 : vector<2x8x8xf32>
    %241 = vector.extract_strided_slice %179 {offsets = [0, 0, 24], sizes = [2, 8, 8], strides = [1, 1, 1]} : vector<2x8x32xbf16> to vector<2x8x8xbf16>
    %242 = vector.extract_strided_slice %181 {offsets = [0, 0, 24], sizes = [2, 16, 8], strides = [1, 1, 1]} : vector<2x16x32xbf16> to vector<2x16x8xbf16>
    %243 = vector.extract_strided_slice %183 {offsets = [0, 0, 24], sizes = [2, 16, 8], strides = [1, 1, 1]} : vector<2x16x32xbf16> to vector<2x16x8xbf16>
    "tpu.trace_start"() <{level = 10 : i32, message = "nqd,nkd->nqk"}> : () -> ()
    %cst_103 = arith.constant dense<0.000000e+00> : vector<2x8x16xf32>
    %244 = tpu.matmul %241, %242, %cst_103 {dimension_numbers = #tpu.dot_dimension_numbers<[2], [2], [1], [1], [0, 0, 0, 1, 1, 1], [0], [0]>} : vector<2x8x8xbf16>, vector<2x16x8xbf16>, vector<2x8x16xf32> -> vector<2x8x16xf32>
    "tpu.trace_stop"() : () -> ()
    %245 = vector.shape_cast %6 : vector<1x16xf32> to vector<1x1x16xf32>
    %246 = vector.broadcast %245 : vector<1x1x16xf32> to vector<2x8x16xf32>
    %247 = arith.addf %244, %246 : vector<2x8x16xf32>
    %cst_104 = arith.constant dense<0xFF800000> : vector<2x8xf32>
    %248 = vector.multi_reduction <maximumf>, %247, %cst_104 [2] : vector<2x8x16xf32> to vector<2x8xf32>
    %249 = vector.shape_cast %248 : vector<2x8xf32> to vector<2x8x1xf32>
    %250 = vector.broadcast %249 : vector<2x8x1xf32> to vector<2x8x16xf32>
    %251 = arith.subf %247, %250 : vector<2x8x16xf32>
    %252 = math.exp %251 : vector<2x8x16xf32>
    %cst_105 = arith.constant dense<0.000000e+00> : vector<2x8xf32>
    %253 = vector.multi_reduction <add>, %252, %cst_105 [2] : vector<2x8x16xf32> to vector<2x8xf32>
    %254 = vector.shape_cast %253 : vector<2x8xf32> to vector<2x8x1xf32>
    %255 = tpu.reciprocal %254 {approx = true} : vector<2x8x1xf32> -> vector<2x8x1xf32>
    %256 = arith.truncf %252 : vector<2x8x16xf32> to vector<2x8x16xbf16>
    "tpu.trace_start"() <{level = 10 : i32, message = "nqk,nkd->nqd"}> : () -> ()
    %cst_106 = arith.constant dense<0.000000e+00> : vector<2x8x8xf32>
    %257 = tpu.matmul %256, %243, %cst_106 {dimension_numbers = #tpu.dot_dimension_numbers<[2], [1], [1], [2], [0, 0, 0, 1, 1, 2], [0], [0]>} : vector<2x8x16xbf16>, vector<2x16x8xbf16>, vector<2x8x8xf32> -> vector<2x8x8xf32>
    "tpu.trace_stop"() : () -> ()
    %258 = vector.broadcast %255 : vector<2x8x1xf32> to vector<2x8x8xf32>
    %259 = arith.mulf %257, %258 : vector<2x8x8xf32>
    %260 = tpu.concatenate %202, %221, %240, %259 in 2 : vector<2x8x8xf32>, vector<2x8x8xf32>, vector<2x8x8xf32>, vector<2x8x8xf32> -> vector<2x8x32xf32>
    %261 = vector.shape_cast %260 : vector<2x8x32xf32> to vector<16x32xf32>
    %262 = arith.truncf %261 : vector<16x32xf32> to vector<16x32xbf16>
    %cst_107 = arith.constant dense<0.000000e+00> : vector<16x32xf32>
    %263 = tpu.matmul %262, %157, %cst_107 {dimension_numbers = #tpu.dot_dimension_numbers<[1], [0], [0], [1], [0, 0, 1, 1], [], []>} : vector<16x32xbf16>, vector<32x32xbf16>, vector<16x32xf32> -> vector<16x32xf32>
    %264 = vector.broadcast %165 : vector<1x32xf32> to vector<16x32xf32>
    %265 = arith.addf %263, %264 : vector<16x32xf32>
    %266 = arith.addf %149, %265 : vector<16x32xf32>
    %c0_108 = arith.constant 0 : index
    %c0_109 = arith.constant 0 : index
    %c0_110 = arith.constant 0 : index
    %267 = vector.load %arg35[%c0_108, %c0_109, %c0_110] : memref<1x1x32xf32, #tpu.memory_space<vmem>>, vector<1x1x32xf32>
    %268 = vector.shape_cast %267 : vector<1x1x32xf32> to vector<1x32xf32>
    %c0_111 = arith.constant 0 : index
    %c0_112 = arith.constant 0 : index
    %c0_113 = arith.constant 0 : index
    %269 = vector.load %arg36[%c0_111, %c0_112, %c0_113] : memref<1x1x32xf32, #tpu.memory_space<vmem>>, vector<1x1x32xf32>
    %270 = vector.shape_cast %269 : vector<1x1x32xf32> to vector<1x32xf32>
    %cst_114 = arith.constant dense<0.000000e+00> : vector<16xf32>
    %271 = vector.multi_reduction <add>, %266, %cst_114 [1] : vector<16x32xf32> to vector<16xf32>
    %272 = vector.shape_cast %271 : vector<16xf32> to vector<16x1xf32>
    %cst_115 = arith.constant 3.200000e+01 : f32
    %273 = vector.broadcast %cst_115 : f32 to vector<16x1xf32>
    %274 = arith.divf %272, %273 : vector<16x1xf32>
    %275 = vector.broadcast %274 : vector<16x1xf32> to vector<16x32xf32>
    %276 = arith.subf %266, %275 : vector<16x32xf32>
    %277 = arith.mulf %276, %276 : vector<16x32xf32>
    %cst_116 = arith.constant dense<0.000000e+00> : vector<16xf32>
    %278 = vector.multi_reduction <add>, %277, %cst_116 [1] : vector<16x32xf32> to vector<16xf32>
    %279 = vector.shape_cast %278 : vector<16xf32> to vector<16x1xf32>
    %cst_117 = arith.constant 3.200000e+01 : f32
    %280 = vector.broadcast %cst_117 : f32 to vector<16x1xf32>
    %281 = arith.divf %279, %280 : vector<16x1xf32>
    %cst_118 = arith.constant 9.99999974E-6 : f32
    %282 = vector.broadcast %cst_118 : f32 to vector<16x1xf32>
    %283 = arith.addf %281, %282 : vector<16x1xf32>
    %284 = math.rsqrt %283 : vector<16x1xf32>
    %285 = vector.broadcast %284 : vector<16x1xf32> to vector<16x32xf32>
    %286 = arith.mulf %276, %285 : vector<16x32xf32>
    %287 = vector.broadcast %268 : vector<1x32xf32> to vector<16x32xf32>
    %288 = arith.mulf %286, %287 : vector<16x32xf32>
    %289 = vector.broadcast %270 : vector<1x32xf32> to vector<16x32xf32>
    %290 = arith.addf %288, %289 : vector<16x32xf32>
    %c0_119 = arith.constant 0 : index
    %c0_120 = arith.constant 0 : index
    %c0_121 = arith.constant 0 : index
    %291 = vector.load %arg29[%c0_119, %c0_120, %c0_121] : memref<1x32x64xbf16, #tpu.memory_space<vmem>>, vector<1x32x64xbf16>
    %292 = vector.shape_cast %291 : vector<1x32x64xbf16> to vector<32x64xbf16>
    %c0_122 = arith.constant 0 : index
    %c0_123 = arith.constant 0 : index
    %c0_124 = arith.constant 0 : index
    %293 = vector.load %arg30[%c0_122, %c0_123, %c0_124] : memref<1x1x64xf32, #tpu.memory_space<vmem>>, vector<1x1x64xf32>
    %294 = vector.shape_cast %293 : vector<1x1x64xf32> to vector<1x64xf32>
    %295 = arith.truncf %290 : vector<16x32xf32> to vector<16x32xbf16>
    %cst_125 = arith.constant dense<0.000000e+00> : vector<16x64xf32>
    %296 = tpu.matmul %295, %292, %cst_125 {dimension_numbers = #tpu.dot_dimension_numbers<[1], [0], [0], [1], [0, 0, 1, 1], [], []>} : vector<16x32xbf16>, vector<32x64xbf16>, vector<16x64xf32> -> vector<16x64xf32>
    %297 = vector.broadcast %294 : vector<1x64xf32> to vector<16x64xf32>
    %298 = arith.addf %296, %297 : vector<16x64xf32>
    %cst_126 = arith.constant 0.000000e+00 : f32
    %299 = vector.broadcast %cst_126 : f32 to vector<16x64xf32>
    %300 = arith.maximumf %298, %299 : vector<16x64xf32>
    %301 = arith.truncf %300 : vector<16x64xf32> to vector<16x64xbf16>
    %c0_127 = arith.constant 0 : index
    %c0_128 = arith.constant 0 : index
    %c0_129 = arith.constant 0 : index
    %302 = vector.load %arg31[%c0_127, %c0_128, %c0_129] : memref<1x64x32xbf16, #tpu.memory_space<vmem>>, vector<1x64x32xbf16>
    %303 = vector.shape_cast %302 : vector<1x64x32xbf16> to vector<64x32xbf16>
    %c0_130 = arith.constant 0 : index
    %c0_131 = arith.constant 0 : index
    %c0_132 = arith.constant 0 : index
    %304 = vector.load %arg32[%c0_130, %c0_131, %c0_132] : memref<1x1x32xf32, #tpu.memory_space<vmem>>, vector<1x1x32xf32>
    %305 = vector.shape_cast %304 : vector<1x1x32xf32> to vector<1x32xf32>
    %cst_133 = arith.constant dense<0.000000e+00> : vector<16x32xf32>
    %306 = tpu.matmul %301, %303, %cst_133 {dimension_numbers = #tpu.dot_dimension_numbers<[1], [0], [0], [1], [0, 0, 1, 1], [], []>} : vector<16x64xbf16>, vector<64x32xbf16>, vector<16x32xf32> -> vector<16x32xf32>
    %307 = vector.broadcast %305 : vector<1x32xf32> to vector<16x32xf32>
    %308 = arith.addf %306, %307 : vector<16x32xf32>
    %309 = arith.addf %290, %308 : vector<16x32xf32>
    %c0_134 = arith.constant 0 : index
    %c0_135 = arith.constant 0 : index
    %c0_136 = arith.constant 0 : index
    %310 = vector.load %arg37[%c0_134, %c0_135, %c0_136] : memref<1x1x32xf32, #tpu.memory_space<vmem>>, vector<1x1x32xf32>
    %311 = vector.shape_cast %310 : vector<1x1x32xf32> to vector<1x32xf32>
    %c0_137 = arith.constant 0 : index
    %c0_138 = arith.constant 0 : index
    %c0_139 = arith.constant 0 : index
    %312 = vector.load %arg38[%c0_137, %c0_138, %c0_139] : memref<1x1x32xf32, #tpu.memory_space<vmem>>, vector<1x1x32xf32>
    %313 = vector.shape_cast %312 : vector<1x1x32xf32> to vector<1x32xf32>
    %cst_140 = arith.constant dense<0.000000e+00> : vector<16xf32>
    %314 = vector.multi_reduction <add>, %309, %cst_140 [1] : vector<16x32xf32> to vector<16xf32>
    %315 = vector.shape_cast %314 : vector<16xf32> to vector<16x1xf32>
    %cst_141 = arith.constant 3.200000e+01 : f32
    %316 = vector.broadcast %cst_141 : f32 to vector<16x1xf32>
    %317 = arith.divf %315, %316 : vector<16x1xf32>
    %318 = vector.broadcast %317 : vector<16x1xf32> to vector<16x32xf32>
    %319 = arith.subf %309, %318 : vector<16x32xf32>
    %320 = arith.mulf %319, %319 : vector<16x32xf32>
    %cst_142 = arith.constant dense<0.000000e+00> : vector<16xf32>
    %321 = vector.multi_reduction <add>, %320, %cst_142 [1] : vector<16x32xf32> to vector<16xf32>
    %322 = vector.shape_cast %321 : vector<16xf32> to vector<16x1xf32>
    %cst_143 = arith.constant 3.200000e+01 : f32
    %323 = vector.broadcast %cst_143 : f32 to vector<16x1xf32>
    %324 = arith.divf %322, %323 : vector<16x1xf32>
    %cst_144 = arith.constant 9.99999974E-6 : f32
    %325 = vector.broadcast %cst_144 : f32 to vector<16x1xf32>
    %326 = arith.addf %324, %325 : vector<16x1xf32>
    %327 = math.rsqrt %326 : vector<16x1xf32>
    %328 = vector.broadcast %327 : vector<16x1xf32> to vector<16x32xf32>
    %329 = arith.mulf %319, %328 : vector<16x32xf32>
    %330 = vector.broadcast %311 : vector<1x32xf32> to vector<16x32xf32>
    %331 = arith.mulf %329, %330 : vector<16x32xf32>
    %332 = vector.broadcast %313 : vector<1x32xf32> to vector<16x32xf32>
    %333 = arith.addf %331, %332 : vector<16x32xf32>
    %c0_145 = arith.constant 0 : index
    %c0_146 = arith.constant 0 : index
    %334 = vector.load %arg40[%c0_145, %c0_146] : memref<16x32xf32, #tpu.memory_space<vmem>>, vector<16x32xf32>
    tpu.vector_store %arg40[%c0_145, %c0_146], %333 {strides = array<i32>} : memref<16x32xf32, #tpu.memory_space<vmem>>, vector<16x32xf32>,
    %c1_i32 = arith.constant 1 : i32
    %335 = arith.cmpi eq, %arg1, %c1_i32 : i32
    %336 = arith.extui %335 : i1 to i32
    %c0_i32_147 = arith.constant 0 : i32
    %337 = arith.cmpi ne, %336, %c0_i32_147 : i32
    scf.if %337 {
      %338 = vector.shape_cast %333 : vector<16x32xf32> to vector<2x8x32xf32>
      %c0_148 = arith.constant 0 : index
      %c0_149 = arith.constant 0 : index
      %339 = vector.load %arg4[%c0_148, %c0_149] : memref<2x8xf32, #tpu.memory_space<vmem>>, vector<2x8xf32>
      %340 = vector.shape_cast %339 : vector<2x8xf32> to vector<2x8x1xf32>
      %341 = vector.broadcast %340 : vector<2x8x1xf32> to vector<2x8x32xf32>
      %342 = arith.mulf %338, %341 : vector<2x8x32xf32>
      %cst_150 = arith.constant dense<0.000000e+00> : vector<2x32xf32>
      %343 = vector.multi_reduction <add>, %342, %cst_150 [1] : vector<2x8x32xf32> to vector<2x32xf32>
      %c0_151 = arith.constant 0 : index
      %c0_152 = arith.constant 0 : index
      %344 = vector.load %arg11[%c0_151, %c0_152] : memref<32x1xbf16, #tpu.memory_space<vmem>>, vector<32x1xbf16>
      %c0_153 = arith.constant 0 : index
      %c0_154 = arith.constant 0 : index
      %345 = vector.load %arg12[%c0_153, %c0_154] : memref<1x1xf32, #tpu.memory_space<vmem>>, vector<1x1xf32>
      %346 = arith.truncf %343 : vector<2x32xf32> to vector<2x32xbf16>
      %cst_155 = arith.constant dense<0.000000e+00> : vector<2x1xf32>
      %347 = tpu.matmul %346, %344, %cst_155 {dimension_numbers = #tpu.dot_dimension_numbers<[1], [0], [0], [1], [0, 0, 1, 1], [], []>} : vector<2x32xbf16>, vector<32x1xbf16>, vector<2x1xf32> -> vector<2x1xf32>
      %348 = vector.broadcast %345 : vector<1x1xf32> to vector<2x1xf32>
      %349 = arith.addf %347, %348 : vector<2x1xf32>
      %c0_156 = arith.constant 0 : index
      %c0_157 = arith.constant 0 : index
      %350 = vector.load %arg39[%c0_156, %c0_157] : memref<2x1xf32, #tpu.memory_space<vmem>>, vector<2x1xf32>
      tpu.vector_store %arg39[%c0_156, %c0_157], %349 {strides = array<i32>} : memref<2x1xf32, #tpu.memory_space<vmem>>, vector<2x1xf32>,
    } else {
    }
    return
  }
  func.func @transform_0(%arg0: i32, %arg1: i32) -> (i32, i32, i32) {
    %c0_i32 = arith.constant 0 : i32
    %c0_i32_0 = arith.constant 0 : i32
    %c0_i32_1 = arith.constant 0 : i32
    return %arg0, %c0_i32, %c0_i32_0 : i32, i32, i32
  }
  func.func @transform_1(%arg0: i32, %arg1: i32) -> (i32, i32, i32) {
    %c0_i32 = arith.constant 0 : i32
    %c0_i32_0 = arith.constant 0 : i32
    %c0_i32_1 = arith.constant 0 : i32
    return %arg0, %c0_i32, %c0_i32_0 : i32, i32, i32
  }
  func.func @transform_2(%arg0: i32, %arg1: i32) -> (i32, i32) {
    %c0_i32 = arith.constant 0 : i32
    %c0_i32_0 = arith.constant 0 : i32
    return %arg0, %c0_i32 : i32, i32
  }
  func.func @transform_3(%arg0: i32, %arg1: i32) -> (i32, i32) {
    %c0_i32 = arith.constant 0 : i32
    %c0_i32_0 = arith.constant 0 : i32
    %c0_i32_1 = arith.constant 0 : i32
    return %c0_i32, %c0_i32_0 : i32, i32
  }
  func.func @transform_4(%arg0: i32, %arg1: i32) -> (i32, i32) {
    %c0_i32 = arith.constant 0 : i32
    %c0_i32_0 = arith.constant 0 : i32
    %c0_i32_1 = arith.constant 0 : i32
    return %c0_i32, %c0_i32_0 : i32, i32
  }
  func.func @transform_5(%arg0: i32, %arg1: i32) -> (i32, i32) {
    %c0_i32 = arith.constant 0 : i32
    %c0_i32_0 = arith.constant 0 : i32
    %c0_i32_1 = arith.constant 0 : i32
    return %c0_i32, %c0_i32_0 : i32, i32
  }
  func.func @transform_6(%arg0: i32, %arg1: i32) -> (i32, i32) {
    %c0_i32 = arith.constant 0 : i32
    %c0_i32_0 = arith.constant 0 : i32
    %c0_i32_1 = arith.constant 0 : i32
    return %c0_i32, %c0_i32_0 : i32, i32
  }
  func.func @transform_7(%arg0: i32, %arg1: i32) -> (i32, i32) {
    %c0_i32 = arith.constant 0 : i32
    %c0_i32_0 = arith.constant 0 : i32
    %c0_i32_1 = arith.constant 0 : i32
    return %c0_i32, %c0_i32_0 : i32, i32
  }
  func.func @transform_8(%arg0: i32, %arg1: i32) -> (i32, i32) {
    %c0_i32 = arith.constant 0 : i32
    %c0_i32_0 = arith.constant 0 : i32
    %c0_i32_1 = arith.constant 0 : i32
    return %c0_i32, %c0_i32_0 : i32, i32
  }
  func.func @transform_9(%arg0: i32, %arg1: i32) -> (i32, i32) {
    %c0_i32 = arith.constant 0 : i32
    %c0_i32_0 = arith.constant 0 : i32
    %c0_i32_1 = arith.constant 0 : i32
    return %c0_i32, %c0_i32_0 : i32, i32
  }
  func.func @transform_10(%arg0: i32, %arg1: i32) -> (i32, i32) {
    %c0_i32 = arith.constant 0 : i32
    %c0_i32_0 = arith.constant 0 : i32
    %c0_i32_1 = arith.constant 0 : i32
    return %c0_i32, %c0_i32_0 : i32, i32
  }
  func.func @transform_11(%arg0: i32, %arg1: i32) -> (i32, i32, i32) {
    %c0_i32 = arith.constant 0 : i32
    %c0_i32_0 = arith.constant 0 : i32
    %c0_i32_1 = arith.constant 0 : i32
    return %arg1, %c0_i32, %c0_i32_0 : i32, i32, i32
  }
  func.func @transform_12(%arg0: i32, %arg1: i32) -> (i32, i32, i32) {
    %c0_i32 = arith.constant 0 : i32
    %c0_i32_0 = arith.constant 0 : i32
    %c0_i32_1 = arith.constant 0 : i32
    return %arg1, %c0_i32, %c0_i32_0 : i32, i32, i32
  }
  func.func @transform_13(%arg0: i32, %arg1: i32) -> (i32, i32, i32) {
    %c0_i32 = arith.constant 0 : i32
    %c0_i32_0 = arith.constant 0 : i32
    %c0_i32_1 = arith.constant 0 : i32
    return %arg1, %c0_i32, %c0_i32_0 : i32, i32, i32
  }
  func.func @transform_14(%arg0: i32, %arg1: i32) -> (i32, i32, i32) {
    %c0_i32 = arith.constant 0 : i32
    %c0_i32_0 = arith.constant 0 : i32
    %c0_i32_1 = arith.constant 0 : i32
    return %arg1, %c0_i32, %c0_i32_0 : i32, i32, i32
  }
  func.func @transform_15(%arg0: i32, %arg1: i32) -> (i32, i32, i32) {
    %c0_i32 = arith.constant 0 : i32
    %c0_i32_0 = arith.constant 0 : i32
    %c0_i32_1 = arith.constant 0 : i32
    return %arg1, %c0_i32, %c0_i32_0 : i32, i32, i32
  }
  func.func @transform_16(%arg0: i32, %arg1: i32) -> (i32, i32, i32) {
    %c0_i32 = arith.constant 0 : i32
    %c0_i32_0 = arith.constant 0 : i32
    %c0_i32_1 = arith.constant 0 : i32
    return %arg1, %c0_i32, %c0_i32_0 : i32, i32, i32
  }
  func.func @transform_17(%arg0: i32, %arg1: i32) -> (i32, i32, i32) {
    %c0_i32 = arith.constant 0 : i32
    %c0_i32_0 = arith.constant 0 : i32
    %c0_i32_1 = arith.constant 0 : i32
    return %arg1, %c0_i32, %c0_i32_0 : i32, i32, i32
  }
  func.func @transform_18(%arg0: i32, %arg1: i32) -> (i32, i32, i32) {
    %c0_i32 = arith.constant 0 : i32
    %c0_i32_0 = arith.constant 0 : i32
    %c0_i32_1 = arith.constant 0 : i32
    return %arg1, %c0_i32, %c0_i32_0 : i32, i32, i32
  }
  func.func @transform_19(%arg0: i32, %arg1: i32) -> (i32, i32, i32) {
    %c0_i32 = arith.constant 0 : i32
    %c0_i32_0 = arith.constant 0 : i32
    %c0_i32_1 = arith.constant 0 : i32
    return %arg1, %c0_i32, %c0_i32_0 : i32, i32, i32
  }
  func.func @transform_20(%arg0: i32, %arg1: i32) -> (i32, i32, i32) {
    %c0_i32 = arith.constant 0 : i32
    %c0_i32_0 = arith.constant 0 : i32
    %c0_i32_1 = arith.constant 0 : i32
    return %arg1, %c0_i32, %c0_i32_0 : i32, i32, i32
  }
  func.func @transform_21(%arg0: i32, %arg1: i32) -> (i32, i32, i32) {
    %c0_i32 = arith.constant 0 : i32
    %c0_i32_0 = arith.constant 0 : i32
    %c0_i32_1 = arith.constant 0 : i32
    return %arg1, %c0_i32, %c0_i32_0 : i32, i32, i32
  }
  func.func @transform_22(%arg0: i32, %arg1: i32) -> (i32, i32, i32) {
    %c0_i32 = arith.constant 0 : i32
    %c0_i32_0 = arith.constant 0 : i32
    %c0_i32_1 = arith.constant 0 : i32
    return %arg1, %c0_i32, %c0_i32_0 : i32, i32, i32
  }
  func.func @transform_23(%arg0: i32, %arg1: i32) -> (i32, i32, i32) {
    %c0_i32 = arith.constant 0 : i32
    %c0_i32_0 = arith.constant 0 : i32
    %c0_i32_1 = arith.constant 0 : i32
    return %arg1, %c0_i32, %c0_i32_0 : i32, i32, i32
  }
  func.func @transform_24(%arg0: i32, %arg1: i32) -> (i32, i32, i32) {
    %c0_i32 = arith.constant 0 : i32
    %c0_i32_0 = arith.constant 0 : i32
    %c0_i32_1 = arith.constant 0 : i32
    return %arg1, %c0_i32, %c0_i32_0 : i32, i32, i32
  }
  func.func @transform_25(%arg0: i32, %arg1: i32) -> (i32, i32, i32) {
    %c0_i32 = arith.constant 0 : i32
    %c0_i32_0 = arith.constant 0 : i32
    %c0_i32_1 = arith.constant 0 : i32
    return %arg1, %c0_i32, %c0_i32_0 : i32, i32, i32
  }
  func.func @transform_26(%arg0: i32, %arg1: i32) -> (i32, i32, i32) {
    %c0_i32 = arith.constant 0 : i32
    %c0_i32_0 = arith.constant 0 : i32
    %c0_i32_1 = arith.constant 0 : i32
    return %arg1, %c0_i32, %c0_i32_0 : i32, i32, i32
  }
  func.func @transform_27(%arg0: i32, %arg1: i32) -> (i32, i32, i32) {
    %c0_i32 = arith.constant 0 : i32
    %c0_i32_0 = arith.constant 0 : i32
    %c0_i32_1 = arith.constant 0 : i32
    return %arg1, %c0_i32, %c0_i32_0 : i32, i32, i32
  }
  func.func @transform_28(%arg0: i32, %arg1: i32) -> (i32, i32, i32) {
    %c0_i32 = arith.constant 0 : i32
    %c0_i32_0 = arith.constant 0 : i32
    %c0_i32_1 = arith.constant 0 : i32
    return %arg1, %c0_i32, %c0_i32_0 : i32, i32, i32
  }
  func.func @transform_29(%arg0: i32, %arg1: i32) -> (i32, i32, i32) {
    %c0_i32 = arith.constant 0 : i32
    %c0_i32_0 = arith.constant 0 : i32
    %c0_i32_1 = arith.constant 0 : i32
    return %arg1, %c0_i32, %c0_i32_0 : i32, i32, i32
  }
  func.func @transform_30(%arg0: i32, %arg1: i32) -> (i32, i32, i32) {
    %c0_i32 = arith.constant 0 : i32
    %c0_i32_0 = arith.constant 0 : i32
    %c0_i32_1 = arith.constant 0 : i32
    return %arg1, %c0_i32, %c0_i32_0 : i32, i32, i32
  }
  func.func @transform_31(%arg0: i32, %arg1: i32) -> (i32, i32, i32) {
    %c0_i32 = arith.constant 0 : i32
    %c0_i32_0 = arith.constant 0 : i32
    %c0_i32_1 = arith.constant 0 : i32
    return %arg1, %c0_i32, %c0_i32_0 : i32, i32, i32
  }
  func.func @transform_32(%arg0: i32, %arg1: i32) -> (i32, i32, i32) {
    %c0_i32 = arith.constant 0 : i32
    %c0_i32_0 = arith.constant 0 : i32
    %c0_i32_1 = arith.constant 0 : i32
    return %arg1, %c0_i32, %c0_i32_0 : i32, i32, i32
  }
  func.func @transform_33(%arg0: i32, %arg1: i32) -> (i32, i32, i32) {
    %c0_i32 = arith.constant 0 : i32
    %c0_i32_0 = arith.constant 0 : i32
    %c0_i32_1 = arith.constant 0 : i32
    return %arg1, %c0_i32, %c0_i32_0 : i32, i32, i32
  }
  func.func @transform_34(%arg0: i32, %arg1: i32) -> (i32, i32, i32) {
    %c0_i32 = arith.constant 0 : i32
    %c0_i32_0 = arith.constant 0 : i32
    %c0_i32_1 = arith.constant 0 : i32
    return %arg1, %c0_i32, %c0_i32_0 : i32, i32, i32
  }
  func.func @transform_35(%arg0: i32, %arg1: i32) -> (i32, i32, i32) {
    %c0_i32 = arith.constant 0 : i32
    %c0_i32_0 = arith.constant 0 : i32
    %c0_i32_1 = arith.constant 0 : i32
    return %arg1, %c0_i32, %c0_i32_0 : i32, i32, i32
  }
  func.func @transform_36(%arg0: i32, %arg1: i32) -> (i32, i32, i32) {
    %c0_i32 = arith.constant 0 : i32
    %c0_i32_0 = arith.constant 0 : i32
    %c0_i32_1 = arith.constant 0 : i32
    return %arg1, %c0_i32, %c0_i32_0 : i32, i32, i32
  }
  func.func @transform_37(%arg0: i32, %arg1: i32) -> (i32, i32) {
    %c0_i32 = arith.constant 0 : i32
    %c0_i32_0 = arith.constant 0 : i32
    return %arg0, %c0_i32 : i32, i32
  }
}

</mosaic_0001>

<llo_original>
// kernel: tpu_custom_call.1
$region0: #{tpu_custom_call.1}
  #allocation0 [shape = 'u32[]', space=smem, size = 0x4, offset = 0x4, fixed_abs, tag = 'smem constant byte address 0x4 - core index']
  #allocation1 [shape = 'u32[72,128]{1,0:T(1,128)}', space=vmem, size = 0x9000, scoped, tag = 'internal scratch']
  #allocation2 [shape = 'f32[16,32]{1,0:T(8,128)}', space=vmem, size = 0x2000, scoped, tag = 'scratch operand']
  #allocation3 [shape = 'bf16[32,32]{1,0:T(8,128)(2,1)}', space=vmem, size = 0x2000, scoped, tag = 'scratch operand']
  #allocation4 [shape = 'f32[1,1]{1,0:T(1,128)S(1)}', space=vmem, size = 0x200, scoped, tag = 'scoped memory for tpu_custom_call.1']
  %s0 = inlined_call_operand.smem [shape: u32[38], index: -1, kind: input, shape index: {}]
  %s1 = sld [smem:[%s0]]
  %s2 = scalar_lea.smem %s0, 1
  %s3 = sld [smem:[%s2]]
  %s4 = scalar_lea.smem %s0, 2
  %s5 = sld [smem:[%s4]]
  %s6 = scalar_lea.smem %s0, 3
  %s7 = sld [smem:[%s6]]
  %s8 = scalar_lea.smem %s0, 4
  %s9 = sld [smem:[%s8]]
  %s10 = scalar_lea.smem %s0, 5
  %s11 = sld [smem:[%s10]]
  %s12 = scalar_lea.smem %s0, 6
  %s13 = sld [smem:[%s12]]
  %s14 = scalar_lea.smem %s0, 7
  %s15 = sld [smem:[%s14]]
  %s16 = scalar_lea.smem %s0, 8
  %s17 = sld [smem:[%s16]]
  %s18 = scalar_lea.smem %s0, 9
  %s19 = sld [smem:[%s18]]
  %s20 = scalar_lea.smem %s0, 10
  %s21 = sld [smem:[%s20]]
  %s22 = scalar_lea.smem %s0, 11
  %s23 = sld [smem:[%s22]]
  %s24 = scalar_lea.smem %s0, 12
  %s25 = sld [smem:[%s24]]
  %s26 = scalar_lea.smem %s0, 13
  %s27 = sld [smem:[%s26]]
  %s28 = scalar_lea.smem %s0, 14
  %s29 = sld [smem:[%s28]]
  %s30 = scalar_lea.smem %s0, 15
  %s31 = sld [smem:[%s30]]
  %s32 = scalar_lea.smem %s0, 16
  %s33 = sld [smem:[%s32]]
  %s34 = scalar_lea.smem %s0, 17
  %s35 = sld [smem:[%s34]]
  %s36 = scalar_lea.smem %s0, 18
  %s37 = sld [smem:[%s36]]
  %s38 = scalar_lea.smem %s0, 19
  %s39 = sld [smem:[%s38]]
  %s40 = scalar_lea.smem %s0, 20
  %s41 = sld [smem:[%s40]]
  %s42 = scalar_lea.smem %s0, 21
  %s43 = sld [smem:[%s42]]
  %s44 = scalar_lea.smem %s0, 22
  %s45 = sld [smem:[%s44]]
  %s46 = scalar_lea.smem %s0, 23
  %s47 = sld [smem:[%s46]]
  %s48 = scalar_lea.smem %s0, 24
  %s49 = sld [smem:[%s48]]
  %s50 = scalar_lea.smem %s0, 25
  %s51 = sld [smem:[%s50]]
  %s52 = scalar_lea.smem %s0, 26
  %s53 = sld [smem:[%s52]]
  %s54 = scalar_lea.smem %s0, 27
  %s55 = sld [smem:[%s54]]
  %s56 = scalar_lea.smem %s0, 28
  %s57 = sld [smem:[%s56]]
  %s58 = scalar_lea.smem %s0, 29
  %s59 = sld [smem:[%s58]]
  %s60 = scalar_lea.smem %s0, 30
  %s61 = sld [smem:[%s60]]
  %s62 = scalar_lea.smem %s0, 31
  %s63 = sld [smem:[%s62]]
  %s64 = scalar_lea.smem %s0, 32
  %s65 = sld [smem:[%s64]]
  %s66 = scalar_lea.smem %s0, 33
  %s67 = sld [smem:[%s66]]
  %s68 = scalar_lea.smem %s0, 34
  %s69 = sld [smem:[%s68]]
  %s70 = scalar_lea.smem %s0, 35
  %s71 = sld [smem:[%s70]]
  %s72 = scalar_lea.smem %s0, 36
  %s73 = sld [smem:[%s72]]
  %s74 = scalar_lea.smem %s0, 37
  %s75 = sld [smem:[%s74]]
  %s76 = sld [smem:[#allocation0]]
  $region269: #{tpu_custom_call.1} parent=0
    _
  %s78 = ssub.s32 1, %s76
  %s79 = scalar_select 0, %s78, %s76
  %v80 = vstv %s21
  %81 = vst [vmem:[#allocation4] sm:$0x1] %v80
  $region1: #{tpu_custom_call.1} parent=0
    #allocation5 [shape = 'u8[4096]{0}', space=vmem, size = 0x1000, scoped, tag = 'input window, operand 0, single buffered']
    #allocation6 [shape = 's32[2]{0}', space=sflag, size = 0x8, scoped, tag = 'scoped memory for tpu_custom_call.1']
    #allocation7 [shape = 'u8[8192]{0}', space=vmem, size = 0x2000, scoped, tag = 'input window, operand 1, single buffered']
    #allocation8 [shape = 's32[1]{0}', space=sflag, size = 0x4, scoped, tag = 'scoped memory for tpu_custom_call.1']
    #allocation9 [shape = 'u8[1024]{0}', space=vmem, size = 0x400, scoped, tag = 'input window, operand 2, single buffered']
    #allocation10 [shape = 'u8[512]{0}', space=vmem, size = 0x400, scoped, tag = 'input window, operand 3, single buffered']
    #allocation11 [shape = 's32[1]{0}', space=sflag, size = 0x4, scoped, tag = 'scoped memory for tpu_custom_call.1']
    #allocation12 [shape = 'u8[512]{0}', space=vmem, size = 0x400, scoped, tag = 'input window, operand 4, single buffered']
    #allocation13 [shape = 'u8[512]{0}', space=vmem, size = 0x400, scoped, tag = 'input window, operand 6, single buffered']
    #allocation14 [shape = 's32[1]{0}', space=sflag, size = 0x4, scoped, tag = 'scoped memory for tpu_custom_call.1']
    #allocation15 [shape = 'u8[512]{0}', space=vmem, size = 0x400, scoped, tag = 'input window, operand 8, single buffered']
    #allocation16 [shape = 'u8[1024]{0}', space=vmem, size = 0x400, scoped, tag = 'input window, operand 15']
    #allocation17 [shape = 's32[2]{0}', space=sflag, size = 0x8, scoped, tag = 'scoped memory for tpu_custom_call.1']
    #allocation18 [shape = 'u8[1024]{0}', space=vmem, size = 0x400, scoped, tag = 'input window, operand 16']
    #allocation19 [shape = 'u8[1024]{0}', space=vmem, size = 0x400, scoped, tag = 'input window, operand 17']
    #allocation20 [shape = 's32[2]{0}', space=sflag, size = 0x8, scoped, tag = 'scoped memory for tpu_custom_call.1']
    #allocation21 [shape = 'u8[1024]{0}', space=vmem, size = 0x400, scoped, tag = 'input window, operand 18']
    #allocation22 [shape = 'u8[16384]{0}', space=vmem, size = 0x4000, scoped, tag = 'input window, operand 21']
    #allocation23 [shape = 's32[2]{0}', space=sflag, size = 0x8, scoped, tag = 'scoped memory for tpu_custom_call.1']
    #allocation24 [shape = 'u8[16384]{0}', space=vmem, size = 0x4000, scoped, tag = 'input window, operand 22']
    #allocation25 [shape = 'u8[1024]{0}', space=vmem, size = 0x400, scoped, tag = 'input window, operand 23']
    #allocation26 [shape = 's32[2]{0}', space=sflag, size = 0x8, scoped, tag = 'scoped memory for tpu_custom_call.1']
    #allocation27 [shape = 'u8[1024]{0}', space=vmem, size = 0x400, scoped, tag = 'input window, operand 24']
    #allocation28 [shape = 'u8[1024]{0}', space=vmem, size = 0x400, scoped, tag = 'input window, operand 25']
    #allocation29 [shape = 's32[2]{0}', space=sflag, size = 0x8, scoped, tag = 'scoped memory for tpu_custom_call.1']
    #allocation30 [shape = 'u8[1024]{0}', space=vmem, size = 0x400, scoped, tag = 'input window, operand 28']
    #allocation31 [shape = 'u8[1024]{0}', space=vmem, size = 0x400, scoped, tag = 'input window, operand 31']
    #allocation32 [shape = 's32[2]{0}', space=sflag, size = 0x8, scoped, tag = 'scoped memory for tpu_custom_call.1']
    #allocation33 [shape = 'u8[1024]{0}', space=vmem, size = 0x400, scoped, tag = 'input window, operand 34']
    #allocation34 [shape = 'u8[1024]{0}', space=vmem, size = 0x400, scoped, tag = 'input window, operand 36']
    #allocation35 [shape = 's32[2]{0}', space=sflag, size = 0x8, scoped, tag = 'scoped memory for tpu_custom_call.1']
    %82 = vsyncpa [#allocation6], 0
    %83 = vsyncpa [#allocation8], 0
    %84 = vsyncpa [#allocation11], 0
    %85 = vsyncpa [#allocation14], 0
    %86 = vsyncpa [#allocation17], 0
    %s87 = scalar_lea.sflag [#allocation17], 1
    %88 = vsyncpa %s87, 0
    %89 = vsyncpa [#allocation20], 0
    %s90 = scalar_lea.sflag [#allocation20], 1
    %91 = vsyncpa %s90, 0
    %92 = vsyncpa [#allocation23], 0
    %s93 = scalar_lea.sflag [#allocation23], 1
    %94 = vsyncpa %s93, 0
    %95 = vsyncpa [#allocation26], 0
    %s96 = scalar_lea.sflag [#allocation26], 1
    %97 = vsyncpa %s96, 0
    %98 = vsyncpa [#allocation29], 0
    %s99 = scalar_lea.sflag [#allocation29], 1
    %100 = vsyncpa %s99, 0
    %101 = vsyncpa [#allocation32], 0
    %s102 = scalar_lea.sflag [#allocation32], 1
    %103 = vsyncpa %s102, 0
    %104 = vsyncpa [#allocation35], 0
    %s105 = scalar_lea.sflag [#allocation35], 1
    %106 = vsyncpa %s105, 0
    loop: start=0, step=1, limit=4
    $region2: #{tpu_custom_call.1} parent=1 // loop_pre_header
      _
    $region3: #{tpu_custom_call.1} parent=1 // loop_header
      %s108 = sphi 0, %s112
      %p109 = scmp.ge.s32.totalorder %s108, 4
      %s115 = sphi 0, %s127
      %s116 = sphi 0, %s123
      %s117 = sphi 0, %s115
      %s118 = sphi 0, %s116
      %s119 = sphi 0, %s117
      %s120 = sphi 0, %s118
      %s130 = sphi 0, %s132
      %s133 = sphi 0, %s130
      %s134 = sphi 0, %s133
      %s150 = sphi 0, %s134
      %s156 = sphi 0, %s158
      %s159 = sphi 0, %s156
      %s160 = sphi 0, %s159
      %s176 = sphi 0, %s160
      %s182 = sphi 0, %s184
      %s185 = sphi 0, %s182
      %s186 = sphi 0, %s185
      %s202 = sphi 0, %s186
      %s206 = sphi 0, %s206
      %s208 = sphi 0, %s206
      %s209 = sphi 0, %s208
      %s223 = sphi 0, %s209
      %s227 = sphi 0, %s227
      %s229 = sphi 0, %s227
      %s230 = sphi 0, %s229
      %s244 = sphi 0, %s230
      %s248 = sphi 0, %s248
      %s250 = sphi 0, %s248
      %s251 = sphi 0, %s250
      %s265 = sphi 0, %s251
      %s269 = sphi 0, %s269
      %s271 = sphi 0, %s269
      %s272 = sphi 0, %s271
      %s286 = sphi 0, %s272
      %s290 = sphi 0, %s290
      %s292 = sphi 0, %s290
      %s293 = sphi 0, %s292
      %s307 = sphi 0, %s293
      %s311 = sphi 0, %s311
      %s313 = sphi 0, %s311
      %s314 = sphi 0, %s313
      %s328 = sphi 0, %s314
      %s332 = sphi 0, %s332
      %s334 = sphi 0, %s332
      %s335 = sphi 0, %s334
      %s349 = sphi 0, %s335
      %s353 = sphi 0, %s353
      %s355 = sphi 0, %s353
      %s356 = sphi 0, %s355
      %s370 = sphi 0, %s356
      %s376 = sphi 0, %s378
      %s379 = sphi 0, %s376
      %s380 = sphi 0, %s379
      %s396 = sphi 0, %s380
      %s402 = sphi 0, %s404
      %s405 = sphi 0, %s402
      %s406 = sphi 0, %s405
      %s422 = sphi 0, %s406
      %s428 = sphi 0, %s430
      %s431 = sphi 0, %s428
      %s432 = sphi 0, %s431
      %s448 = sphi 0, %s432
      %s454 = sphi 0, %s456
      %s457 = sphi 0, %s454
      %s458 = sphi 0, %s457
      %s474 = sphi 0, %s458
      %s480 = sphi 0, %s482
      %s483 = sphi 0, %s480
      %s484 = sphi 0, %s483
      %s500 = sphi 0, %s484
      %s506 = sphi 0, %s508
      %s509 = sphi 0, %s506
      %s510 = sphi 0, %s509
      %s526 = sphi 0, %s510
      %s532 = sphi 0, %s534
      %s535 = sphi 0, %s532
      %s536 = sphi 0, %s535
      %s552 = sphi 0, %s536
      %s558 = sphi 0, %s560
      %s561 = sphi 0, %s558
      %s562 = sphi 0, %s561
      %s578 = sphi 0, %s562
      %s584 = sphi 0, %s586
      %s587 = sphi 0, %s584
      %s588 = sphi 0, %s587
      %s604 = sphi 0, %s588
      %s610 = sphi 0, %s612
      %s613 = sphi 0, %s610
      %s614 = sphi 0, %s613
      %s630 = sphi 0, %s614
      %s636 = sphi 0, %s638
      %s639 = sphi 0, %s636
      %s640 = sphi 0, %s639
      %s656 = sphi 0, %s640
      %s662 = sphi 0, %s664
      %s665 = sphi 0, %s662
      %s666 = sphi 0, %s665
      %s682 = sphi 0, %s666
      %s688 = sphi 0, %s690
      %s691 = sphi 0, %s688
      %s692 = sphi 0, %s691
      %s708 = sphi 0, %s692
      %s714 = sphi 0, %s716
      %s717 = sphi 0, %s714
      %s718 = sphi 0, %s717
      %s734 = sphi 0, %s718
      %s740 = sphi 0, %s742
      %s743 = sphi 0, %s740
      %s744 = sphi 0, %s743
      %s760 = sphi 0, %s744
      %s766 = sphi 0, %s768
      %s769 = sphi 0, %s766
      %s770 = sphi 0, %s769
      %s786 = sphi 0, %s770
      %s792 = sphi 0, %s794
      %s795 = sphi 0, %s792
      %s796 = sphi 0, %s795
      %s812 = sphi 0, %s796
      %s818 = sphi 0, %s820
      %s821 = sphi 0, %s818
      %s822 = sphi 0, %s821
      %s838 = sphi 0, %s822
      %s844 = sphi 0, %s846
      %s847 = sphi 0, %s844
      %s848 = sphi 0, %s847
      %s864 = sphi 0, %s848
      %s870 = sphi 0, %s872
      %s873 = sphi 0, %s870
      %s874 = sphi 0, %s873
      %s890 = sphi 0, %s874
      %s896 = sphi 0, %s898
      %s899 = sphi 0, %s896
      %s900 = sphi 0, %s899
      %s916 = sphi 0, %s900
      %s922 = sphi 0, %s924
      %s925 = sphi 0, %s922
      %s926 = sphi 0, %s925
      %s942 = sphi 0, %s926
      %s948 = sphi 0, %s950
      %s951 = sphi 0, %s948
      %s952 = sphi 0, %s951
      %s968 = sphi 0, %s952
      %s974 = sphi 0, %s976
      %s977 = sphi 0, %s974
      %s978 = sphi 0, %s977
      %s994 = sphi 0, %s978
      %s1000 = sphi 0, %s1002
      %s1003 = sphi 0, %s1000
      %s1004 = sphi 0, %s1003
      %s1020 = sphi 0, %s1004
      %s1026 = sphi 0, %s1028
      %s1029 = sphi 0, %s1026
      %s1030 = sphi 0, %s1029
      %s1046 = sphi 0, %s1030
      %s1052 = sphi 0, %s1054
      %s1055 = sphi 0, %s1052
      %s1056 = sphi 0, %s1055
      %s1072 = sphi 0, %s1056
    $region4: #{tpu_custom_call.1} parent=1 // loop_header_branch
      %111 = sbr.rel (%p109) target = $region8
    $region5: #{tpu_custom_call.1} parent=1 // loop_body
      %s113 = ssub.s32 %s108, 1
      %s114 = ssub.s32 %s108, 2
      %s121 = sadd.s32 1, %s116
      %p122 = scmp.ge.s32.totalorder %s121, 2
      %s123 = scalar_select %p122, 0, %s121
      %s124 = sadd.s32 1, %s115
      %s125 = scalar_select %p122, %s124, %s115
      %p126 = scmp.ge.s32.totalorder %s125, 1
      %s127 = scalar_select %p126, 0, %s125
      %s128 = ssub.s32 %s115, %s127
      %p129 = scmp.eq.s32.totalorder %s128, 0
      %s131 = sadd.s32 %s130, 1
      %s132 = scalar_select %p129, %s130, %s131
      %p135 = pneg %p129
      %p136 = scmp.eq.s32.totalorder %s108, 1
      %p137 = por %p135, %p136
      %p138 = scmp.ne.s32.totalorder %s130, %s133
      %p139 = scmp.eq.s32.totalorder %s108, 0
      %p140 = por %p138, %p139
      %p141 = scmp.ne.s32.totalorder %s130, %s133
      %p142 = scmp.eq.s32.totalorder %s113, 1
      %p143 = por %p141, %p142
      %p144 = scmp.ne.s32.totalorder %s133, %s134
      %p145 = scmp.eq.s32.totalorder %s113, 0
      %p146 = por %p144, %p145
      %p147 = scmp.ne.s32.totalorder %s133, %s134
      %p148 = scmp.eq.s32.totalorder %s114, 1
      %p149 = por %p147, %p148
      %p151 = scmp.ne.s32.totalorder %s134, %s150
      %p152 = scmp.eq.s32.totalorder %s114, 0
      %p153 = por %p151, %p152
      %s154 = ssub.s32 %s115, %s127
      %p155 = scmp.eq.s32.totalorder %s154, 0
      %s157 = sadd.s32 %s156, 1
      %s158 = scalar_select %p155, %s156, %s157
      %p161 = pneg %p155
      %p162 = scmp.eq.s32.totalorder %s108, 1
      %p163 = por %p161, %p162
      %p164 = scmp.ne.s32.totalorder %s156, %s159
      %p165 = scmp.eq.s32.totalorder %s108, 0
      %p166 = por %p164, %p165
      %p167 = scmp.ne.s32.totalorder %s156, %s159
      %p168 = scmp.eq.s32.totalorder %s113, 1
      %p169 = por %p167, %p168
      %p170 = scmp.ne.s32.totalorder %s159, %s160
      %p171 = scmp.eq.s32.totalorder %s113, 0
      %p172 = por %p170, %p171
      %p173 = scmp.ne.s32.totalorder %s159, %s160
      %p174 = scmp.eq.s32.totalorder %s114, 1
      %p175 = por %p173, %p174
      %p177 = scmp.ne.s32.totalorder %s160, %s176
      %p178 = scmp.eq.s32.totalorder %s114, 0
      %p179 = por %p177, %p178
      %s180 = ssub.s32 %s115, %s127
      %p181 = scmp.eq.s32.totalorder %s180, 0
      %s183 = sadd.s32 %s182, 1
      %s184 = scalar_select %p181, %s182, %s183
      %p187 = pneg %p181
      %p188 = scmp.eq.s32.totalorder %s108, 1
      %p189 = por %p187, %p188
      %p190 = scmp.ne.s32.totalorder %s182, %s185
      %p191 = scmp.eq.s32.totalorder %s108, 0
      %p192 = por %p190, %p191
      %p193 = scmp.ne.s32.totalorder %s182, %s185
      %p194 = scmp.eq.s32.totalorder %s113, 1
      %p195 = por %p193, %p194
      %p196 = scmp.ne.s32.totalorder %s185, %s186
      %p197 = scmp.eq.s32.totalorder %s113, 0
      %p198 = por %p196, %p197
      %p199 = scmp.ne.s32.totalorder %s185, %s186
      %p200 = scmp.eq.s32.totalorder %s114, 1
      %p201 = por %p199, %p200
      %p203 = scmp.ne.s32.totalorder %s186, %s202
      %p204 = scmp.eq.s32.totalorder %s114, 0
      %p205 = por %p203, %p204
      %s207 = sadd.s32 %s206, 1
      %p210 = scmp.eq.s32.totalorder %s108, 1
      %p211 = scmp.ne.s32.totalorder %s206, %s208
      %p212 = scmp.eq.s32.totalorder %s108, 0
      %p213 = por %p211, %p212
      %p214 = scmp.ne.s32.totalorder %s206, %s208
      %p215 = scmp.eq.s32.totalorder %s113, 1
      %p216 = por %p214, %p215
      %p217 = scmp.ne.s32.totalorder %s208, %s209
      %p218 = scmp.eq.s32.totalorder %s113, 0
      %p219 = por %p217, %p218
      %p220 = scmp.ne.s32.totalorder %s208, %s209
      %p221 = scmp.eq.s32.totalorder %s114, 1
      %p222 = por %p220, %p221
      %p224 = scmp.ne.s32.totalorder %s209, %s223
      %p225 = scmp.eq.s32.totalorder %s114, 0
      %p226 = por %p224, %p225
      %s228 = sadd.s32 %s227, 1
      %p231 = scmp.eq.s32.totalorder %s108, 1
      %p232 = scmp.ne.s32.totalorder %s227, %s229
      %p233 = scmp.eq.s32.totalorder %s108, 0
      %p234 = por %p232, %p233
      %p235 = scmp.ne.s32.totalorder %s227, %s229
      %p236 = scmp.eq.s32.totalorder %s113, 1
      %p237 = por %p235, %p236
      %p238 = scmp.ne.s32.totalorder %s229, %s230
      %p239 = scmp.eq.s32.totalorder %s113, 0
      %p240 = por %p238, %p239
      %p241 = scmp.ne.s32.totalorder %s229, %s230
      %p242 = scmp.eq.s32.totalorder %s114, 1
      %p243 = por %p241, %p242
      %p245 = scmp.ne.s32.totalorder %s230, %s244
      %p246 = scmp.eq.s32.totalorder %s114, 0
      %p247 = por %p245, %p246
      %s249 = sadd.s32 %s248, 1
      %p252 = scmp.eq.s32.totalorder %s108, 1
      %p253 = scmp.ne.s32.totalorder %s248, %s250
      %p254 = scmp.eq.s32.totalorder %s108, 0
      %p255 = por %p253, %p254
      %p256 = scmp.ne.s32.totalorder %s248, %s250
      %p257 = scmp.eq.s32.totalorder %s113, 1
      %p258 = por %p256, %p257
      %p259 = scmp.ne.s32.totalorder %s250, %s251
      %p260 = scmp.eq.s32.totalorder %s113, 0
      %p261 = por %p259, %p260
      %p262 = scmp.ne.s32.totalorder %s250, %s251
      %p263 = scmp.eq.s32.totalorder %s114, 1
      %p264 = por %p262, %p263
      %p266 = scmp.ne.s32.totalorder %s251, %s265
      %p267 = scmp.eq.s32.totalorder %s114, 0
      %p268 = por %p266, %p267
      %s270 = sadd.s32 %s269, 1
      %p273 = scmp.eq.s32.totalorder %s108, 1
      %p274 = scmp.ne.s32.totalorder %s269, %s271
      %p275 = scmp.eq.s32.totalorder %s108, 0
      %p276 = por %p274, %p275
      %p277 = scmp.ne.s32.totalorder %s269, %s271
      %p278 = scmp.eq.s32.totalorder %s113, 1
      %p279 = por %p277, %p278
      %p280 = scmp.ne.s32.totalorder %s271, %s272
      %p281 = scmp.eq.s32.totalorder %s113, 0
      %p282 = por %p280, %p281
      %p283 = scmp.ne.s32.totalorder %s271, %s272
      %p284 = scmp.eq.s32.totalorder %s114, 1
      %p285 = por %p283, %p284
      %p287 = scmp.ne.s32.totalorder %s272, %s286
      %p288 = scmp.eq.s32.totalorder %s114, 0
      %p289 = por %p287, %p288
      %s291 = sadd.s32 %s290, 1
      %p294 = scmp.eq.s32.totalorder %s108, 1
      %p295 = scmp.ne.s32.totalorder %s290, %s292
      %p296 = scmp.eq.s32.totalorder %s108, 0
      %p297 = por %p295, %p296
      %p298 = scmp.ne.s32.totalorder %s290, %s292
      %p299 = scmp.eq.s32.totalorder %s113, 1
      %p300 = por %p298, %p299
      %p301 = scmp.ne.s32.totalorder %s292, %s293
      %p302 = scmp.eq.s32.totalorder %s113, 0
      %p303 = por %p301, %p302
      %p304 = scmp.ne.s32.totalorder %s292, %s293
      %p305 = scmp.eq.s32.totalorder %s114, 1
      %p306 = por %p304, %p305
      %p308 = scmp.ne.s32.totalorder %s293, %s307
      %p309 = scmp.eq.s32.totalorder %s114, 0
      %p310 = por %p308, %p309
      %s312 = sadd.s32 %s311, 1
      %p315 = scmp.eq.s32.totalorder %s108, 1
      %p316 = scmp.ne.s32.totalorder %s311, %s313
      %p317 = scmp.eq.s32.totalorder %s108, 0
      %p318 = por %p316, %p317
      %p319 = scmp.ne.s32.totalorder %s311, %s313
      %p320 = scmp.eq.s32.totalorder %s113, 1
      %p321 = por %p319, %p320
      %p322 = scmp.ne.s32.totalorder %s313, %s314
      %p323 = scmp.eq.s32.totalorder %s113, 0
      %p324 = por %p322, %p323
      %p325 = scmp.ne.s32.totalorder %s313, %s314
      %p326 = scmp.eq.s32.totalorder %s114, 1
      %p327 = por %p325, %p326
      %p329 = scmp.ne.s32.totalorder %s314, %s328
      %p330 = scmp.eq.s32.totalorder %s114, 0
      %p331 = por %p329, %p330
      %s333 = sadd.s32 %s332, 1
      %p336 = scmp.eq.s32.totalorder %s108, 1
      %p337 = scmp.ne.s32.totalorder %s332, %s334
      %p338 = scmp.eq.s32.totalorder %s108, 0
      %p339 = por %p337, %p338
      %p340 = scmp.ne.s32.totalorder %s332, %s334
      %p341 = scmp.eq.s32.totalorder %s113, 1
      %p342 = por %p340, %p341
      %p343 = scmp.ne.s32.totalorder %s334, %s335
      %p344 = scmp.eq.s32.totalorder %s113, 0
      %p345 = por %p343, %p344
      %p346 = scmp.ne.s32.totalorder %s334, %s335
      %p347 = scmp.eq.s32.totalorder %s114, 1
      %p348 = por %p346, %p347
      %p350 = scmp.ne.s32.totalorder %s335, %s349
      %p351 = scmp.eq.s32.totalorder %s114, 0
      %p352 = por %p350, %p351
      %s354 = sadd.s32 %s353, 1
      %p357 = scmp.eq.s32.totalorder %s108, 1
      %p358 = scmp.ne.s32.totalorder %s353, %s355
      %p359 = scmp.eq.s32.totalorder %s108, 0
      %p360 = por %p358, %p359
      %p361 = scmp.ne.s32.totalorder %s353, %s355
      %p362 = scmp.eq.s32.totalorder %s113, 1
      %p363 = por %p361, %p362
      %p364 = scmp.ne.s32.totalorder %s355, %s356
      %p365 = scmp.eq.s32.totalorder %s113, 0
      %p366 = por %p364, %p365
      %p367 = scmp.ne.s32.totalorder %s355, %s356
      %p368 = scmp.eq.s32.totalorder %s114, 1
      %p369 = por %p367, %p368
      %p371 = scmp.ne.s32.totalorder %s356, %s370
      %p372 = scmp.eq.s32.totalorder %s114, 0
      %p373 = por %p371, %p372
      %s374 = ssub.s32 %s116, %s123
      %p375 = scmp.eq.s32.totalorder %s374, 0
      %s377 = sadd.s32 %s376, 1
      %s378 = scalar_select %p375, %s376, %s377
      %p381 = pneg %p375
      %p382 = scmp.eq.s32.totalorder %s108, 1
      %p383 = por %p381, %p382
      %p384 = scmp.ne.s32.totalorder %s376, %s379
      %p385 = scmp.eq.s32.totalorder %s108, 0
      %p386 = por %p384, %p385
      %p387 = scmp.ne.s32.totalorder %s376, %s379
      %p388 = scmp.eq.s32.totalorder %s113, 1
      %p389 = por %p387, %p388
      %p390 = scmp.ne.s32.totalorder %s379, %s380
      %p391 = scmp.eq.s32.totalorder %s113, 0
      %p392 = por %p390, %p391
      %p393 = scmp.ne.s32.totalorder %s379, %s380
      %p394 = scmp.eq.s32.totalorder %s114, 1
      %p395 = por %p393, %p394
      %p397 = scmp.ne.s32.totalorder %s380, %s396
      %p398 = scmp.eq.s32.totalorder %s114, 0
      %p399 = por %p397, %p398
      %s400 = ssub.s32 %s116, %s123
      %p401 = scmp.eq.s32.totalorder %s400, 0
      %s403 = sadd.s32 %s402, 1
      %s404 = scalar_select %p401, %s402, %s403
      %p407 = pneg %p401
      %p408 = scmp.eq.s32.totalorder %s108, 1
      %p409 = por %p407, %p408
      %p410 = scmp.ne.s32.totalorder %s402, %s405
      %p411 = scmp.eq.s32.totalorder %s108, 0
      %p412 = por %p410, %p411
      %p413 = scmp.ne.s32.totalorder %s402, %s405
      %p414 = scmp.eq.s32.totalorder %s113, 1
      %p415 = por %p413, %p414
      %p416 = scmp.ne.s32.totalorder %s405, %s406
      %p417 = scmp.eq.s32.totalorder %s113, 0
      %p418 = por %p416, %p417
      %p419 = scmp.ne.s32.totalorder %s405, %s406
      %p420 = scmp.eq.s32.totalorder %s114, 1
      %p421 = por %p419, %p420
      %p423 = scmp.ne.s32.totalorder %s406, %s422
      %p424 = scmp.eq.s32.totalorder %s114, 0
      %p425 = por %p423, %p424
      %s426 = ssub.s32 %s116, %s123
      %p427 = scmp.eq.s32.totalorder %s426, 0
      %s429 = sadd.s32 %s428, 1
      %s430 = scalar_select %p427, %s428, %s429
      %p433 = pneg %p427
      %p434 = scmp.eq.s32.totalorder %s108, 1
      %p435 = por %p433, %p434
      %p436 = scmp.ne.s32.totalorder %s428, %s431
      %p437 = scmp.eq.s32.totalorder %s108, 0
      %p438 = por %p436, %p437
      %p439 = scmp.ne.s32.totalorder %s428, %s431
      %p440 = scmp.eq.s32.totalorder %s113, 1
      %p441 = por %p439, %p440
      %p442 = scmp.ne.s32.totalorder %s431, %s432
      %p443 = scmp.eq.s32.totalorder %s113, 0
      %p444 = por %p442, %p443
      %p445 = scmp.ne.s32.totalorder %s431, %s432
      %p446 = scmp.eq.s32.totalorder %s114, 1
      %p447 = por %p445, %p446
      %p449 = scmp.ne.s32.totalorder %s432, %s448
      %p450 = scmp.eq.s32.totalorder %s114, 0
      %p451 = por %p449, %p450
      %s452 = ssub.s32 %s116, %s123
      %p453 = scmp.eq.s32.totalorder %s452, 0
      %s455 = sadd.s32 %s454, 1
      %s456 = scalar_select %p453, %s454, %s455
      %p459 = pneg %p453
      %p460 = scmp.eq.s32.totalorder %s108, 1
      %p461 = por %p459, %p460
      %p462 = scmp.ne.s32.totalorder %s454, %s457
      %p463 = scmp.eq.s32.totalorder %s108, 0
      %p464 = por %p462, %p463
      %p465 = scmp.ne.s32.totalorder %s454, %s457
      %p466 = scmp.eq.s32.totalorder %s113, 1
      %p467 = por %p465, %p466
      %p468 = scmp.ne.s32.totalorder %s457, %s458
      %p469 = scmp.eq.s32.totalorder %s113, 0
      %p470 = por %p468, %p469
      %p471 = scmp.ne.s32.totalorder %s457, %s458
      %p472 = scmp.eq.s32.totalorder %s114, 1
      %p473 = por %p471, %p472
      %p475 = scmp.ne.s32.totalorder %s458, %s474
      %p476 = scmp.eq.s32.totalorder %s114, 0
      %p477 = por %p475, %p476
      %s478 = ssub.s32 %s116, %s123
      %p479 = scmp.eq.s32.totalorder %s478, 0
      %s481 = sadd.s32 %s480, 1
      %s482 = scalar_select %p479, %s480, %s481
      %p485 = pneg %p479
      %p486 = scmp.eq.s32.totalorder %s108, 1
      %p487 = por %p485, %p486
      %p488 = scmp.ne.s32.totalorder %s480, %s483
      %p489 = scmp.eq.s32.totalorder %s108, 0
      %p490 = por %p488, %p489
      %p491 = scmp.ne.s32.totalorder %s480, %s483
      %p492 = scmp.eq.s32.totalorder %s113, 1
      %p493 = por %p491, %p492
      %p494 = scmp.ne.s32.totalorder %s483, %s484
      %p495 = scmp.eq.s32.totalorder %s113, 0
      %p496 = por %p494, %p495
      %p497 = scmp.ne.s32.totalorder %s483, %s484
      %p498 = scmp.eq.s32.totalorder %s114, 1
      %p499 = por %p497, %p498
      %p501 = scmp.ne.s32.totalorder %s484, %s500
      %p502 = scmp.eq.s32.totalorder %s114, 0
      %p503 = por %p501, %p502
      %s504 = ssub.s32 %s116, %s123
      %p505 = scmp.eq.s32.totalorder %s504, 0
      %s507 = sadd.s32 %s506, 1
      %s508 = scalar_select %p505, %s506, %s507
      %p511 = pneg %p505
      %p512 = scmp.eq.s32.totalorder %s108, 1
      %p513 = por %p511, %p512
      %p514 = scmp.ne.s32.totalorder %s506, %s509
      %p515 = scmp.eq.s32.totalorder %s108, 0
      %p516 = por %p514, %p515
      %p517 = scmp.ne.s32.totalorder %s506, %s509
      %p518 = scmp.eq.s32.totalorder %s113, 1
      %p519 = por %p517, %p518
      %p520 = scmp.ne.s32.totalorder %s509, %s510
      %p521 = scmp.eq.s32.totalorder %s113, 0
      %p522 = por %p520, %p521
      %p523 = scmp.ne.s32.totalorder %s509, %s510
      %p524 = scmp.eq.s32.totalorder %s114, 1
      %p525 = por %p523, %p524
      %p527 = scmp.ne.s32.totalorder %s510, %s526
      %p528 = scmp.eq.s32.totalorder %s114, 0
      %p529 = por %p527, %p528
      %s530 = ssub.s32 %s116, %s123
      %p531 = scmp.eq.s32.totalorder %s530, 0
      %s533 = sadd.s32 %s532, 1
      %s534 = scalar_select %p531, %s532, %s533
      %p537 = pneg %p531
      %p538 = scmp.eq.s32.totalorder %s108, 1
      %p539 = por %p537, %p538
      %p540 = scmp.ne.s32.totalorder %s532, %s535
      %p541 = scmp.eq.s32.totalorder %s108, 0
      %p542 = por %p540, %p541
      %p543 = scmp.ne.s32.totalorder %s532, %s535
      %p544 = scmp.eq.s32.totalorder %s113, 1
      %p545 = por %p543, %p544
      %p546 = scmp.ne.s32.totalorder %s535, %s536
      %p547 = scmp.eq.s32.totalorder %s113, 0
      %p548 = por %p546, %p547
      %p549 = scmp.ne.s32.totalorder %s535, %s536
      %p550 = scmp.eq.s32.totalorder %s114, 1
      %p551 = por %p549, %p550
      %p553 = scmp.ne.s32.totalorder %s536, %s552
      %p554 = scmp.eq.s32.totalorder %s114, 0
      %p555 = por %p553, %p554
      %s556 = ssub.s32 %s116, %s123
      %p557 = scmp.eq.s32.totalorder %s556, 0
      %s559 = sadd.s32 %s558, 1
      %s560 = scalar_select %p557, %s558, %s559
      %p563 = pneg %p557
      %p564 = scmp.eq.s32.totalorder %s108, 1
      %p565 = por %p563, %p564
      %p566 = scmp.ne.s32.totalorder %s558, %s561
      %p567 = scmp.eq.s32.totalorder %s108, 0
      %p568 = por %p566, %p567
      %p569 = scmp.ne.s32.totalorder %s558, %s561
      %p570 = scmp.eq.s32.totalorder %s113, 1
      %p571 = por %p569, %p570
      %p572 = scmp.ne.s32.totalorder %s561, %s562
      %p573 = scmp.eq.s32.totalorder %s113, 0
      %p574 = por %p572, %p573
      %p575 = scmp.ne.s32.totalorder %s561, %s562
      %p576 = scmp.eq.s32.totalorder %s114, 1
      %p577 = por %p575, %p576
      %p579 = scmp.ne.s32.totalorder %s562, %s578
      %p580 = scmp.eq.s32.totalorder %s114, 0
      %p581 = por %p579, %p580
      %s582 = ssub.s32 %s116, %s123
      %p583 = scmp.eq.s32.totalorder %s582, 0
      %s585 = sadd.s32 %s584, 1
      %s586 = scalar_select %p583, %s584, %s585
      %p589 = pneg %p583
      %p590 = scmp.eq.s32.totalorder %s108, 1
      %p591 = por %p589, %p590
      %p592 = scmp.ne.s32.totalorder %s584, %s587
      %p593 = scmp.eq.s32.totalorder %s108, 0
      %p594 = por %p592, %p593
      %p595 = scmp.ne.s32.totalorder %s584, %s587
      %p596 = scmp.eq.s32.totalorder %s113, 1
      %p597 = por %p595, %p596
      %p598 = scmp.ne.s32.totalorder %s587, %s588
      %p599 = scmp.eq.s32.totalorder %s113, 0
      %p600 = por %p598, %p599
      %p601 = scmp.ne.s32.totalorder %s587, %s588
      %p602 = scmp.eq.s32.totalorder %s114, 1
      %p603 = por %p601, %p602
      %p605 = scmp.ne.s32.totalorder %s588, %s604
      %p606 = scmp.eq.s32.totalorder %s114, 0
      %p607 = por %p605, %p606
      %s608 = ssub.s32 %s116, %s123
      %p609 = scmp.eq.s32.totalorder %s608, 0
      %s611 = sadd.s32 %s610, 1
      %s612 = scalar_select %p609, %s610, %s611
      %p615 = pneg %p609
      %p616 = scmp.eq.s32.totalorder %s108, 1
      %p617 = por %p615, %p616
      %p618 = scmp.ne.s32.totalorder %s610, %s613
      %p619 = scmp.eq.s32.totalorder %s108, 0
      %p620 = por %p618, %p619
      %p621 = scmp.ne.s32.totalorder %s610, %s613
      %p622 = scmp.eq.s32.totalorder %s113, 1
      %p623 = por %p621, %p622
      %p624 = scmp.ne.s32.totalorder %s613, %s614
      %p625 = scmp.eq.s32.totalorder %s113, 0
      %p626 = por %p624, %p625
      %p627 = scmp.ne.s32.totalorder %s613, %s614
      %p628 = scmp.eq.s32.totalorder %s114, 1
      %p629 = por %p627, %p628
      %p631 = scmp.ne.s32.totalorder %s614, %s630
      %p632 = scmp.eq.s32.totalorder %s114, 0
      %p633 = por %p631, %p632
      %s634 = ssub.s32 %s116, %s123
      %p635 = scmp.eq.s32.totalorder %s634, 0
      %s637 = sadd.s32 %s636, 1
      %s638 = scalar_select %p635, %s636, %s637
      %p641 = pneg %p635
      %p642 = scmp.eq.s32.totalorder %s108, 1
      %p643 = por %p641, %p642
      %p644 = scmp.ne.s32.totalorder %s636, %s639
      %p645 = scmp.eq.s32.totalorder %s108, 0
      %p646 = por %p644, %p645
      %p647 = scmp.ne.s32.totalorder %s636, %s639
      %p648 = scmp.eq.s32.totalorder %s113, 1
      %p649 = por %p647, %p648
      %p650 = scmp.ne.s32.totalorder %s639, %s640
      %p651 = scmp.eq.s32.totalorder %s113, 0
      %p652 = por %p650, %p651
      %p653 = scmp.ne.s32.totalorder %s639, %s640
      %p654 = scmp.eq.s32.totalorder %s114, 1
      %p655 = por %p653, %p654
      %p657 = scmp.ne.s32.totalorder %s640, %s656
      %p658 = scmp.eq.s32.totalorder %s114, 0
      %p659 = por %p657, %p658
      %s660 = ssub.s32 %s116, %s123
      %p661 = scmp.eq.s32.totalorder %s660, 0
      %s663 = sadd.s32 %s662, 1
      %s664 = scalar_select %p661, %s662, %s663
      %p667 = pneg %p661
      %p668 = scmp.eq.s32.totalorder %s108, 1
      %p669 = por %p667, %p668
      %p670 = scmp.ne.s32.totalorder %s662, %s665
      %p671 = scmp.eq.s32.totalorder %s108, 0
      %p672 = por %p670, %p671
      %p673 = scmp.ne.s32.totalorder %s662, %s665
      %p674 = scmp.eq.s32.totalorder %s113, 1
      %p675 = por %p673, %p674
      %p676 = scmp.ne.s32.totalorder %s665, %s666
      %p677 = scmp.eq.s32.totalorder %s113, 0
      %p678 = por %p676, %p677
      %p679 = scmp.ne.s32.totalorder %s665, %s666
      %p680 = scmp.eq.s32.totalorder %s114, 1
      %p681 = por %p679, %p680
      %p683 = scmp.ne.s32.totalorder %s666, %s682
      %p684 = scmp.eq.s32.totalorder %s114, 0
      %p685 = por %p683, %p684
      %s686 = ssub.s32 %s116, %s123
      %p687 = scmp.eq.s32.totalorder %s686, 0
      %s689 = sadd.s32 %s688, 1
      %s690 = scalar_select %p687, %s688, %s689
      %p693 = pneg %p687
      %p694 = scmp.eq.s32.totalorder %s108, 1
      %p695 = por %p693, %p694
      %p696 = scmp.ne.s32.totalorder %s688, %s691
      %p697 = scmp.eq.s32.totalorder %s108, 0
      %p698 = por %p696, %p697
      %p699 = scmp.ne.s32.totalorder %s688, %s691
      %p700 = scmp.eq.s32.totalorder %s113, 1
      %p701 = por %p699, %p700
      %p702 = scmp.ne.s32.totalorder %s691, %s692
      %p703 = scmp.eq.s32.totalorder %s113, 0
      %p704 = por %p702, %p703
      %p705 = scmp.ne.s32.totalorder %s691, %s692
      %p706 = scmp.eq.s32.totalorder %s114, 1
      %p707 = por %p705, %p706
      %p709 = scmp.ne.s32.totalorder %s692, %s708
      %p710 = scmp.eq.s32.totalorder %s114, 0
      %p711 = por %p709, %p710
      %s712 = ssub.s32 %s116, %s123
      %p713 = scmp.eq.s32.totalorder %s712, 0
      %s715 = sadd.s32 %s714, 1
      %s716 = scalar_select %p713, %s714, %s715
      %p719 = pneg %p713
      %p720 = scmp.eq.s32.totalorder %s108, 1
      %p721 = por %p719, %p720
      %p722 = scmp.ne.s32.totalorder %s714, %s717
      %p723 = scmp.eq.s32.totalorder %s108, 0
      %p724 = por %p722, %p723
      %p725 = scmp.ne.s32.totalorder %s714, %s717
      %p726 = scmp.eq.s32.totalorder %s113, 1
      %p727 = por %p725, %p726
      %p728 = scmp.ne.s32.totalorder %s717, %s718
      %p729 = scmp.eq.s32.totalorder %s113, 0
      %p730 = por %p728, %p729
      %p731 = scmp.ne.s32.totalorder %s717, %s718
      %p732 = scmp.eq.s32.totalorder %s114, 1
      %p733 = por %p731, %p732
      %p735 = scmp.ne.s32.totalorder %s718, %s734
      %p736 = scmp.eq.s32.totalorder %s114, 0
      %p737 = por %p735, %p736
      %s738 = ssub.s32 %s116, %s123
      %p739 = scmp.eq.s32.totalorder %s738, 0
      %s741 = sadd.s32 %s740, 1
      %s742 = scalar_select %p739, %s740, %s741
      %p745 = pneg %p739
      %p746 = scmp.eq.s32.totalorder %s108, 1
      %p747 = por %p745, %p746
      %p748 = scmp.ne.s32.totalorder %s740, %s743
      %p749 = scmp.eq.s32.totalorder %s108, 0
      %p750 = por %p748, %p749
      %p751 = scmp.ne.s32.totalorder %s740, %s743
      %p752 = scmp.eq.s32.totalorder %s113, 1
      %p753 = por %p751, %p752
      %p754 = scmp.ne.s32.totalorder %s743, %s744
      %p755 = scmp.eq.s32.totalorder %s113, 0
      %p756 = por %p754, %p755
      %p757 = scmp.ne.s32.totalorder %s743, %s744
      %p758 = scmp.eq.s32.totalorder %s114, 1
      %p759 = por %p757, %p758
      %p761 = scmp.ne.s32.totalorder %s744, %s760
      %p762 = scmp.eq.s32.totalorder %s114, 0
      %p763 = por %p761, %p762
      %s764 = ssub.s32 %s116, %s123
      %p765 = scmp.eq.s32.totalorder %s764, 0
      %s767 = sadd.s32 %s766, 1
      %s768 = scalar_select %p765, %s766, %s767
      %p771 = pneg %p765
      %p772 = scmp.eq.s32.totalorder %s108, 1
      %p773 = por %p771, %p772
      %p774 = scmp.ne.s32.totalorder %s766, %s769
      %p775 = scmp.eq.s32.totalorder %s108, 0
      %p776 = por %p774, %p775
      %p777 = scmp.ne.s32.totalorder %s766, %s769
      %p778 = scmp.eq.s32.totalorder %s113, 1
      %p779 = por %p777, %p778
      %p780 = scmp.ne.s32.totalorder %s769, %s770
      %p781 = scmp.eq.s32.totalorder %s113, 0
      %p782 = por %p780, %p781
      %p783 = scmp.ne.s32.totalorder %s769, %s770
      %p784 = scmp.eq.s32.totalorder %s114, 1
      %p785 = por %p783, %p784
      %p787 = scmp.ne.s32.totalorder %s770, %s786
      %p788 = scmp.eq.s32.totalorder %s114, 0
      %p789 = por %p787, %p788
      %s790 = ssub.s32 %s116, %s123
      %p791 = scmp.eq.s32.totalorder %s790, 0
      %s793 = sadd.s32 %s792, 1
      %s794 = scalar_select %p791, %s792, %s793
      %p797 = pneg %p791
      %p798 = scmp.eq.s32.totalorder %s108, 1
      %p799 = por %p797, %p798
      %p800 = scmp.ne.s32.totalorder %s792, %s795
      %p801 = scmp.eq.s32.totalorder %s108, 0
      %p802 = por %p800, %p801
      %p803 = scmp.ne.s32.totalorder %s792, %s795
      %p804 = scmp.eq.s32.totalorder %s113, 1
      %p805 = por %p803, %p804
      %p806 = scmp.ne.s32.totalorder %s795, %s796
      %p807 = scmp.eq.s32.totalorder %s113, 0
      %p808 = por %p806, %p807
      %p809 = scmp.ne.s32.totalorder %s795, %s796
      %p810 = scmp.eq.s32.totalorder %s114, 1
      %p811 = por %p809, %p810
      %p813 = scmp.ne.s32.totalorder %s796, %s812
      %p814 = scmp.eq.s32.totalorder %s114, 0
      %p815 = por %p813, %p814
      %s816 = ssub.s32 %s116, %s123
      %p817 = scmp.eq.s32.totalorder %s816, 0
      %s819 = sadd.s32 %s818, 1
      %s820 = scalar_select %p817, %s818, %s819
      %p823 = pneg %p817
      %p824 = scmp.eq.s32.totalorder %s108, 1
      %p825 = por %p823, %p824
      %p826 = scmp.ne.s32.totalorder %s818, %s821
      %p827 = scmp.eq.s32.totalorder %s108, 0
      %p828 = por %p826, %p827
      %p829 = scmp.ne.s32.totalorder %s818, %s821
      %p830 = scmp.eq.s32.totalorder %s113, 1
      %p831 = por %p829, %p830
      %p832 = scmp.ne.s32.totalorder %s821, %s822
      %p833 = scmp.eq.s32.totalorder %s113, 0
      %p834 = por %p832, %p833
      %p835 = scmp.ne.s32.totalorder %s821, %s822
      %p836 = scmp.eq.s32.totalorder %s114, 1
      %p837 = por %p835, %p836
      %p839 = scmp.ne.s32.totalorder %s822, %s838
      %p840 = scmp.eq.s32.totalorder %s114, 0
      %p841 = por %p839, %p840
      %s842 = ssub.s32 %s116, %s123
      %p843 = scmp.eq.s32.totalorder %s842, 0
      %s845 = sadd.s32 %s844, 1
      %s846 = scalar_select %p843, %s844, %s845
      %p849 = pneg %p843
      %p850 = scmp.eq.s32.totalorder %s108, 1
      %p851 = por %p849, %p850
      %p852 = scmp.ne.s32.totalorder %s844, %s847
      %p853 = scmp.eq.s32.totalorder %s108, 0
      %p854 = por %p852, %p853
      %p855 = scmp.ne.s32.totalorder %s844, %s847
      %p856 = scmp.eq.s32.totalorder %s113, 1
      %p857 = por %p855, %p856
      %p858 = scmp.ne.s32.totalorder %s847, %s848
      %p859 = scmp.eq.s32.totalorder %s113, 0
      %p860 = por %p858, %p859
      %p861 = scmp.ne.s32.totalorder %s847, %s848
      %p862 = scmp.eq.s32.totalorder %s114, 1
      %p863 = por %p861, %p862
      %p865 = scmp.ne.s32.totalorder %s848, %s864
      %p866 = scmp.eq.s32.totalorder %s114, 0
      %p867 = por %p865, %p866
      %s868 = ssub.s32 %s116, %s123
      %p869 = scmp.eq.s32.totalorder %s868, 0
      %s871 = sadd.s32 %s870, 1
      %s872 = scalar_select %p869, %s870, %s871
      %p875 = pneg %p869
      %p876 = scmp.eq.s32.totalorder %s108, 1
      %p877 = por %p875, %p876
      %p878 = scmp.ne.s32.totalorder %s870, %s873
      %p879 = scmp.eq.s32.totalorder %s108, 0
      %p880 = por %p878, %p879
      %p881 = scmp.ne.s32.totalorder %s870, %s873
      %p882 = scmp.eq.s32.totalorder %s113, 1
      %p883 = por %p881, %p882
      %p884 = scmp.ne.s32.totalorder %s873, %s874
      %p885 = scmp.eq.s32.totalorder %s113, 0
      %p886 = por %p884, %p885
      %p887 = scmp.ne.s32.totalorder %s873, %s874
      %p888 = scmp.eq.s32.totalorder %s114, 1
      %p889 = por %p887, %p888
      %p891 = scmp.ne.s32.totalorder %s874, %s890
      %p892 = scmp.eq.s32.totalorder %s114, 0
      %p893 = por %p891, %p892
      %s894 = ssub.s32 %s116, %s123
      %p895 = scmp.eq.s32.totalorder %s894, 0
      %s897 = sadd.s32 %s896, 1
      %s898 = scalar_select %p895, %s896, %s897
      %p901 = pneg %p895
      %p902 = scmp.eq.s32.totalorder %s108, 1
      %p903 = por %p901, %p902
      %p904 = scmp.ne.s32.totalorder %s896, %s899
      %p905 = scmp.eq.s32.totalorder %s108, 0
      %p906 = por %p904, %p905
      %p907 = scmp.ne.s32.totalorder %s896, %s899
      %p908 = scmp.eq.s32.totalorder %s113, 1
      %p909 = por %p907, %p908
      %p910 = scmp.ne.s32.totalorder %s899, %s900
      %p911 = scmp.eq.s32.totalorder %s113, 0
      %p912 = por %p910, %p911
      %p913 = scmp.ne.s32.totalorder %s899, %s900
      %p914 = scmp.eq.s32.totalorder %s114, 1
      %p915 = por %p913, %p914
      %p917 = scmp.ne.s32.totalorder %s900, %s916
      %p918 = scmp.eq.s32.totalorder %s114, 0
      %p919 = por %p917, %p918
      %s920 = ssub.s32 %s116, %s123
      %p921 = scmp.eq.s32.totalorder %s920, 0
      %s923 = sadd.s32 %s922, 1
      %s924 = scalar_select %p921, %s922, %s923
      %p927 = pneg %p921
      %p928 = scmp.eq.s32.totalorder %s108, 1
      %p929 = por %p927, %p928
      %p930 = scmp.ne.s32.totalorder %s922, %s925
      %p931 = scmp.eq.s32.totalorder %s108, 0
      %p932 = por %p930, %p931
      %p933 = scmp.ne.s32.totalorder %s922, %s925
      %p934 = scmp.eq.s32.totalorder %s113, 1
      %p935 = por %p933, %p934
      %p936 = scmp.ne.s32.totalorder %s925, %s926
      %p937 = scmp.eq.s32.totalorder %s113, 0
      %p938 = por %p936, %p937
      %p939 = scmp.ne.s32.totalorder %s925, %s926
      %p940 = scmp.eq.s32.totalorder %s114, 1
      %p941 = por %p939, %p940
      %p943 = scmp.ne.s32.totalorder %s926, %s942
      %p944 = scmp.eq.s32.totalorder %s114, 0
      %p945 = por %p943, %p944
      %s946 = ssub.s32 %s116, %s123
      %p947 = scmp.eq.s32.totalorder %s946, 0
      %s949 = sadd.s32 %s948, 1
      %s950 = scalar_select %p947, %s948, %s949
      %p953 = pneg %p947
      %p954 = scmp.eq.s32.totalorder %s108, 1
      %p955 = por %p953, %p954
      %p956 = scmp.ne.s32.totalorder %s948, %s951
      %p957 = scmp.eq.s32.totalorder %s108, 0
      %p958 = por %p956, %p957
      %p959 = scmp.ne.s32.totalorder %s948, %s951
      %p960 = scmp.eq.s32.totalorder %s113, 1
      %p961 = por %p959, %p960
      %p962 = scmp.ne.s32.totalorder %s951, %s952
      %p963 = scmp.eq.s32.totalorder %s113, 0
      %p964 = por %p962, %p963
      %p965 = scmp.ne.s32.totalorder %s951, %s952
      %p966 = scmp.eq.s32.totalorder %s114, 1
      %p967 = por %p965, %p966
      %p969 = scmp.ne.s32.totalorder %s952, %s968
      %p970 = scmp.eq.s32.totalorder %s114, 0
      %p971 = por %p969, %p970
      %s972 = ssub.s32 %s116, %s123
      %p973 = scmp.eq.s32.totalorder %s972, 0
      %s975 = sadd.s32 %s974, 1
      %s976 = scalar_select %p973, %s974, %s975
      %p979 = pneg %p973
      %p980 = scmp.eq.s32.totalorder %s108, 1
      %p981 = por %p979, %p980
      %p982 = scmp.ne.s32.totalorder %s974, %s977
      %p983 = scmp.eq.s32.totalorder %s108, 0
      %p984 = por %p982, %p983
      %p985 = scmp.ne.s32.totalorder %s974, %s977
      %p986 = scmp.eq.s32.totalorder %s113, 1
      %p987 = por %p985, %p986
      %p988 = scmp.ne.s32.totalorder %s977, %s978
      %p989 = scmp.eq.s32.totalorder %s113, 0
      %p990 = por %p988, %p989
      %p991 = scmp.ne.s32.totalorder %s977, %s978
      %p992 = scmp.eq.s32.totalorder %s114, 1
      %p993 = por %p991, %p992
      %p995 = scmp.ne.s32.totalorder %s978, %s994
      %p996 = scmp.eq.s32.totalorder %s114, 0
      %p997 = por %p995, %p996
      %s998 = ssub.s32 %s116, %s123
      %p999 = scmp.eq.s32.totalorder %s998, 0
      %s1001 = sadd.s32 %s1000, 1
      %s1002 = scalar_select %p999, %s1000, %s1001
      %p1005 = pneg %p999
      %p1006 = scmp.eq.s32.totalorder %s108, 1
      %p1007 = por %p1005, %p1006
      %p1008 = scmp.ne.s32.totalorder %s1000, %s1003
      %p1009 = scmp.eq.s32.totalorder %s108, 0
      %p1010 = por %p1008, %p1009
      %p1011 = scmp.ne.s32.totalorder %s1000, %s1003
      %p1012 = scmp.eq.s32.totalorder %s113, 1
      %p1013 = por %p1011, %p1012
      %p1014 = scmp.ne.s32.totalorder %s1003, %s1004
      %p1015 = scmp.eq.s32.totalorder %s113, 0
      %p1016 = por %p1014, %p1015
      %p1017 = scmp.ne.s32.totalorder %s1003, %s1004
      %p1018 = scmp.eq.s32.totalorder %s114, 1
      %p1019 = por %p1017, %p1018
      %p1021 = scmp.ne.s32.totalorder %s1004, %s1020
      %p1022 = scmp.eq.s32.totalorder %s114, 0
      %p1023 = por %p1021, %p1022
      %s1024 = ssub.s32 %s116, %s123
      %p1025 = scmp.eq.s32.totalorder %s1024, 0
      %s1027 = sadd.s32 %s1026, 1
      %s1028 = scalar_select %p1025, %s1026, %s1027
      %p1031 = pneg %p1025
      %p1032 = scmp.eq.s32.totalorder %s108, 1
      %p1033 = por %p1031, %p1032
      %p1034 = scmp.ne.s32.totalorder %s1026, %s1029
      %p1035 = scmp.eq.s32.totalorder %s108, 0
      %p1036 = por %p1034, %p1035
      %p1037 = scmp.ne.s32.totalorder %s1026, %s1029
      %p1038 = scmp.eq.s32.totalorder %s113, 1
      %p1039 = por %p1037, %p1038
      %p1040 = scmp.ne.s32.totalorder %s1029, %s1030
      %p1041 = scmp.eq.s32.totalorder %s113, 0
      %p1042 = por %p1040, %p1041
      %p1043 = scmp.ne.s32.totalorder %s1029, %s1030
      %p1044 = scmp.eq.s32.totalorder %s114, 1
      %p1045 = por %p1043, %p1044
      %p1047 = scmp.ne.s32.totalorder %s1030, %s1046
      %p1048 = scmp.eq.s32.totalorder %s114, 0
      %p1049 = por %p1047, %p1048
      %s1050 = ssub.s32 %s115, %s127
      %p1051 = scmp.eq.s32.totalorder %s1050, 0
      %s1053 = sadd.s32 %s1052, 1
      %s1054 = scalar_select %p1051, %s1052, %s1053
      %p1057 = pneg %p1051
      %p1058 = scmp.eq.s32.totalorder %s108, 1
      %p1059 = por %p1057, %p1058
      %p1060 = scmp.ne.s32.totalorder %s1052, %s1055
      %p1061 = scmp.eq.s32.totalorder %s108, 0
      %p1062 = por %p1060, %p1061
      %p1063 = scmp.ne.s32.totalorder %s1052, %s1055
      %p1064 = scmp.eq.s32.totalorder %s113, 1
      %p1065 = por %p1063, %p1064
      %p1066 = scmp.ne.s32.totalorder %s1055, %s1056
      %p1067 = scmp.eq.s32.totalorder %s113, 0
      %p1068 = por %p1066, %p1067
      %p1069 = scmp.ne.s32.totalorder %s1055, %s1056
      %p1070 = scmp.eq.s32.totalorder %s114, 1
      %p1071 = por %p1069, %p1070
      %p1073 = scmp.ne.s32.totalorder %s1056, %s1072
      %p1074 = scmp.eq.s32.totalorder %s114, 0
      %p1075 = por %p1073, %p1074
      %p1076 = scmp.le.s32.totalorder 1, %s108
      %p1077 = scmp.lt.s32.totalorder %s108, 3
      %p1078 = pnand %p1076, %p1077
      %p1079 = pneg %p1078
      // Predicated region
      $region9: #{tpu_custom_call.1} parent=5 // pred_check
        _
      $region10: #{tpu_custom_call.1} parent=5 // pred_check_branch
        %1081 = sbr.rel (%p1078) target = $region12
      $region11: #{tpu_custom_call.1} parent=5 // pred_region
        %s1082 = ssub.s32 %s108, 1
        // Predicated region
        $region13: #{tpu_custom_call.1} parent=11 // pred_check
          %p1083 = pneg %p146
        $region14: #{tpu_custom_call.1} parent=11 // pred_check_branch
          %1085 = sbr.rel (%p1083) target = $region16
        $region15: #{tpu_custom_call.1} parent=11 // pred_region
          %s1086 = smul.u32 2, %s117
          %1088 = vsyncadd [#allocation6], 0
          %s1089 = smul.addr %s1086, 4
          %s1090 = scalar_lea.hbm %s1, %s1089
          %s1091 = sshll.u32 %s1090, 4
          %s1092 = int_to_ptr.hbm [resolvable:$true] %s1091
          %s1093 = sshll.u32 [#allocation5], 4
          %s1094 = int_to_ptr.vmem [resolvable:$true] %s1093
          %1099 = dma.hbm_to_vmem [thread:$0]  %s1092, 128, %s1094, [#allocation6], 64, 64, 4
        $region16: #{tpu_custom_call.1} parent=11 // pred_fallthru
          _
        // Predicated region
        $region17: #{tpu_custom_call.1} parent=11 // pred_check
          %p1100 = pneg %p172
        $region18: #{tpu_custom_call.1} parent=11 // pred_check_branch
          %1102 = sbr.rel (%p1100) target = $region20
        $region19: #{tpu_custom_call.1} parent=11 // pred_region
          %s1103 = smul.u32 2, %s117
          %1105 = vsyncadd [#allocation8], 0
          %s1106 = smul.addr %s1103, 2
          %s1107 = smul.addr %s1106, 4
          %s1108 = scalar_lea.hbm %s3, %s1107
          %s1109 = sshll.u32 %s1108, 4
          %s1110 = int_to_ptr.hbm [resolvable:$true] %s1109
          %s1111 = sshll.u32 [#allocation7], 4
          %s1112 = int_to_ptr.vmem [resolvable:$true] %s1111
          %1117 = dma.hbm_to_vmem [thread:$0]  %s1110, 256, %s1112, [#allocation8], 64, 64, 4
        $region20: #{tpu_custom_call.1} parent=11 // pred_fallthru
          _
        // Predicated region
        $region21: #{tpu_custom_call.1} parent=11 // pred_check
          %p1118 = pneg %p198
        $region22: #{tpu_custom_call.1} parent=11 // pred_check_branch
          %1120 = sbr.rel (%p1118) target = $region24
        $region23: #{tpu_custom_call.1} parent=11 // pred_region
          %1122 = vsyncadd [#allocation8], 0
          %s1123 = smul.addr %s117, 2
          %s1124 = scalar_lea.hbm %s5, %s1123
          %s1126 = sshll.u32 %s1124, 4
          %s1127 = int_to_ptr.hbm [resolvable:$true] %s1126
          %s1128 = sshll.u32 [#allocation9], 4
          %s1129 = int_to_ptr.vmem [resolvable:$true] %s1128
          %1131 = dma.hbm_to_vmem [thread:$0]  %s1127, 32, %s1129, [#allocation8]
        $region24: #{tpu_custom_call.1} parent=11 // pred_fallthru
          _
        // Predicated region
        $region25: #{tpu_custom_call.1} parent=11 // pred_check
          %p1132 = pneg %p219
        $region26: #{tpu_custom_call.1} parent=11 // pred_check_branch
          %1134 = sbr.rel (%p1132) target = $region28
        $region27: #{tpu_custom_call.1} parent=11 // pred_region
          %1136 = vsyncadd [#allocation11], 0
          %s1138 = sshll.u32 %s7, 4
          %s1139 = int_to_ptr.hbm [resolvable:$true] %s1138
          %s1140 = sshll.u32 [#allocation10], 4
          %s1141 = int_to_ptr.vmem [resolvable:$true] %s1140
          %1143 = dma.hbm_to_vmem [thread:$0]  %s1139, 16, %s1141, [#allocation11]
        $region28: #{tpu_custom_call.1} parent=11 // pred_fallthru
          _
        // Predicated region
        $region29: #{tpu_custom_call.1} parent=11 // pred_check
          %p1144 = pneg %p240
        $region30: #{tpu_custom_call.1} parent=11 // pred_check_branch
          %1146 = sbr.rel (%p1144) target = $region32
        $region31: #{tpu_custom_call.1} parent=11 // pred_region
          %1148 = vsyncadd [#allocation11], 0
          %s1150 = sshll.u32 %s9, 4
          %s1151 = int_to_ptr.hbm [resolvable:$true] %s1150
          %s1152 = sshll.u32 [#allocation12], 4
          %s1153 = int_to_ptr.vmem [resolvable:$true] %s1152
          %1155 = dma.hbm_to_vmem [thread:$0]  %s1151, 16, %s1153, [#allocation11]
        $region32: #{tpu_custom_call.1} parent=11 // pred_fallthru
          _
        // Predicated region
        $region33: #{tpu_custom_call.1} parent=11 // pred_check
          %p1156 = pneg %p261
        $region34: #{tpu_custom_call.1} parent=11 // pred_check_branch
          %1158 = sbr.rel (%p1156) target = $region36
        $region35: #{tpu_custom_call.1} parent=11 // pred_region
          _
        $region36: #{tpu_custom_call.1} parent=11 // pred_fallthru
          _
        // Predicated region
        $region37: #{tpu_custom_call.1} parent=11 // pred_check
          %p1159 = pneg %p282
        $region38: #{tpu_custom_call.1} parent=11 // pred_check_branch
          %1161 = sbr.rel (%p1159) target = $region40
        $region39: #{tpu_custom_call.1} parent=11 // pred_region
          %1163 = vsyncadd [#allocation14], 0
          %s1165 = sshll.u32 %s13, 4
          %s1166 = int_to_ptr.hbm [resolvable:$true] %s1165
          %s1167 = sshll.u32 [#allocation13], 4
          %s1168 = int_to_ptr.vmem [resolvable:$true] %s1167
          %1170 = dma.hbm_to_vmem [thread:$0]  %s1166, 16, %s1168, [#allocation14]
        $region40: #{tpu_custom_call.1} parent=11 // pred_fallthru
          _
        // Predicated region
        $region41: #{tpu_custom_call.1} parent=11 // pred_check
          %p1171 = pneg %p303
        $region42: #{tpu_custom_call.1} parent=11 // pred_check_branch
          %1173 = sbr.rel (%p1171) target = $region44
        $region43: #{tpu_custom_call.1} parent=11 // pred_region
          _
        $region44: #{tpu_custom_call.1} parent=11 // pred_fallthru
          _
        // Predicated region
        $region45: #{tpu_custom_call.1} parent=11 // pred_check
          %p1174 = pneg %p324
        $region46: #{tpu_custom_call.1} parent=11 // pred_check_branch
          %1176 = sbr.rel (%p1174) target = $region48
        $region47: #{tpu_custom_call.1} parent=11 // pred_region
          %1178 = vsyncadd [#allocation14], 0
          %s1180 = sshll.u32 %s17, 4
          %s1181 = int_to_ptr.hbm [resolvable:$true] %s1180
          %s1182 = sshll.u32 [#allocation15], 4
          %s1183 = int_to_ptr.vmem [resolvable:$true] %s1182
          %1185 = dma.hbm_to_vmem [thread:$0]  %s1181, 16, %s1183, [#allocation14]
        $region48: #{tpu_custom_call.1} parent=11 // pred_fallthru
          _
        // Predicated region
        $region49: #{tpu_custom_call.1} parent=11 // pred_check
          %p1186 = pneg %p345
        $region50: #{tpu_custom_call.1} parent=11 // pred_check_branch
          %1188 = sbr.rel (%p1186) target = $region52
        $region51: #{tpu_custom_call.1} parent=11 // pred_region
          _
        $region52: #{tpu_custom_call.1} parent=11 // pred_fallthru
          _
        // Predicated region
        $region53: #{tpu_custom_call.1} parent=11 // pred_check
          %p1189 = pneg %p366
        $region54: #{tpu_custom_call.1} parent=11 // pred_check_branch
          %1191 = sbr.rel (%p1189) target = $region56
        $region55: #{tpu_custom_call.1} parent=11 // pred_region
          _
        $region56: #{tpu_custom_call.1} parent=11 // pred_fallthru
          _
      $region12: #{tpu_custom_call.1} parent=5 // pred_fallthru
        _
      %p1192 = scmp.lt.s32.totalorder %s108, 2
      // Predicated region
      $region57: #{tpu_custom_call.1} parent=5 // pred_check
        %p1193 = pneg %p1192
      $region58: #{tpu_custom_call.1} parent=5 // pred_check_branch
        %1195 = sbr.rel (%p1193) target = $region60
      $region59: #{tpu_custom_call.1} parent=5 // pred_region
        // Predicated region
        $region61: #{tpu_custom_call.1} parent=59 // pred_check
          %p1196 = pneg %p386
        $region62: #{tpu_custom_call.1} parent=59 // pred_check_branch
          %1198 = sbr.rel (%p1196) target = $region64
        $region63: #{tpu_custom_call.1} parent=59 // pred_region
          %p1199 = scmp.lt.s32.totalorder %s116, 1
          %s1200 = scalar_select %p1199, %s116, 1
          %s1201 = smul.addr %s1200, 4
          %s1202 = smul.addr %s1201, 4
          %s1203 = scalar_lea.vmem %s23, %s1202
        $region64: #{tpu_custom_call.1} parent=59 // pred_fallthru
          _
        // Predicated region
        $region65: #{tpu_custom_call.1} parent=59 // pred_check
          %p1204 = pneg %p412
        $region66: #{tpu_custom_call.1} parent=59 // pred_check_branch
          %1206 = sbr.rel (%p1204) target = $region68
        $region67: #{tpu_custom_call.1} parent=59 // pred_region
          %p1207 = scmp.lt.s32.totalorder %s116, 1
          %s1208 = scalar_select %p1207, %s116, 1
          %s1209 = smul.addr %s1208, 4
          %s1210 = smul.addr %s1209, 4
          %s1211 = scalar_lea.vmem %s25, %s1210
        $region68: #{tpu_custom_call.1} parent=59 // pred_fallthru
          _
        // Predicated region
        $region69: #{tpu_custom_call.1} parent=59 // pred_check
          %p1212 = pneg %p438
        $region70: #{tpu_custom_call.1} parent=59 // pred_check_branch
          %1214 = sbr.rel (%p1212) target = $region72
        $region71: #{tpu_custom_call.1} parent=59 // pred_region
          %p1215 = scmp.lt.s32.totalorder %s116, 1
          %s1216 = scalar_select %p1215, %s116, 1
          %s1217 = smul.addr %s1216, 4
          %s1218 = smul.addr %s1217, 4
          %s1219 = scalar_lea.vmem %s27, %s1218
        $region72: #{tpu_custom_call.1} parent=59 // pred_fallthru
          _
        // Predicated region
        $region73: #{tpu_custom_call.1} parent=59 // pred_check
          %p1220 = pneg %p464
        $region74: #{tpu_custom_call.1} parent=59 // pred_check_branch
          %1222 = sbr.rel (%p1220) target = $region76
        $region75: #{tpu_custom_call.1} parent=59 // pred_region
          %p1223 = scmp.lt.s32.totalorder %s116, 1
          %s1224 = scalar_select %p1223, %s116, 1
          %s1225 = smul.addr %s1224, 4
          %s1226 = smul.addr %s1225, 4
          %s1227 = scalar_lea.vmem %s29, %s1226
        $region76: #{tpu_custom_call.1} parent=59 // pred_fallthru
          _
        // Predicated region
        $region77: #{tpu_custom_call.1} parent=59 // pred_check
          %p1228 = pneg %p490
        $region78: #{tpu_custom_call.1} parent=59 // pred_check_branch
          %1230 = sbr.rel (%p1228) target = $region80
        $region79: #{tpu_custom_call.1} parent=59 // pred_region
          %s1231 = sand.u32 %s108, 1
          %s1232 = scalar_lea.sflag [#allocation17], %s1231
          %s1233 = sand.u32 %s480, 1
          %s1234 = scalar_lea.vmem [#allocation16], %s1233
          %1236 = vsyncadd %s1232, 0
          %s1237 = scalar_lea.hbm %s31, %s116
          %s1239 = sshll.u32 %s1237, 4
          %s1240 = int_to_ptr.hbm [resolvable:$true] %s1239
          %s1241 = sshll.u32 %s1234, 4
          %s1242 = int_to_ptr.vmem [resolvable:$true] %s1241
          %1244 = dma.hbm_to_vmem [thread:$0]  %s1240, 16, %s1242, %s1232
        $region80: #{tpu_custom_call.1} parent=59 // pred_fallthru
          _
        // Predicated region
        $region81: #{tpu_custom_call.1} parent=59 // pred_check
          %p1245 = pneg %p516
        $region82: #{tpu_custom_call.1} parent=59 // pred_check_branch
          %1247 = sbr.rel (%p1245) target = $region84
        $region83: #{tpu_custom_call.1} parent=59 // pred_region
          %s1248 = sand.u32 %s108, 1
          %s1249 = scalar_lea.sflag [#allocation17], %s1248
          %s1250 = sand.u32 %s506, 1
          %s1251 = scalar_lea.vmem [#allocation18], %s1250
          %1253 = vsyncadd %s1249, 0
          %s1254 = scalar_lea.hbm %s33, %s116
          %s1256 = sshll.u32 %s1254, 4
          %s1257 = int_to_ptr.hbm [resolvable:$true] %s1256
          %s1258 = sshll.u32 %s1251, 4
          %s1259 = int_to_ptr.vmem [resolvable:$true] %s1258
          %1261 = dma.hbm_to_vmem [thread:$0]  %s1257, 16, %s1259, %s1249
        $region84: #{tpu_custom_call.1} parent=59 // pred_fallthru
          _
        // Predicated region
        $region85: #{tpu_custom_call.1} parent=59 // pred_check
          %p1262 = pneg %p542
        $region86: #{tpu_custom_call.1} parent=59 // pred_check_branch
          %1264 = sbr.rel (%p1262) target = $region88
        $region87: #{tpu_custom_call.1} parent=59 // pred_region
          %s1265 = sand.u32 %s108, 1
          %s1266 = scalar_lea.sflag [#allocation20], %s1265
          %s1267 = sand.u32 %s532, 1
          %s1268 = scalar_lea.vmem [#allocation19], %s1267
          %1270 = vsyncadd %s1266, 0
          %s1271 = scalar_lea.hbm %s35, %s116
          %s1273 = sshll.u32 %s1271, 4
          %s1274 = int_to_ptr.hbm [resolvable:$true] %s1273
          %s1275 = sshll.u32 %s1268, 4
          %s1276 = int_to_ptr.vmem [resolvable:$true] %s1275
          %1278 = dma.hbm_to_vmem [thread:$0]  %s1274, 16, %s1276, %s1266
        $region88: #{tpu_custom_call.1} parent=59 // pred_fallthru
          _
        // Predicated region
        $region89: #{tpu_custom_call.1} parent=59 // pred_check
          %p1279 = pneg %p568
        $region90: #{tpu_custom_call.1} parent=59 // pred_check_branch
          %1281 = sbr.rel (%p1279) target = $region92
        $region91: #{tpu_custom_call.1} parent=59 // pred_region
          %s1282 = sand.u32 %s108, 1
          %s1283 = scalar_lea.sflag [#allocation20], %s1282
          %s1284 = sand.u32 %s558, 1
          %s1285 = scalar_lea.vmem [#allocation21], %s1284
          %1287 = vsyncadd %s1283, 0
          %s1288 = scalar_lea.hbm %s37, %s116
          %s1290 = sshll.u32 %s1288, 4
          %s1291 = int_to_ptr.hbm [resolvable:$true] %s1290
          %s1292 = sshll.u32 %s1285, 4
          %s1293 = int_to_ptr.vmem [resolvable:$true] %s1292
          %1295 = dma.hbm_to_vmem [thread:$0]  %s1291, 16, %s1293, %s1283
        $region92: #{tpu_custom_call.1} parent=59 // pred_fallthru
          _
        // Predicated region
        $region93: #{tpu_custom_call.1} parent=59 // pred_check
          %p1296 = pneg %p594
        $region94: #{tpu_custom_call.1} parent=59 // pred_check_branch
          %1298 = sbr.rel (%p1296) target = $region96
        $region95: #{tpu_custom_call.1} parent=59 // pred_region
          %p1299 = scmp.lt.s32.totalorder %s116, 1
          %s1300 = scalar_select %p1299, %s116, 1
          %s1301 = smul.addr %s1300, 4
          %s1302 = smul.addr %s1301, 4
          %s1303 = scalar_lea.vmem %s39, %s1302
        $region96: #{tpu_custom_call.1} parent=59 // pred_fallthru
          _
        // Predicated region
        $region97: #{tpu_custom_call.1} parent=59 // pred_check
          %p1304 = pneg %p620
        $region98: #{tpu_custom_call.1} parent=59 // pred_check_branch
          %1306 = sbr.rel (%p1304) target = $region100
        $region99: #{tpu_custom_call.1} parent=59 // pred_region
          %p1307 = scmp.lt.s32.totalorder %s116, 1
          %s1308 = scalar_select %p1307, %s116, 1
          %s1309 = smul.addr %s1308, 4
          %s1310 = smul.addr %s1309, 4
          %s1311 = scalar_lea.vmem %s41, %s1310
        $region100: #{tpu_custom_call.1} parent=59 // pred_fallthru
          _
        // Predicated region
        $region101: #{tpu_custom_call.1} parent=59 // pred_check
          %p1312 = pneg %p646
        $region102: #{tpu_custom_call.1} parent=59 // pred_check_branch
          %1314 = sbr.rel (%p1312) target = $region104
        $region103: #{tpu_custom_call.1} parent=59 // pred_region
          %s1315 = sand.u32 %s108, 1
          %s1316 = scalar_lea.sflag [#allocation23], %s1315
          %s1317 = sand.u32 %s636, 1
          %s1318 = smul.addr %s1317, 16
          %s1319 = scalar_lea.vmem [#allocation22], %s1318
          %1321 = vsyncadd %s1316, 0
          %s1322 = smul.addr %s116, 4
          %s1323 = smul.addr %s1322, 4
          %s1324 = scalar_lea.hbm %s43, %s1323
          %s1325 = sshll.u32 %s1324, 4
          %s1326 = int_to_ptr.hbm [resolvable:$true] %s1325
          %s1327 = sshll.u32 %s1319, 4
          %s1328 = int_to_ptr.vmem [resolvable:$true] %s1327
          %1333 = dma.hbm_to_vmem [thread:$0]  %s1326, 256, %s1328, %s1316, 64, 64, 4
        $region104: #{tpu_custom_call.1} parent=59 // pred_fallthru
          _
        // Predicated region
        $region105: #{tpu_custom_call.1} parent=59 // pred_check
          %p1334 = pneg %p672
        $region106: #{tpu_custom_call.1} parent=59 // pred_check_branch
          %1336 = sbr.rel (%p1334) target = $region108
        $region107: #{tpu_custom_call.1} parent=59 // pred_region
          %s1337 = sand.u32 %s108, 1
          %s1338 = scalar_lea.sflag [#allocation23], %s1337
          %s1339 = sand.u32 %s662, 1
          %s1340 = smul.addr %s1339, 16
          %s1341 = scalar_lea.vmem [#allocation24], %s1340
          %1343 = vsyncadd %s1338, 0
          %s1344 = smul.addr %s116, 4
          %s1345 = smul.addr %s1344, 4
          %s1346 = scalar_lea.hbm %s45, %s1345
          %s1347 = sshll.u32 %s1346, 4
          %s1348 = int_to_ptr.hbm [resolvable:$true] %s1347
          %s1349 = sshll.u32 %s1341, 4
          %s1350 = int_to_ptr.vmem [resolvable:$true] %s1349
          %1355 = dma.hbm_to_vmem [thread:$0]  %s1348, 256, %s1350, %s1338, 64, 64, 4
        $region108: #{tpu_custom_call.1} parent=59 // pred_fallthru
          _
        // Predicated region
        $region109: #{tpu_custom_call.1} parent=59 // pred_check
          %p1356 = pneg %p698
        $region110: #{tpu_custom_call.1} parent=59 // pred_check_branch
          %1358 = sbr.rel (%p1356) target = $region112
        $region111: #{tpu_custom_call.1} parent=59 // pred_region
          %s1359 = sand.u32 %s108, 1
          %s1360 = scalar_lea.sflag [#allocation26], %s1359
          %s1361 = sand.u32 %s688, 1
          %s1362 = scalar_lea.vmem [#allocation25], %s1361
          %1364 = vsyncadd %s1360, 0
          %s1365 = scalar_lea.hbm %s47, %s116
          %s1367 = sshll.u32 %s1365, 4
          %s1368 = int_to_ptr.hbm [resolvable:$true] %s1367
          %s1369 = sshll.u32 %s1362, 4
          %s1370 = int_to_ptr.vmem [resolvable:$true] %s1369
          %1372 = dma.hbm_to_vmem [thread:$0]  %s1368, 16, %s1370, %s1360
        $region112: #{tpu_custom_call.1} parent=59 // pred_fallthru
          _
        // Predicated region
        $region113: #{tpu_custom_call.1} parent=59 // pred_check
          %p1373 = pneg %p724
        $region114: #{tpu_custom_call.1} parent=59 // pred_check_branch
          %1375 = sbr.rel (%p1373) target = $region116
        $region115: #{tpu_custom_call.1} parent=59 // pred_region
          %s1376 = sand.u32 %s108, 1
          %s1377 = scalar_lea.sflag [#allocation26], %s1376
          %s1378 = sand.u32 %s714, 1
          %s1379 = scalar_lea.vmem [#allocation27], %s1378
          %1381 = vsyncadd %s1377, 0
          %s1382 = scalar_lea.hbm %s49, %s116
          %s1384 = sshll.u32 %s1382, 4
          %s1385 = int_to_ptr.hbm [resolvable:$true] %s1384
          %s1386 = sshll.u32 %s1379, 4
          %s1387 = int_to_ptr.vmem [resolvable:$true] %s1386
          %1389 = dma.hbm_to_vmem [thread:$0]  %s1385, 16, %s1387, %s1377
        $region116: #{tpu_custom_call.1} parent=59 // pred_fallthru
          _
        // Predicated region
        $region117: #{tpu_custom_call.1} parent=59 // pred_check
          %p1390 = pneg %p750
        $region118: #{tpu_custom_call.1} parent=59 // pred_check_branch
          %1392 = sbr.rel (%p1390) target = $region120
        $region119: #{tpu_custom_call.1} parent=59 // pred_region
          %s1393 = sand.u32 %s108, 1
          %s1394 = scalar_lea.sflag [#allocation29], %s1393
          %s1395 = sand.u32 %s740, 1
          %s1396 = scalar_lea.vmem [#allocation28], %s1395
          %1398 = vsyncadd %s1394, 0
          %s1399 = scalar_lea.hbm %s51, %s116
          %s1401 = sshll.u32 %s1399, 4
          %s1402 = int_to_ptr.hbm [resolvable:$true] %s1401
          %s1403 = sshll.u32 %s1396, 4
          %s1404 = int_to_ptr.vmem [resolvable:$true] %s1403
          %1406 = dma.hbm_to_vmem [thread:$0]  %s1402, 16, %s1404, %s1394
        $region120: #{tpu_custom_call.1} parent=59 // pred_fallthru
          _
        // Predicated region
        $region121: #{tpu_custom_call.1} parent=59 // pred_check
          %p1407 = pneg %p776
        $region122: #{tpu_custom_call.1} parent=59 // pred_check_branch
          %1409 = sbr.rel (%p1407) target = $region124
        $region123: #{tpu_custom_call.1} parent=59 // pred_region
          %p1410 = scmp.lt.s32.totalorder %s116, 1
          %s1411 = scalar_select %p1410, %s116, 1
          %s1412 = scalar_lea.vmem %s53, %s1411
        $region124: #{tpu_custom_call.1} parent=59 // pred_fallthru
          _
        // Predicated region
        $region125: #{tpu_custom_call.1} parent=59 // pred_check
          %p1413 = pneg %p802
        $region126: #{tpu_custom_call.1} parent=59 // pred_check_branch
          %1415 = sbr.rel (%p1413) target = $region128
        $region127: #{tpu_custom_call.1} parent=59 // pred_region
          %p1416 = scmp.lt.s32.totalorder %s116, 1
          %s1417 = scalar_select %p1416, %s116, 1
          %s1418 = smul.addr %s1417, 4
          %s1419 = smul.addr %s1418, 4
          %s1420 = scalar_lea.vmem %s55, %s1419
        $region128: #{tpu_custom_call.1} parent=59 // pred_fallthru
          _
        // Predicated region
        $region129: #{tpu_custom_call.1} parent=59 // pred_check
          %p1421 = pneg %p828
        $region130: #{tpu_custom_call.1} parent=59 // pred_check_branch
          %1423 = sbr.rel (%p1421) target = $region132
        $region131: #{tpu_custom_call.1} parent=59 // pred_region
          %s1424 = sand.u32 %s108, 1
          %s1425 = scalar_lea.sflag [#allocation29], %s1424
          %s1426 = sand.u32 %s818, 1
          %s1427 = scalar_lea.vmem [#allocation30], %s1426
          %1429 = vsyncadd %s1425, 0
          %s1430 = scalar_lea.hbm %s57, %s116
          %s1432 = sshll.u32 %s1430, 4
          %s1433 = int_to_ptr.hbm [resolvable:$true] %s1432
          %s1434 = sshll.u32 %s1427, 4
          %s1435 = int_to_ptr.vmem [resolvable:$true] %s1434
          %1437 = dma.hbm_to_vmem [thread:$0]  %s1433, 16, %s1435, %s1425
        $region132: #{tpu_custom_call.1} parent=59 // pred_fallthru
          _
        // Predicated region
        $region133: #{tpu_custom_call.1} parent=59 // pred_check
          %p1438 = pneg %p854
        $region134: #{tpu_custom_call.1} parent=59 // pred_check_branch
          %1440 = sbr.rel (%p1438) target = $region136
        $region135: #{tpu_custom_call.1} parent=59 // pred_region
          %p1441 = scmp.lt.s32.totalorder %s116, 1
          %s1442 = scalar_select %p1441, %s116, 1
          %s1443 = smul.addr %s1442, 8
          %s1444 = smul.addr %s1443, 4
          %s1445 = scalar_lea.vmem %s59, %s1444
        $region136: #{tpu_custom_call.1} parent=59 // pred_fallthru
          _
        // Predicated region
        $region137: #{tpu_custom_call.1} parent=59 // pred_check
          %p1446 = pneg %p880
        $region138: #{tpu_custom_call.1} parent=59 // pred_check_branch
          %1448 = sbr.rel (%p1446) target = $region140
        $region139: #{tpu_custom_call.1} parent=59 // pred_region
          %p1449 = scmp.lt.s32.totalorder %s116, 1
          %s1450 = scalar_select %p1449, %s116, 1
          %s1451 = scalar_lea.vmem %s61, %s1450
        $region140: #{tpu_custom_call.1} parent=59 // pred_fallthru
          _
        // Predicated region
        $region141: #{tpu_custom_call.1} parent=59 // pred_check
          %p1452 = pneg %p906
        $region142: #{tpu_custom_call.1} parent=59 // pred_check_branch
          %1454 = sbr.rel (%p1452) target = $region144
        $region143: #{tpu_custom_call.1} parent=59 // pred_region
          %s1455 = sand.u32 %s108, 1
          %s1456 = scalar_lea.sflag [#allocation32], %s1455
          %s1457 = sand.u32 %s896, 1
          %s1458 = scalar_lea.vmem [#allocation31], %s1457
          %1460 = vsyncadd %s1456, 0
          %s1461 = scalar_lea.hbm %s63, %s116
          %s1463 = sshll.u32 %s1461, 4
          %s1464 = int_to_ptr.hbm [resolvable:$true] %s1463
          %s1465 = sshll.u32 %s1458, 4
          %s1466 = int_to_ptr.vmem [resolvable:$true] %s1465
          %1468 = dma.hbm_to_vmem [thread:$0]  %s1464, 16, %s1466, %s1456
        $region144: #{tpu_custom_call.1} parent=59 // pred_fallthru
          _
        // Predicated region
        $region145: #{tpu_custom_call.1} parent=59 // pred_check
          %p1469 = pneg %p932
        $region146: #{tpu_custom_call.1} parent=59 // pred_check_branch
          %1471 = sbr.rel (%p1469) target = $region148
        $region147: #{tpu_custom_call.1} parent=59 // pred_region
          %p1472 = scmp.lt.s32.totalorder %s116, 1
          %s1473 = scalar_select %p1472, %s116, 1
          %s1474 = scalar_lea.vmem %s65, %s1473
        $region148: #{tpu_custom_call.1} parent=59 // pred_fallthru
          _
        // Predicated region
        $region149: #{tpu_custom_call.1} parent=59 // pred_check
          %p1475 = pneg %p958
        $region150: #{tpu_custom_call.1} parent=59 // pred_check_branch
          %1477 = sbr.rel (%p1475) target = $region152
        $region151: #{tpu_custom_call.1} parent=59 // pred_region
          %p1478 = scmp.lt.s32.totalorder %s116, 1
          %s1479 = scalar_select %p1478, %s116, 1
          %s1480 = scalar_lea.vmem %s67, %s1479
        $region152: #{tpu_custom_call.1} parent=59 // pred_fallthru
          _
        // Predicated region
        $region153: #{tpu_custom_call.1} parent=59 // pred_check
          %p1481 = pneg %p984
        $region154: #{tpu_custom_call.1} parent=59 // pred_check_branch
          %1483 = sbr.rel (%p1481) target = $region156
        $region155: #{tpu_custom_call.1} parent=59 // pred_region
          %s1484 = sand.u32 %s108, 1
          %s1485 = scalar_lea.sflag [#allocation32], %s1484
          %s1486 = sand.u32 %s974, 1
          %s1487 = scalar_lea.vmem [#allocation33], %s1486
          %1489 = vsyncadd %s1485, 0
          %s1490 = scalar_lea.hbm %s69, %s116
          %s1492 = sshll.u32 %s1490, 4
          %s1493 = int_to_ptr.hbm [resolvable:$true] %s1492
          %s1494 = sshll.u32 %s1487, 4
          %s1495 = int_to_ptr.vmem [resolvable:$true] %s1494
          %1497 = dma.hbm_to_vmem [thread:$0]  %s1493, 16, %s1495, %s1485
        $region156: #{tpu_custom_call.1} parent=59 // pred_fallthru
          _
        // Predicated region
        $region157: #{tpu_custom_call.1} parent=59 // pred_check
          %p1498 = pneg %p1010
        $region158: #{tpu_custom_call.1} parent=59 // pred_check_branch
          %1500 = sbr.rel (%p1498) target = $region160
        $region159: #{tpu_custom_call.1} parent=59 // pred_region
          %p1501 = scmp.lt.s32.totalorder %s116, 1
          %s1502 = scalar_select %p1501, %s116, 1
          %s1503 = scalar_lea.vmem %s71, %s1502
        $region160: #{tpu_custom_call.1} parent=59 // pred_fallthru
          _
        // Predicated region
        $region161: #{tpu_custom_call.1} parent=59 // pred_check
          %p1504 = pneg %p1036
        $region162: #{tpu_custom_call.1} parent=59 // pred_check_branch
          %1506 = sbr.rel (%p1504) target = $region164
        $region163: #{tpu_custom_call.1} parent=59 // pred_region
          %s1507 = sand.u32 %s1026, 1
          %s1508 = scalar_lea.sflag [#allocation35], %s1507
          %s1509 = sand.u32 %s1026, 1
          %s1510 = scalar_lea.vmem [#allocation34], %s1509
          %1512 = vsyncadd %s1508, 0
          %s1513 = scalar_lea.hbm %s73, %s116
          %s1515 = sshll.u32 %s1513, 4
          %s1516 = int_to_ptr.hbm [resolvable:$true] %s1515
          %s1517 = sshll.u32 %s1510, 4
          %s1518 = int_to_ptr.vmem [resolvable:$true] %s1517
          %1520 = dma.hbm_to_vmem [thread:$0]  %s1516, 16, %s1518, %s1508
        $region164: #{tpu_custom_call.1} parent=59 // pred_fallthru
          _
      $region60: #{tpu_custom_call.1} parent=5 // pred_fallthru
        _
      %p1521 = scmp.le.s32.totalorder 1, %s108
      %p1522 = scmp.lt.s32.totalorder %s108, 3
      %p1523 = pnand %p1521, %p1522
      %p1524 = pneg %p1523
      // Predicated region
      $region165: #{tpu_custom_call.1} parent=5 // pred_check
        _
      $region166: #{tpu_custom_call.1} parent=5 // pred_check_branch
        %1526 = sbr.rel (%p1523) target = $region168
      $region167: #{tpu_custom_call.1} parent=5 // pred_region
        %s1527 = ssub.s32 %s108, 1
        // Predicated region
        $region169: #{tpu_custom_call.1} parent=167 // pred_check
          %p1528 = pneg %p146
        $region170: #{tpu_custom_call.1} parent=167 // pred_check_branch
          %1530 = sbr.rel (%p1528) target = $region172
        $region171: #{tpu_custom_call.1} parent=167 // pred_region
          %1532 = dma.done [#allocation6], 128
        $region172: #{tpu_custom_call.1} parent=167 // pred_fallthru
          _
        // Predicated region
        $region173: #{tpu_custom_call.1} parent=167 // pred_check
          %p1533 = pneg %p172
        $region174: #{tpu_custom_call.1} parent=167 // pred_check_branch
          %1535 = sbr.rel (%p1533) target = $region176
        $region175: #{tpu_custom_call.1} parent=167 // pred_region
          %1537 = dma.done [#allocation8], 256
        $region176: #{tpu_custom_call.1} parent=167 // pred_fallthru
          _
        // Predicated region
        $region177: #{tpu_custom_call.1} parent=167 // pred_check
          %p1538 = pneg %p198
        $region178: #{tpu_custom_call.1} parent=167 // pred_check_branch
          %1540 = sbr.rel (%p1538) target = $region180
        $region179: #{tpu_custom_call.1} parent=167 // pred_region
          %1542 = dma.done [#allocation8], 32
        $region180: #{tpu_custom_call.1} parent=167 // pred_fallthru
          _
        // Predicated region
        $region181: #{tpu_custom_call.1} parent=167 // pred_check
          %p1543 = pneg %p219
        $region182: #{tpu_custom_call.1} parent=167 // pred_check_branch
          %1545 = sbr.rel (%p1543) target = $region184
        $region183: #{tpu_custom_call.1} parent=167 // pred_region
          %1547 = dma.done [#allocation11], 16
        $region184: #{tpu_custom_call.1} parent=167 // pred_fallthru
          _
        // Predicated region
        $region185: #{tpu_custom_call.1} parent=167 // pred_check
          %p1548 = pneg %p240
        $region186: #{tpu_custom_call.1} parent=167 // pred_check_branch
          %1550 = sbr.rel (%p1548) target = $region188
        $region187: #{tpu_custom_call.1} parent=167 // pred_region
          %1552 = dma.done [#allocation11], 16
        $region188: #{tpu_custom_call.1} parent=167 // pred_fallthru
          _
        // Predicated region
        $region189: #{tpu_custom_call.1} parent=167 // pred_check
          %p1553 = pneg %p282
        $region190: #{tpu_custom_call.1} parent=167 // pred_check_branch
          %1555 = sbr.rel (%p1553) target = $region192
        $region191: #{tpu_custom_call.1} parent=167 // pred_region
          %1557 = dma.done [#allocation14], 16
        $region192: #{tpu_custom_call.1} parent=167 // pred_fallthru
          _
        // Predicated region
        $region193: #{tpu_custom_call.1} parent=167 // pred_check
          %p1558 = pneg %p324
        $region194: #{tpu_custom_call.1} parent=167 // pred_check_branch
          %1560 = sbr.rel (%p1558) target = $region196
        $region195: #{tpu_custom_call.1} parent=167 // pred_region
          %1562 = dma.done [#allocation14], 16
        $region196: #{tpu_custom_call.1} parent=167 // pred_fallthru
          _
        %s1563 = sand.u32 %s113, 1
        %s1564 = scalar_lea.sflag [#allocation17], %s1563
        %s1565 = sand.u32 %s483, 1
        %s1566 = scalar_lea.vmem [#allocation16], %s1565
        // Predicated region
        $region197: #{tpu_custom_call.1} parent=167 // pred_check
          %p1567 = pneg %p496
        $region198: #{tpu_custom_call.1} parent=167 // pred_check_branch
          %1569 = sbr.rel (%p1567) target = $region200
        $region199: #{tpu_custom_call.1} parent=167 // pred_region
          %1571 = dma.done %s1564, 16
        $region200: #{tpu_custom_call.1} parent=167 // pred_fallthru
          _
        %s1572 = sand.u32 %s113, 1
        %s1573 = scalar_lea.sflag [#allocation17], %s1572
        %s1574 = sand.u32 %s509, 1
        %s1575 = scalar_lea.vmem [#allocation18], %s1574
        // Predicated region
        $region201: #{tpu_custom_call.1} parent=167 // pred_check
          %p1576 = pneg %p522
        $region202: #{tpu_custom_call.1} parent=167 // pred_check_branch
          %1578 = sbr.rel (%p1576) target = $region204
        $region203: #{tpu_custom_call.1} parent=167 // pred_region
          %1580 = dma.done %s1573, 16
        $region204: #{tpu_custom_call.1} parent=167 // pred_fallthru
          _
        %s1581 = sand.u32 %s113, 1
        %s1582 = scalar_lea.sflag [#allocation20], %s1581
        %s1583 = sand.u32 %s535, 1
        %s1584 = scalar_lea.vmem [#allocation19], %s1583
        // Predicated region
        $region205: #{tpu_custom_call.1} parent=167 // pred_check
          %p1585 = pneg %p548
        $region206: #{tpu_custom_call.1} parent=167 // pred_check_branch
          %1587 = sbr.rel (%p1585) target = $region208
        $region207: #{tpu_custom_call.1} parent=167 // pred_region
          %1589 = dma.done %s1582, 16
        $region208: #{tpu_custom_call.1} parent=167 // pred_fallthru
          _
        %s1590 = sand.u32 %s113, 1
        %s1591 = scalar_lea.sflag [#allocation20], %s1590
        %s1592 = sand.u32 %s561, 1
        %s1593 = scalar_lea.vmem [#allocation21], %s1592
        // Predicated region
        $region209: #{tpu_custom_call.1} parent=167 // pred_check
          %p1594 = pneg %p574
        $region210: #{tpu_custom_call.1} parent=167 // pred_check_branch
          %1596 = sbr.rel (%p1594) target = $region212
        $region211: #{tpu_custom_call.1} parent=167 // pred_region
          %1598 = dma.done %s1591, 16
        $region212: #{tpu_custom_call.1} parent=167 // pred_fallthru
          _
        %s1599 = sand.u32 %s113, 1
        %s1600 = scalar_lea.sflag [#allocation23], %s1599
        %s1601 = sand.u32 %s639, 1
        %s1602 = smul.addr %s1601, 16
        %s1603 = scalar_lea.vmem [#allocation22], %s1602
        // Predicated region
        $region213: #{tpu_custom_call.1} parent=167 // pred_check
          %p1604 = pneg %p652
        $region214: #{tpu_custom_call.1} parent=167 // pred_check_branch
          %1606 = sbr.rel (%p1604) target = $region216
        $region215: #{tpu_custom_call.1} parent=167 // pred_region
          %1608 = dma.done %s1600, 256
        $region216: #{tpu_custom_call.1} parent=167 // pred_fallthru
          _
        %s1609 = sand.u32 %s113, 1
        %s1610 = scalar_lea.sflag [#allocation23], %s1609
        %s1611 = sand.u32 %s665, 1
        %s1612 = smul.addr %s1611, 16
        %s1613 = scalar_lea.vmem [#allocation24], %s1612
        // Predicated region
        $region217: #{tpu_custom_call.1} parent=167 // pred_check
          %p1614 = pneg %p678
        $region218: #{tpu_custom_call.1} parent=167 // pred_check_branch
          %1616 = sbr.rel (%p1614) target = $region220
        $region219: #{tpu_custom_call.1} parent=167 // pred_region
          %1618 = dma.done %s1610, 256
        $region220: #{tpu_custom_call.1} parent=167 // pred_fallthru
          _
        %s1619 = sand.u32 %s113, 1
        %s1620 = scalar_lea.sflag [#allocation26], %s1619
        %s1621 = sand.u32 %s691, 1
        %s1622 = scalar_lea.vmem [#allocation25], %s1621
        // Predicated region
        $region221: #{tpu_custom_call.1} parent=167 // pred_check
          %p1623 = pneg %p704
        $region222: #{tpu_custom_call.1} parent=167 // pred_check_branch
          %1625 = sbr.rel (%p1623) target = $region224
        $region223: #{tpu_custom_call.1} parent=167 // pred_region
          %1627 = dma.done %s1620, 16
        $region224: #{tpu_custom_call.1} parent=167 // pred_fallthru
          _
        %s1628 = sand.u32 %s113, 1
        %s1629 = scalar_lea.sflag [#allocation26], %s1628
        %s1630 = sand.u32 %s717, 1
        %s1631 = scalar_lea.vmem [#allocation27], %s1630
        // Predicated region
        $region225: #{tpu_custom_call.1} parent=167 // pred_check
          %p1632 = pneg %p730
        $region226: #{tpu_custom_call.1} parent=167 // pred_check_branch
          %1634 = sbr.rel (%p1632) target = $region228
        $region227: #{tpu_custom_call.1} parent=167 // pred_region
          %1636 = dma.done %s1629, 16
        $region228: #{tpu_custom_call.1} parent=167 // pred_fallthru
          _
        %s1637 = sand.u32 %s113, 1
        %s1638 = scalar_lea.sflag [#allocation29], %s1637
        %s1639 = sand.u32 %s743, 1
        %s1640 = scalar_lea.vmem [#allocation28], %s1639
        // Predicated region
        $region229: #{tpu_custom_call.1} parent=167 // pred_check
          %p1641 = pneg %p756
        $region230: #{tpu_custom_call.1} parent=167 // pred_check_branch
          %1643 = sbr.rel (%p1641) target = $region232
        $region231: #{tpu_custom_call.1} parent=167 // pred_region
          %1645 = dma.done %s1638, 16
        $region232: #{tpu_custom_call.1} parent=167 // pred_fallthru
          _
        %s1646 = sand.u32 %s113, 1
        %s1647 = scalar_lea.sflag [#allocation29], %s1646
        %s1648 = sand.u32 %s821, 1
        %s1649 = scalar_lea.vmem [#allocation30], %s1648
        // Predicated region
        $region233: #{tpu_custom_call.1} parent=167 // pred_check
          %p1650 = pneg %p834
        $region234: #{tpu_custom_call.1} parent=167 // pred_check_branch
          %1652 = sbr.rel (%p1650) target = $region236
        $region235: #{tpu_custom_call.1} parent=167 // pred_region
          %1654 = dma.done %s1647, 16
        $region236: #{tpu_custom_call.1} parent=167 // pred_fallthru
          _
        %s1655 = sand.u32 %s113, 1
        %s1656 = scalar_lea.sflag [#allocation32], %s1655
        %s1657 = sand.u32 %s899, 1
        %s1658 = scalar_lea.vmem [#allocation31], %s1657
        // Predicated region
        $region237: #{tpu_custom_call.1} parent=167 // pred_check
          %p1659 = pneg %p912
        $region238: #{tpu_custom_call.1} parent=167 // pred_check_branch
          %1661 = sbr.rel (%p1659) target = $region240
        $region239: #{tpu_custom_call.1} parent=167 // pred_region
          %1663 = dma.done %s1656, 16
        $region240: #{tpu_custom_call.1} parent=167 // pred_fallthru
          _
        %s1664 = sand.u32 %s113, 1
        %s1665 = scalar_lea.sflag [#allocation32], %s1664
        %s1666 = sand.u32 %s977, 1
        %s1667 = scalar_lea.vmem [#allocation33], %s1666
        // Predicated region
        $region241: #{tpu_custom_call.1} parent=167 // pred_check
          %p1668 = pneg %p990
        $region242: #{tpu_custom_call.1} parent=167 // pred_check_branch
          %1670 = sbr.rel (%p1668) target = $region244
        $region243: #{tpu_custom_call.1} parent=167 // pred_region
          %1672 = dma.done %s1665, 16
        $region244: #{tpu_custom_call.1} parent=167 // pred_fallthru
          _
        %s1673 = sand.u32 %s1029, 1
        %s1674 = scalar_lea.sflag [#allocation35], %s1673
        %s1675 = sand.u32 %s1029, 1
        %s1676 = scalar_lea.vmem [#allocation34], %s1675
        // Predicated region
        $region245: #{tpu_custom_call.1} parent=167 // pred_check
          %p1677 = pneg %p1042
        $region246: #{tpu_custom_call.1} parent=167 // pred_check_branch
          %1679 = sbr.rel (%p1677) target = $region248
        $region247: #{tpu_custom_call.1} parent=167 // pred_region
          %1681 = dma.done %s1674, 16
        $region248: #{tpu_custom_call.1} parent=167 // pred_fallthru
          _
        %p1682 = pneg %p146
        %p1683 = pneg %p143
        %p1684 = pneg %p172
        %p1685 = pneg %p169
        %p1686 = pneg %p198
        %p1687 = pneg %p195
        %p1688 = pneg %p219
        %p1689 = pneg %p216
        %p1690 = pneg %p240
        %p1691 = pneg %p237
        %p1692 = pneg %p261
        %p1693 = pneg %p258
        %p1694 = pneg %p282
        %p1695 = pneg %p279
        %p1696 = pneg %p303
        %p1697 = pneg %p300
        %p1698 = pneg %p324
        %p1699 = pneg %p321
        %p1700 = pneg %p345
        %p1701 = pneg %p342
        %p1702 = pneg %p366
        %p1703 = pneg %p363
        %p1704 = scmp.lt.s32.totalorder %s118, 1
        %s1705 = scalar_select %p1704, %s118, 1
        %s1706 = smul.addr %s1705, 4
        %s1707 = smul.addr %s1706, 4
        %s1708 = scalar_lea.vmem %s23, %s1707
        %p1709 = pneg %p392
        %p1710 = pneg %p389
        %p1711 = scmp.lt.s32.totalorder %s118, 1
        %s1712 = scalar_select %p1711, %s118, 1
        %s1713 = smul.addr %s1712, 4
        %s1714 = smul.addr %s1713, 4
        %s1715 = scalar_lea.vmem %s25, %s1714
        %p1716 = pneg %p418
        %p1717 = pneg %p415
        %p1718 = scmp.lt.s32.totalorder %s118, 1
        %s1719 = scalar_select %p1718, %s118, 1
        %s1720 = smul.addr %s1719, 4
        %s1721 = smul.addr %s1720, 4
        %s1722 = scalar_lea.vmem %s27, %s1721
        %p1723 = pneg %p444
        %p1724 = pneg %p441
        %p1725 = scmp.lt.s32.totalorder %s118, 1
        %s1726 = scalar_select %p1725, %s118, 1
        %s1727 = smul.addr %s1726, 4
        %s1728 = smul.addr %s1727, 4
        %s1729 = scalar_lea.vmem %s29, %s1728
        %p1730 = pneg %p470
        %p1731 = pneg %p467
        %s1732 = sand.u32 %s113, 1
        %s1733 = scalar_lea.sflag [#allocation17], %s1732
        %s1734 = sand.u32 %s483, 1
        %s1735 = scalar_lea.vmem [#allocation16], %s1734
        %p1736 = pneg %p496
        %p1737 = pneg %p493
        %s1738 = sand.u32 %s113, 1
        %s1739 = scalar_lea.sflag [#allocation17], %s1738
        %s1740 = sand.u32 %s509, 1
        %s1741 = scalar_lea.vmem [#allocation18], %s1740
        %p1742 = pneg %p522
        %p1743 = pneg %p519
        %s1744 = sand.u32 %s113, 1
        %s1745 = scalar_lea.sflag [#allocation20], %s1744
        %s1746 = sand.u32 %s535, 1
        %s1747 = scalar_lea.vmem [#allocation19], %s1746
        %p1748 = pneg %p548
        %p1749 = pneg %p545
        %s1750 = sand.u32 %s113, 1
        %s1751 = scalar_lea.sflag [#allocation20], %s1750
        %s1752 = sand.u32 %s561, 1
        %s1753 = scalar_lea.vmem [#allocation21], %s1752
        %p1754 = pneg %p574
        %p1755 = pneg %p571
        %p1756 = scmp.lt.s32.totalorder %s118, 1
        %s1757 = scalar_select %p1756, %s118, 1
        %s1758 = smul.addr %s1757, 4
        %s1759 = smul.addr %s1758, 4
        %s1760 = scalar_lea.vmem %s39, %s1759
        %p1761 = pneg %p600
        %p1762 = pneg %p597
        %p1763 = scmp.lt.s32.totalorder %s118, 1
        %s1764 = scalar_select %p1763, %s118, 1
        %s1765 = smul.addr %s1764, 4
        %s1766 = smul.addr %s1765, 4
        %s1767 = scalar_lea.vmem %s41, %s1766
        %p1768 = pneg %p626
        %p1769 = pneg %p623
        %s1770 = sand.u32 %s113, 1
        %s1771 = scalar_lea.sflag [#allocation23], %s1770
        %s1772 = sand.u32 %s639, 1
        %s1773 = smul.addr %s1772, 16
        %s1774 = scalar_lea.vmem [#allocation22], %s1773
        %p1775 = pneg %p652
        %p1776 = pneg %p649
        %s1777 = sand.u32 %s113, 1
        %s1778 = scalar_lea.sflag [#allocation23], %s1777
        %s1779 = sand.u32 %s665, 1
        %s1780 = smul.addr %s1779, 16
        %s1781 = scalar_lea.vmem [#allocation24], %s1780
        %p1782 = pneg %p678
        %p1783 = pneg %p675
        %s1784 = sand.u32 %s113, 1
        %s1785 = scalar_lea.sflag [#allocation26], %s1784
        %s1786 = sand.u32 %s691, 1
        %s1787 = scalar_lea.vmem [#allocation25], %s1786
        %p1788 = pneg %p704
        %p1789 = pneg %p701
        %s1790 = sand.u32 %s113, 1
        %s1791 = scalar_lea.sflag [#allocation26], %s1790
        %s1792 = sand.u32 %s717, 1
        %s1793 = scalar_lea.vmem [#allocation27], %s1792
        %p1794 = pneg %p730
        %p1795 = pneg %p727
        %s1796 = sand.u32 %s113, 1
        %s1797 = scalar_lea.sflag [#allocation29], %s1796
        %s1798 = sand.u32 %s743, 1
        %s1799 = scalar_lea.vmem [#allocation28], %s1798
        %p1800 = pneg %p756
        %p1801 = pneg %p753
        %p1802 = scmp.lt.s32.totalorder %s118, 1
        %s1803 = scalar_select %p1802, %s118, 1
        %s1804 = scalar_lea.vmem %s53, %s1803
        %p1805 = pneg %p782
        %p1806 = pneg %p779
        %p1807 = scmp.lt.s32.totalorder %s118, 1
        %s1808 = scalar_select %p1807, %s118, 1
        %s1809 = smul.addr %s1808, 4
        %s1810 = smul.addr %s1809, 4
        %s1811 = scalar_lea.vmem %s55, %s1810
        %p1812 = pneg %p808
        %p1813 = pneg %p805
        %s1814 = sand.u32 %s113, 1
        %s1815 = scalar_lea.sflag [#allocation29], %s1814
        %s1816 = sand.u32 %s821, 1
        %s1817 = scalar_lea.vmem [#allocation30], %s1816
        %p1818 = pneg %p834
        %p1819 = pneg %p831
        %p1820 = scmp.lt.s32.totalorder %s118, 1
        %s1821 = scalar_select %p1820, %s118, 1
        %s1822 = smul.addr %s1821, 8
        %s1823 = smul.addr %s1822, 4
        %s1824 = scalar_lea.vmem %s59, %s1823
        %p1825 = pneg %p860
        %p1826 = pneg %p857
        %p1827 = scmp.lt.s32.totalorder %s118, 1
        %s1828 = scalar_select %p1827, %s118, 1
        %s1829 = scalar_lea.vmem %s61, %s1828
        %p1830 = pneg %p886
        %p1831 = pneg %p883
        %s1832 = sand.u32 %s113, 1
        %s1833 = scalar_lea.sflag [#allocation32], %s1832
        %s1834 = sand.u32 %s899, 1
        %s1835 = scalar_lea.vmem [#allocation31], %s1834
        %p1836 = pneg %p912
        %p1837 = pneg %p909
        %p1838 = scmp.lt.s32.totalorder %s118, 1
        %s1839 = scalar_select %p1838, %s118, 1
        %s1840 = scalar_lea.vmem %s65, %s1839
        %p1841 = pneg %p938
        %p1842 = pneg %p935
        %p1843 = scmp.lt.s32.totalorder %s118, 1
        %s1844 = scalar_select %p1843, %s118, 1
        %s1845 = scalar_lea.vmem %s67, %s1844
        %p1846 = pneg %p964
        %p1847 = pneg %p961
        %s1848 = sand.u32 %s113, 1
        %s1849 = scalar_lea.sflag [#allocation32], %s1848
        %s1850 = sand.u32 %s977, 1
        %s1851 = scalar_lea.vmem [#allocation33], %s1850
        %p1852 = pneg %p990
        %p1853 = pneg %p987
        %p1854 = scmp.lt.s32.totalorder %s118, 1
        %s1855 = scalar_select %p1854, %s118, 1
        %s1856 = scalar_lea.vmem %s71, %s1855
        %p1857 = pneg %p1016
        %p1858 = pneg %p1013
        %s1859 = sand.u32 %s1029, 1
        %s1860 = scalar_lea.sflag [#allocation35], %s1859
        %s1861 = sand.u32 %s1029, 1
        %s1862 = scalar_lea.vmem [#allocation34], %s1861
        %p1863 = pneg %p1042
        %p1864 = pneg %p1039
        %p1865 = pneg %p1068
        %p1866 = pneg %p1065
        %p1867 = scmp.lt.s32.totalorder %s117, 0
        %s1868 = scalar_select %p1867, %s117, 0
        %s1869 = smul.addr %s1868, 2
        %s1870 = scalar_lea.vmem %s75, %s1869
        %s1871 = smul.u32 2, %s117
        %s1872 = smul.u32 2, %s117
        %p1873 = scmp.lt.s32.totalorder %s118, 1
        %s1874 = scalar_select %p1873, %s118, 1
        %s1875 = smul.addr %s1874, 4
        %s1876 = smul.addr %s1875, 4
        %s1877 = scalar_lea.vmem %s23, %s1876
        %p1878 = scmp.lt.s32.totalorder %s118, 1
        %s1879 = scalar_select %p1878, %s118, 1
        %s1880 = smul.addr %s1879, 4
        %s1881 = smul.addr %s1880, 4
        %s1882 = scalar_lea.vmem %s25, %s1881
        %p1883 = scmp.lt.s32.totalorder %s118, 1
        %s1884 = scalar_select %p1883, %s118, 1
        %s1885 = smul.addr %s1884, 4
        %s1886 = smul.addr %s1885, 4
        %s1887 = scalar_lea.vmem %s27, %s1886
        %p1888 = scmp.lt.s32.totalorder %s118, 1
        %s1889 = scalar_select %p1888, %s118, 1
        %s1890 = smul.addr %s1889, 4
        %s1891 = smul.addr %s1890, 4
        %s1892 = scalar_lea.vmem %s29, %s1891
        %p1893 = scmp.lt.s32.totalorder %s118, 1
        %s1894 = scalar_select %p1893, %s118, 1
        %s1895 = smul.addr %s1894, 4
        %s1896 = smul.addr %s1895, 4
        %s1897 = scalar_lea.vmem %s39, %s1896
        %p1898 = scmp.lt.s32.totalorder %s118, 1
        %s1899 = scalar_select %p1898, %s118, 1
        %s1900 = smul.addr %s1899, 4
        %s1901 = smul.addr %s1900, 4
        %s1902 = scalar_lea.vmem %s41, %s1901
        %p1903 = scmp.lt.s32.totalorder %s118, 1
        %s1904 = scalar_select %p1903, %s118, 1
        %s1905 = scalar_lea.vmem %s53, %s1904
        %p1906 = scmp.lt.s32.totalorder %s118, 1
        %s1907 = scalar_select %p1906, %s118, 1
        %s1908 = smul.addr %s1907, 4
        %s1909 = smul.addr %s1908, 4
        %s1910 = scalar_lea.vmem %s55, %s1909
        %p1911 = scmp.lt.s32.totalorder %s118, 1
        %s1912 = scalar_select %p1911, %s118, 1
        %s1913 = smul.addr %s1912, 8
        %s1914 = smul.addr %s1913, 4
        %s1915 = scalar_lea.vmem %s59, %s1914
        %p1916 = scmp.lt.s32.totalorder %s118, 1
        %s1917 = scalar_select %p1916, %s118, 1
        %s1918 = scalar_lea.vmem %s61, %s1917
        %p1919 = scmp.lt.s32.totalorder %s118, 1
        %s1920 = scalar_select %p1919, %s118, 1
        %s1921 = scalar_lea.vmem %s65, %s1920
        %p1922 = scmp.lt.s32.totalorder %s118, 1
        %s1923 = scalar_select %p1922, %s118, 1
        %s1924 = scalar_lea.vmem %s67, %s1923
        %p1925 = scmp.lt.s32.totalorder %s118, 1
        %s1926 = scalar_select %p1925, %s118, 1
        %s1927 = scalar_lea.vmem %s71, %s1926
        %p1928 = scmp.lt.s32.totalorder %s117, 0
        %s1929 = scalar_select %p1928, %s117, 0
        %s1930 = smul.addr %s1929, 2
        %s1931 = scalar_lea.vmem %s75, %s1930
        %p1933 = scmp.eq.s32.totalorder %s118, 0
        // Predicated region
        $region249: #{tpu_custom_call.1} parent=167 // pred_check
          %p1934 = pneg %p1933
        $region250: #{tpu_custom_call.1} parent=167 // pred_check_branch
          %1936 = sbr.rel (%p1934) target = $region252
        $region251: #{tpu_custom_call.1} parent=167 // pred_region
          %v1937 = vld [vmem:[#allocation5] sm:$0xf]
          %v1938 = vld [vmem:[#allocation5 + $0x4] sm:$0xf]
          %v1939 = vld [vmem:[%s11] sm:$0xf]
          %v1940 = vld [vmem:[%s11 + $0x4] sm:$0xf]
          %v1941 = vld [vmem:[%s11 + $0x8] sm:$0xf]
          %v1942 = vld [vmem:[%s11 + $0xc] sm:$0xf]
          %v1943 = vld [vmem:[%s11 + $0x10] sm:$0xf]
          %v1944 = vld [vmem:[%s11 + $0x14] sm:$0xf]
          %v1945 = vld [vmem:[#allocation13] sm:$0x1]
          %v1947 = vperm.slane %v1945, 0
          %v1951 = vunpack.c.l.b16 %v1937
          %v1952 = vunpack.c.l.b16 %v1938
          %v1953 = vpack.c.b16 %v1952, %v1951
          %v1960 = vunpack.c.l.b16 %v1939
          %v1961 = vunpack.c.l.b16 %v1940
          %v1962 = vunpack.c.l.b16 %v1941
          %v1963 = vunpack.c.l.b16 %v1942
          %v1964 = vunpack.c.l.b16 %v1943
          %v1965 = vunpack.c.l.b16 %v1944
          %v1966 = vpack.c.b16 %v1961, %v1960
          %v1967 = vpack.c.b16 %v1963, %v1962
          %v1968 = vpack.c.b16 %v1965, %v1964
          %vm1972 = vcmask 392192
          %v1974 = vsel %vm1972, %v1953, 0
          %1976 = vmatpush.bf16.msra.mxu0 0
          %1977 = vmatpush.bf16.msra.mxu0 0
          %1978 = vmatpush.bf16.msra.mxu0 0
          %1979 = vmatpush.bf16.msra.mxu0 0
          %1980 = vmatpush.bf16.msra.mxu0 0
          %1981 = vmatpush.bf16.msra.mxu0 %v1968
          %1982 = vmatpush.bf16.msra.mxu0 %v1967
          %1983 = vmatpush.bf16.msra.mxu0 %v1966
          %1984 = vmatmul.bf16.gmra.mxu0 %v1974
          %v1985 = vpop.f32.mrf.mxu0
          %v1986 = vadd.f32 %v1947, %v1985
          %v1987 = vpop.f32.mrf.mxu0
          %v1988 = vadd.f32 %v1947, %v1987
          %1989 = vdwg.mxu0
          %vm1990 = vcmask 261120
          %1991 = vst.msk [vmem:[#allocation2] sm:$0xff] %vm1990, %v1986
          %1992 = vst.msk [vmem:[#allocation2 + $0x8] sm:$0xff] %vm1990, %v1988
          %v1993 = vld [vmem:[#allocation7] sm:$0xf]
          %v1994 = vld [vmem:[#allocation7 + $0x4] sm:$0xf]
          %v1995 = vld [vmem:[#allocation7 + $0x8] sm:$0xf]
          %v1996 = vld [vmem:[#allocation7 + $0xc] sm:$0xf]
          %v1997 = vld [vmem:[%s15] sm:$0xf]
          %v1998 = vld [vmem:[%s15 + $0x4] sm:$0xf]
          %v1999 = vld [vmem:[%s15 + $0x8] sm:$0xf]
          %v2000 = vld [vmem:[%s15 + $0xc] sm:$0xf]
          %v2001 = vld [vmem:[%s15 + $0x10] sm:$0xf]
          %v2002 = vld [vmem:[%s15 + $0x14] sm:$0xf]
          %v2003 = vld [vmem:[%s15 + $0x18] sm:$0xf]
          %v2004 = vld [vmem:[%s15 + $0x1c] sm:$0xf]
          %v2005 = vld [vmem:[#allocation15] sm:$0x1]
          %v2007 = vperm.slane %v2005, 0
          %v2013 = vunpack.c.l.b16 %v1993
          %v2014 = vunpack.c.l.b16 %v1994
          %v2015 = vunpack.c.l.b16 %v1995
          %v2016 = vunpack.c.l.b16 %v1996
          %v2017 = vpack.c.b16 %v2014, %v2013
          %v2018 = vpack.c.b16 %v2016, %v2015
          %v2027 = vunpack.c.l.b16 %v1997
          %v2028 = vunpack.c.l.b16 %v1998
          %v2029 = vunpack.c.l.b16 %v1999
          %v2030 = vunpack.c.l.b16 %v2000
          %v2031 = vunpack.c.l.b16 %v2001
          %v2032 = vunpack.c.l.b16 %v2002
          %v2033 = vunpack.c.l.b16 %v2003
          %v2034 = vunpack.c.l.b16 %v2004
          %v2035 = vpack.c.b16 %v2028, %v2027
          %v2036 = vpack.c.b16 %v2030, %v2029
          %v2037 = vpack.c.b16 %v2032, %v2031
          %v2038 = vpack.c.b16 %v2034, %v2033
          %vm2043 = vcmask 523264
          %v2045 = vsel %vm2043, %v2017, 0
          %v2048 = vsel %vm2043, %v2018, 0
          %2050 = vmatpush.bf16.msra.mxu0 0
          %2051 = vmatpush.bf16.msra.mxu0 0
          %2052 = vmatpush.bf16.msra.mxu0 0
          %2053 = vmatpush.bf16.msra.mxu0 0
          %2054 = vmatpush.bf16.msra.mxu0 %v2038
          %2055 = vmatpush.bf16.msra.mxu0 %v2037
          %2056 = vmatpush.bf16.msra.mxu0 %v2036
          %2057 = vmatpush.bf16.msra.mxu0 %v2035
          %2058 = vmatmul.bf16.gmra.mxu0 %v2045
          %v2059 = vpop.f32.mrf.mxu0
          %v2060 = vadd.f32 %v2007, %v2059
          %v2061 = vpop.f32.mrf.mxu0
          %v2062 = vadd.f32 %v2007, %v2061
          %2063 = vmatmul.bf16.gmra.mxu0 %v2048
          %v2064 = vpop.f32.mrf.mxu0
          %v2065 = vadd.f32 %v2007, %v2064
          %v2066 = vpop.f32.mrf.mxu0
          %v2067 = vadd.f32 %v2007, %v2066
          %2068 = vdwg.mxu0
          %v2069 = vpack.c.bf16 %v2060, %v2060
          %v2070 = vpack.c.bf16 %v2062, %v2062
          %v2071 = vpack.c.bf16 %v2065, %v2065
          %v2072 = vpack.c.bf16 %v2067, %v2067
          %vm2073 = vcmask 257024
          %2074 = vst.msk [vmem:[#allocation3] sm:$0xf] %vm2073, %v2069
          %2075 = vst.msk [vmem:[#allocation3 + $0x4] sm:$0xf] %vm2073, %v2070
          %2076 = vst.msk [vmem:[#allocation3 + $0x8] sm:$0xf] %vm2073, %v2071
          %2077 = vst.msk [vmem:[#allocation3 + $0xc] sm:$0xf] %vm2073, %v2072
        $region252: #{tpu_custom_call.1} parent=167 // pred_fallthru
          _
        %v2078 = vld [vmem:[#allocation2] sm:$0xff]
        %v2079 = vld [vmem:[#allocation2 + $0x8] sm:$0xff]
        %v2080 = vld [vmem:[#allocation3] sm:$0xf]
        %v2081 = vld [vmem:[#allocation3 + $0x4] sm:$0xf]
        %v2082 = vld [vmem:[#allocation3 + $0x8] sm:$0xf]
        %v2083 = vld [vmem:[#allocation3 + $0xc] sm:$0xf]
        %v2084 = vld [vmem:[#allocation10] sm:$0x1]
        %v2085 = vld [vmem:[#allocation12] sm:$0x1]
        %v2086 = vld [vmem:[%s1877] sm:$0xf]
        %v2087 = vld [vmem:[%s1877 + $0x4] sm:$0xf]
        %v2088 = vld [vmem:[%s1877 + $0x8] sm:$0xf]
        %v2089 = vld [vmem:[%s1877 + $0xc] sm:$0xf]
        %v2090 = vld [vmem:[%s1882] sm:$0xf]
        %v2091 = vld [vmem:[%s1882 + $0x4] sm:$0xf]
        %v2092 = vld [vmem:[%s1882 + $0x8] sm:$0xf]
        %v2093 = vld [vmem:[%s1882 + $0xc] sm:$0xf]
        %v2094 = vld [vmem:[%s1887] sm:$0xf]
        %v2095 = vld [vmem:[%s1887 + $0x4] sm:$0xf]
        %v2096 = vld [vmem:[%s1887 + $0x8] sm:$0xf]
        %v2097 = vld [vmem:[%s1887 + $0xc] sm:$0xf]
        %v2098 = vld [vmem:[%s1892] sm:$0xf]
        %v2099 = vld [vmem:[%s1892 + $0x4] sm:$0xf]
        %v2100 = vld [vmem:[%s1892 + $0x8] sm:$0xf]
        %v2101 = vld [vmem:[%s1892 + $0xc] sm:$0xf]
        %v2102 = vld [vmem:[%s1566] sm:$0x1]
        %v2103 = vld [vmem:[%s1575] sm:$0x1]
        %v2104 = vld [vmem:[%s1584] sm:$0x1]
        %v2105 = vld [vmem:[%s1593] sm:$0x1]
        %v2106 = vpack.c.bf16 %v2079, %v2078
        %v2108 = vperm.slane %v2102, 0
        %v2114 = vunpack.c.l.b16 %v2086
        %v2115 = vunpack.c.l.b16 %v2087
        %v2116 = vunpack.c.l.b16 %v2088
        %v2117 = vunpack.c.l.b16 %v2089
        %v2118 = vpack.c.b16 %v2115, %v2114
        %v2119 = vpack.c.b16 %v2117, %v2116
        %vm2122 = vcmask 261120
        %v2124 = vsel %vm2122, %v2106, 0
        %2126 = vmatpush.bf16.msra.mxu0 0
        %2127 = vmatpush.bf16.msra.mxu0 0
        %2128 = vmatpush.bf16.msra.mxu0 0
        %2129 = vmatpush.bf16.msra.mxu0 0
        %2130 = vmatpush.bf16.msra.mxu0 0
        %2131 = vmatpush.bf16.msra.mxu0 0
        %2132 = vmatpush.bf16.msra.mxu0 %v2119
        %2133 = vmatpush.bf16.msra.mxu0 %v2118
        %2134 = vmatmul.bf16.gmra.mxu0 %v2124
        %v2135 = vpop.f32.mrf.mxu0
        %v2136 = vadd.f32 %v2108, %v2135
        %v2137 = vpop.f32.mrf.mxu0
        %v2138 = vadd.f32 %v2108, %v2137
        %2139 = vdwg.mxu0
        %v2140 = vmul.f32 %v2136, 0.35355338
        %v2141 = vmul.f32 %v2138, 0.35355338
        %v2143 = vperm.slane %v2103, 0
        %v2149 = vunpack.c.l.b16 %v2090
        %v2150 = vunpack.c.l.b16 %v2091
        %v2151 = vunpack.c.l.b16 %v2092
        %v2152 = vunpack.c.l.b16 %v2093
        %v2153 = vpack.c.b16 %v2150, %v2149
        %v2154 = vpack.c.b16 %v2152, %v2151
        %2157 = vmatpush.bf16.msra.mxu0 0
        %2158 = vmatpush.bf16.msra.mxu0 0
        %2159 = vmatpush.bf16.msra.mxu0 0
        %2160 = vmatpush.bf16.msra.mxu0 0
        %2161 = vmatpush.bf16.msra.mxu0 0
        %2162 = vmatpush.bf16.msra.mxu0 0
        %2163 = vmatpush.bf16.msra.mxu0 %v2154
        %2164 = vmatpush.bf16.msra.mxu0 %v2153
        %2165 = vmatmul.bf16.gmra.mxu0 %v2124
        %v2166 = vpop.f32.mrf.mxu0
        %v2167 = vadd.f32 %v2143, %v2166
        %v2168 = vpop.f32.mrf.mxu0
        %v2169 = vadd.f32 %v2143, %v2168
        %2170 = vdwg.mxu0
        %v2172 = vperm.slane %v2104, 0
        %v2178 = vunpack.c.l.b16 %v2094
        %v2179 = vunpack.c.l.b16 %v2095
        %v2180 = vunpack.c.l.b16 %v2096
        %v2181 = vunpack.c.l.b16 %v2097
        %v2182 = vpack.c.b16 %v2179, %v2178
        %v2183 = vpack.c.b16 %v2181, %v2180
        %2186 = vmatpush.bf16.msra.mxu0 0
        %2187 = vmatpush.bf16.msra.mxu0 0
        %2188 = vmatpush.bf16.msra.mxu0 0
        %2189 = vmatpush.bf16.msra.mxu0 0
        %2190 = vmatpush.bf16.msra.mxu0 0
        %2191 = vmatpush.bf16.msra.mxu0 0
        %2192 = vmatpush.bf16.msra.mxu0 %v2183
        %2193 = vmatpush.bf16.msra.mxu0 %v2182
        %2194 = vmatmul.bf16.gmra.mxu0 %v2124
        %v2195 = vpop.f32.mrf.mxu0
        %v2196 = vadd.f32 %v2172, %v2195
        %v2197 = vpop.f32.mrf.mxu0
        %v2198 = vadd.f32 %v2172, %v2197
        %2199 = vdwg.mxu0
        %v2200 = vpack.c.bf16 %v2140, %v2140
        %v2201 = vpack.c.bf16 %v2141, %v2141
        %v2202 = vpack.c.bf16 %v2167, %v2167
        %v2203 = vpack.c.bf16 %v2169, %v2169
        %v2204 = vpack.c.bf16 %v2196, %v2196
        %v2205 = vpack.c.bf16 %v2198, %v2198
        %v2207 = vperm.slane %v2084, 0
        %vm2209 = vcmask 64512
        %v2211 = vsel %vm2209, %v2200, 0
        %v2214 = vsel %vm2209, %v2202, 0
        %2216 = vmatpush.bf16.xpose.msra.mxu0 0
        %2217 = vmatpush.bf16.xpose.msra.mxu0 0
        %2218 = vmatpush.bf16.xpose.msra.mxu0 0
        %2219 = vmatpush.bf16.xpose.msra.mxu0 0
        %2220 = vmatpush.bf16.xpose.msra.mxu0 0
        %2221 = vmatpush.bf16.xpose.msra.mxu0 0
        %2222 = vmatpush.bf16.xpose.msra.mxu0 0
        %2223 = vmatpush.bf16.xpose.msra.mxu0 %v2214
        %2224 = vmatmul.bf16.gmra.mxu0 %v2211
        %v2225 = vpop.f32.mrf.mxu0
        %v2226 = vadd.f32 %v2207, %v2225
        %v2227 = vpop.f32.mrf.mxu0
        %2228 = vdwg.mxu0
        %v2230 = vsel %vm2209, %v2201, 0
        %v2233 = vsel %vm2209, %v2203, 0
        %2235 = vmatpush.bf16.xpose.msra.mxu0 0
        %2236 = vmatpush.bf16.xpose.msra.mxu0 0
        %2237 = vmatpush.bf16.xpose.msra.mxu0 0
        %2238 = vmatpush.bf16.xpose.msra.mxu0 0
        %2239 = vmatpush.bf16.xpose.msra.mxu0 0
        %2240 = vmatpush.bf16.xpose.msra.mxu0 0
        %2241 = vmatpush.bf16.xpose.msra.mxu0 0
        %2242 = vmatpush.bf16.xpose.msra.mxu0 %v2233
        %2243 = vmatmul.bf16.gmra.mxu0 %v2230
        %v2244 = vpop.f32.mrf.mxu0
        %v2245 = vadd.f32 %v2207, %v2244
        %v2246 = vpop.f32.mrf.mxu0
        %2247 = vdwg.mxu0
        %v2248 = vsel %vm2209, %v2226, -inf
        %2249 = vmax.xlane.f32.xlu0 %v2248
        %v2250 = vpop.xlane.xlu0 %2249
        %v2251 = vsel %vm2209, %v2245, -inf
        %2252 = vmax.xlane.f32.xlu0 %v2251
        %v2253 = vpop.xlane.xlu0 %2252
        %v2254 = vsub.f32 %v2226, %v2250
        %v2255 = vsub.f32 %v2245, %v2253
        %v2256 = vmul.f32 %v2254, 1.442695
        %v2257 = vpow.pop %v2256
        %v2258 = vmul.f32 %v2255, 1.442695
        %v2259 = vpow.pop %v2258
        %v2260 = vsel %vm2209, %v2257, 0.0
        %2261 = vadd.xlane.f32.xlu0 %v2260
        %v2262 = vpop.xlane.xlu0 %2261
        %v2263 = vsel %vm2209, %v2259, 0.0
        %2264 = vadd.xlane.f32.xlu0 %v2263
        %v2265 = vpop.xlane.xlu0 %2264
        %v2266 = vrcp.pop %v2262
        %v2267 = vrcp.pop %v2265
        %v2268 = vpack.c.bf16 %v2257, %v2257
        %v2269 = vpack.c.bf16 %v2259, %v2259
        %v2271 = vsel %vm2209, %v2268, 0
        %vm2273 = vcmask 1043456
        %v2275 = vsel %vm2273, %v2204, 0
        %2277 = vmatpush.bf16.msra.mxu0 0
        %2278 = vmatpush.bf16.msra.mxu0 0
        %2279 = vmatpush.bf16.msra.mxu0 0
        %2280 = vmatpush.bf16.msra.mxu0 0
        %2281 = vmatpush.bf16.msra.mxu0 0
        %2282 = vmatpush.bf16.msra.mxu0 0
        %2283 = vmatpush.bf16.msra.mxu0 0
        %2284 = vmatpush.bf16.msra.mxu0 %v2275
        %2285 = vmatmul.bf16.gmra.mxu0 %v2271
        %v2286 = vpop.f32.mrf.mxu0
        %v2287 = vadd.f32 0.0, %v2286
        %v2288 = vpop.f32.mrf.mxu0
        %2289 = vdwg.mxu0
        %v2291 = vsel %vm2209, %v2269, 0
        %v2294 = vsel %vm2273, %v2205, 0
        %2296 = vmatpush.bf16.msra.mxu0 0
        %2297 = vmatpush.bf16.msra.mxu0 0
        %2298 = vmatpush.bf16.msra.mxu0 0
        %2299 = vmatpush.bf16.msra.mxu0 0
        %2300 = vmatpush.bf16.msra.mxu0 0
        %2301 = vmatpush.bf16.msra.mxu0 0
        %2302 = vmatpush.bf16.msra.mxu0 0
        %2303 = vmatpush.bf16.msra.mxu0 %v2294
        %2304 = vmatmul.bf16.gmra.mxu0 %v2291
        %v2305 = vpop.f32.mrf.mxu0
        %v2306 = vadd.f32 0.0, %v2305
        %v2307 = vpop.f32.mrf.mxu0
        %2308 = vdwg.mxu0
        %v2309 = vmul.f32 %v2287, %v2266
        %v2310 = vmul.f32 %v2306, %v2267
        %v2312 = vunpack.c.l.b16 %v2200
        %v2313 = vpack.c.b16 %v2312, %v2312
        %2314 = vrot.lane.b32.xlu0 %v2313, 120
        %v2315 = vpop.permute.xlu0 %2314
        %v2317 = vunpack.c.l.b16 %v2202
        %v2318 = vpack.c.b16 %v2317, %v2317
        %2319 = vrot.lane.b32.xlu0 %v2318, 120
        %v2320 = vpop.permute.xlu0 %2319
        %v2322 = vsel %vm2209, %v2315, 0
        %v2325 = vsel %vm2209, %v2320, 0
        %2327 = vmatpush.bf16.xpose.msra.mxu0 0
        %2328 = vmatpush.bf16.xpose.msra.mxu0 0
        %2329 = vmatpush.bf16.xpose.msra.mxu0 0
        %2330 = vmatpush.bf16.xpose.msra.mxu0 0
        %2331 = vmatpush.bf16.xpose.msra.mxu0 0
        %2332 = vmatpush.bf16.xpose.msra.mxu0 0
        %2333 = vmatpush.bf16.xpose.msra.mxu0 0
        %2334 = vmatpush.bf16.xpose.msra.mxu0 %v2325
        %2335 = vmatmul.bf16.gmra.mxu0 %v2322
        %v2336 = vpop.f32.mrf.mxu0
        %v2337 = vadd.f32 %v2207, %v2336
        %v2338 = vpop.f32.mrf.mxu0
        %2339 = vdwg.mxu0
        %v2341 = vunpack.c.l.b16 %v2201
        %v2342 = vpack.c.b16 %v2341, %v2341
        %2343 = vrot.lane.b32.xlu0 %v2342, 120
        %v2344 = vpop.permute.xlu0 %2343
        %v2346 = vunpack.c.l.b16 %v2203
        %v2347 = vpack.c.b16 %v2346, %v2346
        %2348 = vrot.lane.b32.xlu0 %v2347, 120
        %v2349 = vpop.permute.xlu0 %2348
        %v2351 = vsel %vm2209, %v2344, 0
        %v2354 = vsel %vm2209, %v2349, 0
        %2356 = vmatpush.bf16.xpose.msra.mxu0 0
        %2357 = vmatpush.bf16.xpose.msra.mxu0 0
        %2358 = vmatpush.bf16.xpose.msra.mxu0 0
        %2359 = vmatpush.bf16.xpose.msra.mxu0 0
        %2360 = vmatpush.bf16.xpose.msra.mxu0 0
        %2361 = vmatpush.bf16.xpose.msra.mxu0 0
        %2362 = vmatpush.bf16.xpose.msra.mxu0 0
        %2363 = vmatpush.bf16.xpose.msra.mxu0 %v2354
        %2364 = vmatmul.bf16.gmra.mxu0 %v2351
        %v2365 = vpop.f32.mrf.mxu0
        %v2366 = vadd.f32 %v2207, %v2365
        %v2367 = vpop.f32.mrf.mxu0
        %2368 = vdwg.mxu0
        %v2369 = vsel %vm2209, %v2337, -inf
        %2370 = vmax.xlane.f32.xlu0 %v2369
        %v2371 = vpop.xlane.xlu0 %2370
        %v2372 = vsel %vm2209, %v2366, -inf
        %2373 = vmax.xlane.f32.xlu0 %v2372
        %v2374 = vpop.xlane.xlu0 %2373
        %v2375 = vsub.f32 %v2337, %v2371
        %v2376 = vsub.f32 %v2366, %v2374
        %v2377 = vmul.f32 %v2375, 1.442695
        %v2378 = vpow.pop %v2377
        %v2379 = vmul.f32 %v2376, 1.442695
        %v2380 = vpow.pop %v2379
        %v2381 = vsel %vm2209, %v2378, 0.0
        %2382 = vadd.xlane.f32.xlu0 %v2381
        %v2383 = vpop.xlane.xlu0 %2382
        %v2384 = vsel %vm2209, %v2380, 0.0
        %2385 = vadd.xlane.f32.xlu0 %v2384
        %v2386 = vpop.xlane.xlu0 %2385
        %v2387 = vrcp.pop %v2383
        %v2388 = vrcp.pop %v2386
        %v2389 = vpack.c.bf16 %v2378, %v2378
        %v2390 = vpack.c.bf16 %v2380, %v2380
        %v2392 = vunpack.c.l.b16 %v2204
        %v2393 = vpack.c.b16 %v2392, %v2392
        %2394 = vrot.lane.b32.xlu0 %v2393, 120
        %v2395 = vpop.permute.xlu0 %2394
        %v2397 = vsel %vm2209, %v2389, 0
        %v2400 = vsel %vm2273, %v2395, 0
        %2402 = vmatpush.bf16.msra.mxu0 0
        %2403 = vmatpush.bf16.msra.mxu0 0
        %2404 = vmatpush.bf16.msra.mxu0 0
        %2405 = vmatpush.bf16.msra.mxu0 0
        %2406 = vmatpush.bf16.msra.mxu0 0
        %2407 = vmatpush.bf16.msra.mxu0 0
        %2408 = vmatpush.bf16.msra.mxu0 0
        %2409 = vmatpush.bf16.msra.mxu0 %v2400
        %2410 = vmatmul.bf16.gmra.mxu0 %v2397
        %v2411 = vpop.f32.mrf.mxu0
        %v2412 = vadd.f32 0.0, %v2411
        %v2413 = vpop.f32.mrf.mxu0
        %2414 = vdwg.mxu0
        %v2416 = vunpack.c.l.b16 %v2205
        %v2417 = vpack.c.b16 %v2416, %v2416
        %2418 = vrot.lane.b32.xlu0 %v2417, 120
        %v2419 = vpop.permute.xlu0 %2418
        %v2421 = vsel %vm2209, %v2390, 0
        %v2424 = vsel %vm2273, %v2419, 0
        %2426 = vmatpush.bf16.msra.mxu0 0
        %2427 = vmatpush.bf16.msra.mxu0 0
        %2428 = vmatpush.bf16.msra.mxu0 0
        %2429 = vmatpush.bf16.msra.mxu0 0
        %2430 = vmatpush.bf16.msra.mxu0 0
        %2431 = vmatpush.bf16.msra.mxu0 0
        %2432 = vmatpush.bf16.msra.mxu0 0
        %2433 = vmatpush.bf16.msra.mxu0 %v2424
        %2434 = vmatmul.bf16.gmra.mxu0 %v2421
        %v2435 = vpop.f32.mrf.mxu0
        %v2436 = vadd.f32 0.0, %v2435
        %v2437 = vpop.f32.mrf.mxu0
        %2438 = vdwg.mxu0
        %v2439 = vmul.f32 %v2412, %v2387
        %v2440 = vmul.f32 %v2436, %v2388
        %2441 = vrot.lane.b32.xlu0 %v2313, 112
        %v2442 = vpop.permute.xlu0 %2441
        %2443 = vrot.lane.b32.xlu0 %v2318, 112
        %v2444 = vpop.permute.xlu0 %2443
        %v2446 = vsel %vm2209, %v2442, 0
        %v2449 = vsel %vm2209, %v2444, 0
        %2451 = vmatpush.bf16.xpose.msra.mxu0 0
        %2452 = vmatpush.bf16.xpose.msra.mxu0 0
        %2453 = vmatpush.bf16.xpose.msra.mxu0 0
        %2454 = vmatpush.bf16.xpose.msra.mxu0 0
        %2455 = vmatpush.bf16.xpose.msra.mxu0 0
        %2456 = vmatpush.bf16.xpose.msra.mxu0 0
        %2457 = vmatpush.bf16.xpose.msra.mxu0 0
        %2458 = vmatpush.bf16.xpose.msra.mxu0 %v2449
        %2459 = vmatmul.bf16.gmra.mxu0 %v2446
        %v2460 = vpop.f32.mrf.mxu0
        %v2461 = vadd.f32 %v2207, %v2460
        %v2462 = vpop.f32.mrf.mxu0
        %2463 = vdwg.mxu0
        %2464 = vrot.lane.b32.xlu0 %v2342, 112
        %v2465 = vpop.permute.xlu0 %2464
        %2466 = vrot.lane.b32.xlu0 %v2347, 112
        %v2467 = vpop.permute.xlu0 %2466
        %v2469 = vsel %vm2209, %v2465, 0
        %v2472 = vsel %vm2209, %v2467, 0
        %2474 = vmatpush.bf16.xpose.msra.mxu0 0
        %2475 = vmatpush.bf16.xpose.msra.mxu0 0
        %2476 = vmatpush.bf16.xpose.msra.mxu0 0
        %2477 = vmatpush.bf16.xpose.msra.mxu0 0
        %2478 = vmatpush.bf16.xpose.msra.mxu0 0
        %2479 = vmatpush.bf16.xpose.msra.mxu0 0
        %2480 = vmatpush.bf16.xpose.msra.mxu0 0
        %2481 = vmatpush.bf16.xpose.msra.mxu0 %v2472
        %2482 = vmatmul.bf16.gmra.mxu0 %v2469
        %v2483 = vpop.f32.mrf.mxu0
        %v2484 = vadd.f32 %v2207, %v2483
        %v2485 = vpop.f32.mrf.mxu0
        %2486 = vdwg.mxu0
        %v2487 = vsel %vm2209, %v2461, -inf
        %2488 = vmax.xlane.f32.xlu0 %v2487
        %v2489 = vpop.xlane.xlu0 %2488
        %v2490 = vsel %vm2209, %v2484, -inf
        %2491 = vmax.xlane.f32.xlu0 %v2490
        %v2492 = vpop.xlane.xlu0 %2491
        %v2493 = vsub.f32 %v2461, %v2489
        %v2494 = vsub.f32 %v2484, %v2492
        %v2495 = vmul.f32 %v2493, 1.442695
        %v2496 = vpow.pop %v2495
        %v2497 = vmul.f32 %v2494, 1.442695
        %v2498 = vpow.pop %v2497
        %v2499 = vsel %vm2209, %v2496, 0.0
        %2500 = vadd.xlane.f32.xlu0 %v2499
        %v2501 = vpop.xlane.xlu0 %2500
        %v2502 = vsel %vm2209, %v2498, 0.0
        %2503 = vadd.xlane.f32.xlu0 %v2502
        %v2504 = vpop.xlane.xlu0 %2503
        %v2505 = vrcp.pop %v2501
        %v2506 = vrcp.pop %v2504
        %v2507 = vpack.c.bf16 %v2496, %v2496
        %v2508 = vpack.c.bf16 %v2498, %v2498
        %2509 = vrot.lane.b32.xlu0 %v2393, 112
        %v2510 = vpop.permute.xlu0 %2509
        %v2512 = vsel %vm2209, %v2507, 0
        %v2515 = vsel %vm2273, %v2510, 0
        %2517 = vmatpush.bf16.msra.mxu0 0
        %2518 = vmatpush.bf16.msra.mxu0 0
        %2519 = vmatpush.bf16.msra.mxu0 0
        %2520 = vmatpush.bf16.msra.mxu0 0
        %2521 = vmatpush.bf16.msra.mxu0 0
        %2522 = vmatpush.bf16.msra.mxu0 0
        %2523 = vmatpush.bf16.msra.mxu0 0
        %2524 = vmatpush.bf16.msra.mxu0 %v2515
        %2525 = vmatmul.bf16.gmra.mxu0 %v2512
        %v2526 = vpop.f32.mrf.mxu0
        %v2527 = vadd.f32 0.0, %v2526
        %v2528 = vpop.f32.mrf.mxu0
        %2529 = vdwg.mxu0
        %2530 = vrot.lane.b32.xlu0 %v2417, 112
        %v2531 = vpop.permute.xlu0 %2530
        %v2533 = vsel %vm2209, %v2508, 0
        %v2536 = vsel %vm2273, %v2531, 0
        %2538 = vmatpush.bf16.msra.mxu0 0
        %2539 = vmatpush.bf16.msra.mxu0 0
        %2540 = vmatpush.bf16.msra.mxu0 0
        %2541 = vmatpush.bf16.msra.mxu0 0
        %2542 = vmatpush.bf16.msra.mxu0 0
        %2543 = vmatpush.bf16.msra.mxu0 0
        %2544 = vmatpush.bf16.msra.mxu0 0
        %2545 = vmatpush.bf16.msra.mxu0 %v2536
        %2546 = vmatmul.bf16.gmra.mxu0 %v2533
        %v2547 = vpop.f32.mrf.mxu0
        %v2548 = vadd.f32 0.0, %v2547
        %v2549 = vpop.f32.mrf.mxu0
        %2550 = vdwg.mxu0
        %v2551 = vmul.f32 %v2527, %v2505
        %v2552 = vmul.f32 %v2548, %v2506
        %2553 = vrot.lane.b32.xlu0 %v2313, 104
        %v2554 = vpop.permute.xlu0 %2553
        %2555 = vrot.lane.b32.xlu0 %v2318, 104
        %v2556 = vpop.permute.xlu0 %2555
        %v2558 = vsel %vm2209, %v2554, 0
        %v2561 = vsel %vm2209, %v2556, 0
        %2563 = vmatpush.bf16.xpose.msra.mxu0 0
        %2564 = vmatpush.bf16.xpose.msra.mxu0 0
        %2565 = vmatpush.bf16.xpose.msra.mxu0 0
        %2566 = vmatpush.bf16.xpose.msra.mxu0 0
        %2567 = vmatpush.bf16.xpose.msra.mxu0 0
        %2568 = vmatpush.bf16.xpose.msra.mxu0 0
        %2569 = vmatpush.bf16.xpose.msra.mxu0 0
        %2570 = vmatpush.bf16.xpose.msra.mxu0 %v2561
        %2571 = vmatmul.bf16.gmra.mxu0 %v2558
        %v2572 = vpop.f32.mrf.mxu0
        %v2573 = vadd.f32 %v2207, %v2572
        %v2574 = vpop.f32.mrf.mxu0
        %2575 = vdwg.mxu0
        %2576 = vrot.lane.b32.xlu0 %v2342, 104
        %v2577 = vpop.permute.xlu0 %2576
        %2578 = vrot.lane.b32.xlu0 %v2347, 104
        %v2579 = vpop.permute.xlu0 %2578
        %v2581 = vsel %vm2209, %v2577, 0
        %v2584 = vsel %vm2209, %v2579, 0
        %2586 = vmatpush.bf16.xpose.msra.mxu0 0
        %2587 = vmatpush.bf16.xpose.msra.mxu0 0
        %2588 = vmatpush.bf16.xpose.msra.mxu0 0
        %2589 = vmatpush.bf16.xpose.msra.mxu0 0
        %2590 = vmatpush.bf16.xpose.msra.mxu0 0
        %2591 = vmatpush.bf16.xpose.msra.mxu0 0
        %2592 = vmatpush.bf16.xpose.msra.mxu0 0
        %2593 = vmatpush.bf16.xpose.msra.mxu0 %v2584
        %2594 = vmatmul.bf16.gmra.mxu0 %v2581
        %v2595 = vpop.f32.mrf.mxu0
        %v2596 = vadd.f32 %v2207, %v2595
        %v2597 = vpop.f32.mrf.mxu0
        %2598 = vdwg.mxu0
        %v2599 = vsel %vm2209, %v2573, -inf
        %2600 = vmax.xlane.f32.xlu0 %v2599
        %v2601 = vpop.xlane.xlu0 %2600
        %v2602 = vsel %vm2209, %v2596, -inf
        %2603 = vmax.xlane.f32.xlu0 %v2602
        %v2604 = vpop.xlane.xlu0 %2603
        %v2605 = vsub.f32 %v2573, %v2601
        %v2606 = vsub.f32 %v2596, %v2604
        %v2607 = vmul.f32 %v2605, 1.442695
        %v2608 = vpow.pop %v2607
        %v2609 = vmul.f32 %v2606, 1.442695
        %v2610 = vpow.pop %v2609
        %v2611 = vsel %vm2209, %v2608, 0.0
        %2612 = vadd.xlane.f32.xlu0 %v2611
        %v2613 = vpop.xlane.xlu0 %2612
        %v2614 = vsel %vm2209, %v2610, 0.0
        %2615 = vadd.xlane.f32.xlu0 %v2614
        %v2616 = vpop.xlane.xlu0 %2615
        %v2617 = vrcp.pop %v2613
        %v2618 = vrcp.pop %v2616
        %v2619 = vpack.c.bf16 %v2608, %v2608
        %v2620 = vpack.c.bf16 %v2610, %v2610
        %2621 = vrot.lane.b32.xlu0 %v2393, 104
        %v2622 = vpop.permute.xlu0 %2621
        %v2624 = vsel %vm2209, %v2619, 0
        %v2627 = vsel %vm2273, %v2622, 0
        %2629 = vmatpush.bf16.msra.mxu0 0
        %2630 = vmatpush.bf16.msra.mxu0 0
        %2631 = vmatpush.bf16.msra.mxu0 0
        %2632 = vmatpush.bf16.msra.mxu0 0
        %2633 = vmatpush.bf16.msra.mxu0 0
        %2634 = vmatpush.bf16.msra.mxu0 0
        %2635 = vmatpush.bf16.msra.mxu0 0
        %2636 = vmatpush.bf16.msra.mxu0 %v2627
        %2637 = vmatmul.bf16.gmra.mxu0 %v2624
        %v2638 = vpop.f32.mrf.mxu0
        %v2639 = vadd.f32 0.0, %v2638
        %v2640 = vpop.f32.mrf.mxu0
        %2641 = vdwg.mxu0
        %2642 = vrot.lane.b32.xlu0 %v2417, 104
        %v2643 = vpop.permute.xlu0 %2642
        %v2645 = vsel %vm2209, %v2620, 0
        %v2648 = vsel %vm2273, %v2643, 0
        %2650 = vmatpush.bf16.msra.mxu0 0
        %2651 = vmatpush.bf16.msra.mxu0 0
        %2652 = vmatpush.bf16.msra.mxu0 0
        %2653 = vmatpush.bf16.msra.mxu0 0
        %2654 = vmatpush.bf16.msra.mxu0 0
        %2655 = vmatpush.bf16.msra.mxu0 0
        %2656 = vmatpush.bf16.msra.mxu0 0
        %2657 = vmatpush.bf16.msra.mxu0 %v2648
        %2658 = vmatmul.bf16.gmra.mxu0 %v2645
        %v2659 = vpop.f32.mrf.mxu0
        %v2660 = vadd.f32 0.0, %v2659
        %v2661 = vpop.f32.mrf.mxu0
        %2662 = vdwg.mxu0
        %v2663 = vmul.f32 %v2639, %v2617
        %v2664 = vmul.f32 %v2660, %v2618
        %2667 = vrot.lane.b32.xlu0 %v2439, 8
        %v2668 = vpop.permute.xlu0 %2667
        %2669 = vrot.lane.b32.xlu0 %v2440, 8
        %v2670 = vpop.permute.xlu0 %2669
        %2675 = vrot.lane.b32.xlu0 %v2551, 16
        %v2676 = vpop.permute.xlu0 %2675
        %2677 = vrot.lane.b32.xlu0 %v2552, 16
        %v2678 = vpop.permute.xlu0 %2677
        %2683 = vrot.lane.b32.xlu0 %v2663, 24
        %v2684 = vpop.permute.xlu0 %2683
        %2685 = vrot.lane.b32.xlu0 %v2664, 24
        %v2686 = vpop.permute.xlu0 %2685
        %v2689 = vsel %vm2209, %v2309, %v2668
        %v2690 = vsel %vm2209, %v2310, %v2670
        %vm2691 = vcmask 130048
        %v2692 = vsel %vm2691, %v2689, %v2676
        %v2693 = vsel %vm2691, %v2690, %v2678
        %vm2694 = vcmask 195584
        %v2695 = vsel %vm2694, %v2692, %v2684
        %v2696 = vsel %vm2694, %v2693, %v2686
        %v2697 = vpack.c.bf16 %v2696, %v2695
        %v2699 = vperm.slane %v2105, 0
        %v2705 = vunpack.c.l.b16 %v2098
        %v2706 = vunpack.c.l.b16 %v2099
        %v2707 = vunpack.c.l.b16 %v2100
        %v2708 = vunpack.c.l.b16 %v2101
        %v2709 = vpack.c.b16 %v2706, %v2705
        %v2710 = vpack.c.b16 %v2708, %v2707
        %v2714 = vsel %vm2122, %v2697, 0
        %2716 = vmatpush.bf16.msra.mxu0 0
        %2717 = vmatpush.bf16.msra.mxu0 0
        %2718 = vmatpush.bf16.msra.mxu0 0
        %2719 = vmatpush.bf16.msra.mxu0 0
        %2720 = vmatpush.bf16.msra.mxu0 0
        %2721 = vmatpush.bf16.msra.mxu0 0
        %2722 = vmatpush.bf16.msra.mxu0 %v2710
        %2723 = vmatpush.bf16.msra.mxu0 %v2709
        %2724 = vmatmul.bf16.gmra.mxu0 %v2714
        %v2725 = vpop.f32.mrf.mxu0
        %v2726 = vadd.f32 %v2699, %v2725
        %v2727 = vpop.f32.mrf.mxu0
        %v2728 = vadd.f32 %v2699, %v2727
        %2729 = vdwg.mxu0
        %v2730 = vadd.f32 %v2078, %v2726
        %v2731 = vadd.f32 %v2079, %v2728
        %v2732 = vld [vmem:[%s1658] sm:$0x1]
        %v2733 = vld [vmem:[%s1921] sm:$0x1]
        %v2734 = vsel %vm2122, %v2730, 0.0
        %2735 = vadd.xlane.f32.xlu0 %v2734
        %v2736 = vpop.xlane.xlu0 %2735
        %v2737 = vsel %vm2122, %v2731, 0.0
        %2738 = vadd.xlane.f32.xlu0 %v2737
        %v2739 = vpop.xlane.xlu0 %2738
        %v2740 = vrcp.pop 32.0
        %v2741 = vmul.f32 32.0, %v2740
        %v2742 = vsub.f32 1.0, %v2741
        %v2743 = vmul.f32 %v2740, %v2742
        %v2744 = vadd.f32 %v2740, %v2743
        %vm2745 = vweird.f32 %v2740
        %v2746 = vsel %vm2745, %v2740, %v2744
        %v2747 = vmul.f32 %v2736, %v2746
        %v2748 = vmul.f32 %v2739, %v2746
        %v2749 = vsub.f32 %v2730, %v2747
        %v2750 = vsub.f32 %v2731, %v2748
        %v2751 = vmul.f32 %v2749, %v2749
        %v2752 = vmul.f32 %v2750, %v2750
        %v2753 = vsel %vm2122, %v2751, 0.0
        %2754 = vadd.xlane.f32.xlu0 %v2753
        %v2755 = vpop.xlane.xlu0 %2754
        %v2756 = vsel %vm2122, %v2752, 0.0
        %2757 = vadd.xlane.f32.xlu0 %v2756
        %v2758 = vpop.xlane.xlu0 %2757
        %v2759 = vmul.f32 %v2755, %v2746
        %v2760 = vmul.f32 %v2758, %v2746
        %v2761 = vadd.f32 %v2759, 1e-05
        %v2762 = vadd.f32 %v2760, 1e-05
        %v2763 = vrsqrt.pop %v2761
        %v2764 = vmul.f32 %v2763, %v2761
        %v2765 = vmul.f32 %v2764, %v2763
        %v2766 = vmul.f32 0.5, %v2765
        %v2767 = vsub.f32 1.5, %v2766
        %v2768 = vmul.f32 %v2763, %v2767
        %vm2769 = vweird.f32 %v2761
        %vm2770 = vweird.f32 %v2763
        %vm2771 = vmor %vm2769, %vm2770
        %v2772 = vsel %vm2771, %v2763, %v2768
        %v2773 = vrsqrt.pop %v2762
        %v2774 = vmul.f32 %v2773, %v2762
        %v2775 = vmul.f32 %v2774, %v2773
        %v2776 = vmul.f32 0.5, %v2775
        %v2777 = vsub.f32 1.5, %v2776
        %v2778 = vmul.f32 %v2773, %v2777
        %vm2779 = vweird.f32 %v2762
        %vm2780 = vweird.f32 %v2773
        %vm2781 = vmor %vm2779, %vm2780
        %v2782 = vsel %vm2781, %v2773, %v2778
        %v2783 = vmul.f32 %v2749, %v2772
        %v2784 = vmul.f32 %v2750, %v2782
        %v2786 = vperm.slane %v2732, 0
        %v2788 = vmul.f32 %v2783, %v2786
        %v2789 = vmul.f32 %v2784, %v2786
        %v2791 = vperm.slane %v2733, 0
        %v2793 = vadd.f32 %v2788, %v2791
        %v2794 = vadd.f32 %v2789, %v2791
        %v2795 = vld [vmem:[%s1897] sm:$0xf]
        %v2796 = vld [vmem:[%s1897 + $0x4] sm:$0xf]
        %v2797 = vld [vmem:[%s1897 + $0x8] sm:$0xf]
        %v2798 = vld [vmem:[%s1897 + $0xc] sm:$0xf]
        %v2799 = vld [vmem:[%s1902] sm:$0xf]
        %v2800 = vld [vmem:[%s1902 + $0x4] sm:$0xf]
        %v2801 = vld [vmem:[%s1902 + $0x8] sm:$0xf]
        %v2802 = vld [vmem:[%s1902 + $0xc] sm:$0xf]
        %v2803 = vld [vmem:[%s1603] sm:$0xf]
        %v2804 = vld [vmem:[%s1603 + $0x4] sm:$0xf]
        %v2805 = vld [vmem:[%s1603 + $0x8] sm:$0xf]
        %v2806 = vld [vmem:[%s1603 + $0xc] sm:$0xf]
        %v2807 = vld [vmem:[%s1613] sm:$0xf]
        %v2808 = vld [vmem:[%s1613 + $0x4] sm:$0xf]
        %v2809 = vld [vmem:[%s1613 + $0x8] sm:$0xf]
        %v2810 = vld [vmem:[%s1613 + $0xc] sm:$0xf]
        %v2811 = vld [vmem:[%s1622] sm:$0x1]
        %v2812 = vld [vmem:[%s1631] sm:$0x1]
        %v2813 = vld [vmem:[%s1640] sm:$0x1]
        %v2814 = vld [vmem:[%s1905] sm:$0x1]
        %v2815 = vpack.c.bf16 %v2794, %v2793
        %v2817 = vperm.slane %v2811, 0
        %v2823 = vunpack.c.l.b16 %v2795
        %v2824 = vunpack.c.l.b16 %v2796
        %v2825 = vunpack.c.l.b16 %v2797
        %v2826 = vunpack.c.l.b16 %v2798
        %v2827 = vpack.c.b16 %v2824, %v2823
        %v2828 = vpack.c.b16 %v2826, %v2825
        %v2832 = vsel %vm2122, %v2815, 0
        %2834 = vmatpush.bf16.msra.mxu0 0
        %2835 = vmatpush.bf16.msra.mxu0 0
        %2836 = vmatpush.bf16.msra.mxu0 0
        %2837 = vmatpush.bf16.msra.mxu0 0
        %2838 = vmatpush.bf16.msra.mxu0 0
        %2839 = vmatpush.bf16.msra.mxu0 0
        %2840 = vmatpush.bf16.msra.mxu0 %v2828
        %2841 = vmatpush.bf16.msra.mxu0 %v2827
        %2842 = vmatmul.bf16.gmra.mxu0 %v2832
        %v2843 = vpop.f32.mrf.mxu0
        %v2844 = vadd.f32 %v2817, %v2843
        %v2845 = vpop.f32.mrf.mxu0
        %v2846 = vadd.f32 %v2817, %v2845
        %2847 = vdwg.mxu0
        %v2848 = vmul.f32 %v2844, 0.35355338
        %v2849 = vmul.f32 %v2846, 0.35355338
        %v2851 = vperm.slane %v2812, 0
        %v2857 = vunpack.c.l.b16 %v2080
        %v2858 = vunpack.c.l.b16 %v2081
        %v2859 = vunpack.c.l.b16 %v2082
        %v2860 = vunpack.c.l.b16 %v2083
        %v2861 = vpack.c.b16 %v2858, %v2857
        %v2862 = vpack.c.b16 %v2860, %v2859
        %v2867 = vunpack.c.l.b16 %v2799
        %v2868 = vunpack.c.l.b16 %v2800
        %v2869 = vunpack.c.l.b16 %v2801
        %v2870 = vunpack.c.l.b16 %v2802
        %v2871 = vpack.c.b16 %v2868, %v2867
        %v2872 = vpack.c.b16 %v2870, %v2869
        %v2876 = vsel %vm2122, %v2861, 0
        %v2879 = vsel %vm2122, %v2862, 0
        %2881 = vmatpush.bf16.msra.mxu0 0
        %2882 = vmatpush.bf16.msra.mxu0 0
        %2883 = vmatpush.bf16.msra.mxu0 0
        %2884 = vmatpush.bf16.msra.mxu0 0
        %2885 = vmatpush.bf16.msra.mxu0 0
        %2886 = vmatpush.bf16.msra.mxu0 0
        %2887 = vmatpush.bf16.msra.mxu0 %v2872
        %2888 = vmatpush.bf16.msra.mxu0 %v2871
        %2889 = vmatmul.bf16.gmra.mxu0 %v2876
        %v2890 = vpop.f32.mrf.mxu0
        %v2891 = vadd.f32 %v2851, %v2890
        %v2892 = vpop.f32.mrf.mxu0
        %v2893 = vadd.f32 %v2851, %v2892
        %2894 = vmatmul.bf16.gmra.mxu0 %v2879
        %v2895 = vpop.f32.mrf.mxu0
        %v2896 = vadd.f32 %v2851, %v2895
        %v2897 = vpop.f32.mrf.mxu0
        %v2898 = vadd.f32 %v2851, %v2897
        %2899 = vdwg.mxu0
        %v2901 = vperm.slane %v2813, 0
        %v2907 = vunpack.c.l.b16 %v2803
        %v2908 = vunpack.c.l.b16 %v2804
        %v2909 = vunpack.c.l.b16 %v2805
        %v2910 = vunpack.c.l.b16 %v2806
        %v2911 = vpack.c.b16 %v2908, %v2907
        %v2912 = vpack.c.b16 %v2910, %v2909
        %2915 = vmatpush.bf16.msra.mxu0 0
        %2916 = vmatpush.bf16.msra.mxu0 0
        %2917 = vmatpush.bf16.msra.mxu0 0
        %2918 = vmatpush.bf16.msra.mxu0 0
        %2919 = vmatpush.bf16.msra.mxu0 0
        %2920 = vmatpush.bf16.msra.mxu0 0
        %2921 = vmatpush.bf16.msra.mxu0 %v2912
        %2922 = vmatpush.bf16.msra.mxu0 %v2911
        %2923 = vmatmul.bf16.gmra.mxu0 %v2876
        %v2924 = vpop.f32.mrf.mxu0
        %v2925 = vadd.f32 %v2901, %v2924
        %v2926 = vpop.f32.mrf.mxu0
        %v2927 = vadd.f32 %v2901, %v2926
        %2928 = vmatmul.bf16.gmra.mxu0 %v2879
        %v2929 = vpop.f32.mrf.mxu0
        %v2930 = vadd.f32 %v2901, %v2929
        %v2931 = vpop.f32.mrf.mxu0
        %v2932 = vadd.f32 %v2901, %v2931
        %2933 = vdwg.mxu0
        %v2934 = vpack.c.bf16 %v2848, %v2848
        %v2935 = vpack.c.bf16 %v2849, %v2849
        %v2936 = vpack.c.bf16 %v2891, %v2891
        %v2937 = vpack.c.bf16 %v2893, %v2893
        %v2938 = vpack.c.bf16 %v2896, %v2896
        %v2939 = vpack.c.bf16 %v2898, %v2898
        %v2940 = vpack.c.bf16 %v2925, %v2925
        %v2941 = vpack.c.bf16 %v2927, %v2927
        %v2942 = vpack.c.bf16 %v2930, %v2930
        %v2943 = vpack.c.bf16 %v2932, %v2932
        %v2945 = vperm.slane %v2085, 0
        %v2949 = vunpack.c.l.b16 %v2936
        %v2950 = vunpack.c.l.b16 %v2937
        %v2951 = vpack.c.b16 %v2950, %v2949
        %v2953 = vsel %vm2209, %v2934, 0
        %v2956 = vsel %vm2209, %v2951, 0
        %2958 = vmatpush.bf16.xpose.msra.mxu0 0
        %2959 = vmatpush.bf16.xpose.msra.mxu0 0
        %2960 = vmatpush.bf16.xpose.msra.mxu0 0
        %2961 = vmatpush.bf16.xpose.msra.mxu0 0
        %2962 = vmatpush.bf16.xpose.msra.mxu0 0
        %2963 = vmatpush.bf16.xpose.msra.mxu0 0
        %2964 = vmatpush.bf16.xpose.msra.mxu0 0
        %2965 = vmatpush.bf16.xpose.msra.mxu0 %v2956
        %2966 = vmatmul.bf16.gmra.mxu0 %v2953
        %v2967 = vpop.f32.mrf.mxu0
        %v2968 = vadd.f32 %v2945, %v2967
        %v2969 = vpop.f32.mrf.mxu0
        %2970 = vdwg.mxu0
        %v2973 = vunpack.c.l.b16 %v2938
        %v2974 = vunpack.c.l.b16 %v2939
        %v2975 = vpack.c.b16 %v2974, %v2973
        %v2977 = vsel %vm2209, %v2935, 0
        %v2980 = vsel %vm2209, %v2975, 0
        %2982 = vmatpush.bf16.xpose.msra.mxu0 0
        %2983 = vmatpush.bf16.xpose.msra.mxu0 0
        %2984 = vmatpush.bf16.xpose.msra.mxu0 0
        %2985 = vmatpush.bf16.xpose.msra.mxu0 0
        %2986 = vmatpush.bf16.xpose.msra.mxu0 0
        %2987 = vmatpush.bf16.xpose.msra.mxu0 0
        %2988 = vmatpush.bf16.xpose.msra.mxu0 0
        %2989 = vmatpush.bf16.xpose.msra.mxu0 %v2980
        %2990 = vmatmul.bf16.gmra.mxu0 %v2977
        %v2991 = vpop.f32.mrf.mxu0
        %v2992 = vadd.f32 %v2945, %v2991
        %v2993 = vpop.f32.mrf.mxu0
        %2994 = vdwg.mxu0
        %v2995 = vsel %vm2691, %v2968, -inf
        %2996 = vmax.xlane.f32.xlu0 %v2995
        %v2997 = vpop.xlane.xlu0 %2996
        %v2998 = vsel %vm2691, %v2992, -inf
        %2999 = vmax.xlane.f32.xlu0 %v2998
        %v3000 = vpop.xlane.xlu0 %2999
        %v3001 = vsub.f32 %v2968, %v2997
        %v3002 = vsub.f32 %v2992, %v3000
        %v3003 = vmul.f32 %v3001, 1.442695
        %v3004 = vpow.pop %v3003
        %v3005 = vmul.f32 %v3002, 1.442695
        %v3006 = vpow.pop %v3005
        %v3007 = vsel %vm2691, %v3004, 0.0
        %3008 = vadd.xlane.f32.xlu0 %v3007
        %v3009 = vpop.xlane.xlu0 %3008
        %v3010 = vsel %vm2691, %v3006, 0.0
        %3011 = vadd.xlane.f32.xlu0 %v3010
        %v3012 = vpop.xlane.xlu0 %3011
        %v3013 = vrcp.pop %v3009
        %v3014 = vrcp.pop %v3012
        %v3015 = vpack.c.bf16 %v3004, %v3004
        %v3016 = vpack.c.bf16 %v3006, %v3006
        %v3019 = vunpack.c.l.b16 %v2940
        %v3020 = vunpack.c.l.b16 %v2941
        %v3021 = vpack.c.b16 %v3020, %v3019
        %v3024 = vsel %vm2691, %v3015, 0
        %3026 = vmatpush.bf16.msra.mxu0 0
        %3027 = vmatpush.bf16.msra.mxu0 0
        %3028 = vmatpush.bf16.msra.mxu0 0
        %3029 = vmatpush.bf16.msra.mxu0 0
        %3030 = vmatpush.bf16.msra.mxu0 0
        %3031 = vmatpush.bf16.msra.mxu0 0
        %3032 = vmatpush.bf16.msra.mxu0 0
        %3033 = vmatpush.bf16.msra.mxu0 %v3021
        %3034 = vmatmul.bf16.gmra.mxu0 %v3024
        %v3035 = vpop.f32.mrf.mxu0
        %v3036 = vadd.f32 0.0, %v3035
        %v3037 = vpop.f32.mrf.mxu0
        %3038 = vdwg.mxu0
        %v3041 = vunpack.c.l.b16 %v2942
        %v3042 = vunpack.c.l.b16 %v2943
        %v3043 = vpack.c.b16 %v3042, %v3041
        %v3046 = vsel %vm2691, %v3016, 0
        %3048 = vmatpush.bf16.msra.mxu0 0
        %3049 = vmatpush.bf16.msra.mxu0 0
        %3050 = vmatpush.bf16.msra.mxu0 0
        %3051 = vmatpush.bf16.msra.mxu0 0
        %3052 = vmatpush.bf16.msra.mxu0 0
        %3053 = vmatpush.bf16.msra.mxu0 0
        %3054 = vmatpush.bf16.msra.mxu0 0
        %3055 = vmatpush.bf16.msra.mxu0 %v3043
        %3056 = vmatmul.bf16.gmra.mxu0 %v3046
        %v3057 = vpop.f32.mrf.mxu0
        %v3058 = vadd.f32 0.0, %v3057
        %v3059 = vpop.f32.mrf.mxu0
        %3060 = vdwg.mxu0
        %v3061 = vmul.f32 %v3036, %v3013
        %v3062 = vmul.f32 %v3058, %v3014
        %v3064 = vunpack.c.l.b16 %v2934
        %v3065 = vpack.c.b16 %v3064, %v3064
        %3066 = vrot.lane.b32.xlu0 %v3065, 120
        %v3067 = vpop.permute.xlu0 %3066
        %3068 = vrot.lane.b32.xlu0 %v2951, 120
        %v3069 = vpop.permute.xlu0 %3068
        %v3071 = vsel %vm2209, %v3067, 0
        %v3074 = vsel %vm2209, %v3069, 0
        %3076 = vmatpush.bf16.xpose.msra.mxu0 0
        %3077 = vmatpush.bf16.xpose.msra.mxu0 0
        %3078 = vmatpush.bf16.xpose.msra.mxu0 0
        %3079 = vmatpush.bf16.xpose.msra.mxu0 0
        %3080 = vmatpush.bf16.xpose.msra.mxu0 0
        %3081 = vmatpush.bf16.xpose.msra.mxu0 0
        %3082 = vmatpush.bf16.xpose.msra.mxu0 0
        %3083 = vmatpush.bf16.xpose.msra.mxu0 %v3074
        %3084 = vmatmul.bf16.gmra.mxu0 %v3071
        %v3085 = vpop.f32.mrf.mxu0
        %v3086 = vadd.f32 %v2945, %v3085
        %v3087 = vpop.f32.mrf.mxu0
        %3088 = vdwg.mxu0
        %v3090 = vunpack.c.l.b16 %v2935
        %v3091 = vpack.c.b16 %v3090, %v3090
        %3092 = vrot.lane.b32.xlu0 %v3091, 120
        %v3093 = vpop.permute.xlu0 %3092
        %3094 = vrot.lane.b32.xlu0 %v2975, 120
        %v3095 = vpop.permute.xlu0 %3094
        %v3097 = vsel %vm2209, %v3093, 0
        %v3100 = vsel %vm2209, %v3095, 0
        %3102 = vmatpush.bf16.xpose.msra.mxu0 0
        %3103 = vmatpush.bf16.xpose.msra.mxu0 0
        %3104 = vmatpush.bf16.xpose.msra.mxu0 0
        %3105 = vmatpush.bf16.xpose.msra.mxu0 0
        %3106 = vmatpush.bf16.xpose.msra.mxu0 0
        %3107 = vmatpush.bf16.xpose.msra.mxu0 0
        %3108 = vmatpush.bf16.xpose.msra.mxu0 0
        %3109 = vmatpush.bf16.xpose.msra.mxu0 %v3100
        %3110 = vmatmul.bf16.gmra.mxu0 %v3097
        %v3111 = vpop.f32.mrf.mxu0
        %v3112 = vadd.f32 %v2945, %v3111
        %v3113 = vpop.f32.mrf.mxu0
        %3114 = vdwg.mxu0
        %v3115 = vsel %vm2691, %v3086, -inf
        %3116 = vmax.xlane.f32.xlu0 %v3115
        %v3117 = vpop.xlane.xlu0 %3116
        %v3118 = vsel %vm2691, %v3112, -inf
        %3119 = vmax.xlane.f32.xlu0 %v3118
        %v3120 = vpop.xlane.xlu0 %3119
        %v3121 = vsub.f32 %v3086, %v3117
        %v3122 = vsub.f32 %v3112, %v3120
        %v3123 = vmul.f32 %v3121, 1.442695
        %v3124 = vpow.pop %v3123
        %v3125 = vmul.f32 %v3122, 1.442695
        %v3126 = vpow.pop %v3125
        %v3127 = vsel %vm2691, %v3124, 0.0
        %3128 = vadd.xlane.f32.xlu0 %v3127
        %v3129 = vpop.xlane.xlu0 %3128
        %v3130 = vsel %vm2691, %v3126, 0.0
        %3131 = vadd.xlane.f32.xlu0 %v3130
        %v3132 = vpop.xlane.xlu0 %3131
        %v3133 = vrcp.pop %v3129
        %v3134 = vrcp.pop %v3132
        %v3135 = vpack.c.bf16 %v3124, %v3124
        %v3136 = vpack.c.bf16 %v3126, %v3126
        %3137 = vrot.lane.b32.xlu0 %v3021, 120
        %v3138 = vpop.permute.xlu0 %3137
        %v3141 = vsel %vm2691, %v3135, 0
        %3143 = vmatpush.bf16.msra.mxu0 0
        %3144 = vmatpush.bf16.msra.mxu0 0
        %3145 = vmatpush.bf16.msra.mxu0 0
        %3146 = vmatpush.bf16.msra.mxu0 0
        %3147 = vmatpush.bf16.msra.mxu0 0
        %3148 = vmatpush.bf16.msra.mxu0 0
        %3149 = vmatpush.bf16.msra.mxu0 0
        %3150 = vmatpush.bf16.msra.mxu0 %v3138
        %3151 = vmatmul.bf16.gmra.mxu0 %v3141
        %v3152 = vpop.f32.mrf.mxu0
        %v3153 = vadd.f32 0.0, %v3152
        %v3154 = vpop.f32.mrf.mxu0
        %3155 = vdwg.mxu0
        %3156 = vrot.lane.b32.xlu0 %v3043, 120
        %v3157 = vpop.permute.xlu0 %3156
        %v3160 = vsel %vm2691, %v3136, 0
        %3162 = vmatpush.bf16.msra.mxu0 0
        %3163 = vmatpush.bf16.msra.mxu0 0
        %3164 = vmatpush.bf16.msra.mxu0 0
        %3165 = vmatpush.bf16.msra.mxu0 0
        %3166 = vmatpush.bf16.msra.mxu0 0
        %3167 = vmatpush.bf16.msra.mxu0 0
        %3168 = vmatpush.bf16.msra.mxu0 0
        %3169 = vmatpush.bf16.msra.mxu0 %v3157
        %3170 = vmatmul.bf16.gmra.mxu0 %v3160
        %v3171 = vpop.f32.mrf.mxu0
        %v3172 = vadd.f32 0.0, %v3171
        %v3173 = vpop.f32.mrf.mxu0
        %3174 = vdwg.mxu0
        %v3175 = vmul.f32 %v3153, %v3133
        %v3176 = vmul.f32 %v3172, %v3134
        %3177 = vrot.lane.b32.xlu0 %v3065, 112
        %v3178 = vpop.permute.xlu0 %3177
        %3179 = vrot.lane.b32.xlu0 %v2951, 112
        %v3180 = vpop.permute.xlu0 %3179
        %v3182 = vsel %vm2209, %v3178, 0
        %v3185 = vsel %vm2209, %v3180, 0
        %3187 = vmatpush.bf16.xpose.msra.mxu0 0
        %3188 = vmatpush.bf16.xpose.msra.mxu0 0
        %3189 = vmatpush.bf16.xpose.msra.mxu0 0
        %3190 = vmatpush.bf16.xpose.msra.mxu0 0
        %3191 = vmatpush.bf16.xpose.msra.mxu0 0
        %3192 = vmatpush.bf16.xpose.msra.mxu0 0
        %3193 = vmatpush.bf16.xpose.msra.mxu0 0
        %3194 = vmatpush.bf16.xpose.msra.mxu0 %v3185
        %3195 = vmatmul.bf16.gmra.mxu0 %v3182
        %v3196 = vpop.f32.mrf.mxu0
        %v3197 = vadd.f32 %v2945, %v3196
        %v3198 = vpop.f32.mrf.mxu0
        %3199 = vdwg.mxu0
        %3200 = vrot.lane.b32.xlu0 %v3091, 112
        %v3201 = vpop.permute.xlu0 %3200
        %3202 = vrot.lane.b32.xlu0 %v2975, 112
        %v3203 = vpop.permute.xlu0 %3202
        %v3205 = vsel %vm2209, %v3201, 0
        %v3208 = vsel %vm2209, %v3203, 0
        %3210 = vmatpush.bf16.xpose.msra.mxu0 0
        %3211 = vmatpush.bf16.xpose.msra.mxu0 0
        %3212 = vmatpush.bf16.xpose.msra.mxu0 0
        %3213 = vmatpush.bf16.xpose.msra.mxu0 0
        %3214 = vmatpush.bf16.xpose.msra.mxu0 0
        %3215 = vmatpush.bf16.xpose.msra.mxu0 0
        %3216 = vmatpush.bf16.xpose.msra.mxu0 0
        %3217 = vmatpush.bf16.xpose.msra.mxu0 %v3208
        %3218 = vmatmul.bf16.gmra.mxu0 %v3205
        %v3219 = vpop.f32.mrf.mxu0
        %v3220 = vadd.f32 %v2945, %v3219
        %v3221 = vpop.f32.mrf.mxu0
        %3222 = vdwg.mxu0
        %v3223 = vsel %vm2691, %v3197, -inf
        %3224 = vmax.xlane.f32.xlu0 %v3223
        %v3225 = vpop.xlane.xlu0 %3224
        %v3226 = vsel %vm2691, %v3220, -inf
        %3227 = vmax.xlane.f32.xlu0 %v3226
        %v3228 = vpop.xlane.xlu0 %3227
        %v3229 = vsub.f32 %v3197, %v3225
        %v3230 = vsub.f32 %v3220, %v3228
        %v3231 = vmul.f32 %v3229, 1.442695
        %v3232 = vpow.pop %v3231
        %v3233 = vmul.f32 %v3230, 1.442695
        %v3234 = vpow.pop %v3233
        %v3235 = vsel %vm2691, %v3232, 0.0
        %3236 = vadd.xlane.f32.xlu0 %v3235
        %v3237 = vpop.xlane.xlu0 %3236
        %v3238 = vsel %vm2691, %v3234, 0.0
        %3239 = vadd.xlane.f32.xlu0 %v3238
        %v3240 = vpop.xlane.xlu0 %3239
        %v3241 = vrcp.pop %v3237
        %v3242 = vrcp.pop %v3240
        %v3243 = vpack.c.bf16 %v3232, %v3232
        %v3244 = vpack.c.bf16 %v3234, %v3234
        %3245 = vrot.lane.b32.xlu0 %v3021, 112
        %v3246 = vpop.permute.xlu0 %3245
        %v3249 = vsel %vm2691, %v3243, 0
        %3251 = vmatpush.bf16.msra.mxu0 0
        %3252 = vmatpush.bf16.msra.mxu0 0
        %3253 = vmatpush.bf16.msra.mxu0 0
        %3254 = vmatpush.bf16.msra.mxu0 0
        %3255 = vmatpush.bf16.msra.mxu0 0
        %3256 = vmatpush.bf16.msra.mxu0 0
        %3257 = vmatpush.bf16.msra.mxu0 0
        %3258 = vmatpush.bf16.msra.mxu0 %v3246
        %3259 = vmatmul.bf16.gmra.mxu0 %v3249
        %v3260 = vpop.f32.mrf.mxu0
        %v3261 = vadd.f32 0.0, %v3260
        %v3262 = vpop.f32.mrf.mxu0
        %3263 = vdwg.mxu0
        %3264 = vrot.lane.b32.xlu0 %v3043, 112
        %v3265 = vpop.permute.xlu0 %3264
        %v3268 = vsel %vm2691, %v3244, 0
        %3270 = vmatpush.bf16.msra.mxu0 0
        %3271 = vmatpush.bf16.msra.mxu0 0
        %3272 = vmatpush.bf16.msra.mxu0 0
        %3273 = vmatpush.bf16.msra.mxu0 0
        %3274 = vmatpush.bf16.msra.mxu0 0
        %3275 = vmatpush.bf16.msra.mxu0 0
        %3276 = vmatpush.bf16.msra.mxu0 0
        %3277 = vmatpush.bf16.msra.mxu0 %v3265
        %3278 = vmatmul.bf16.gmra.mxu0 %v3268
        %v3279 = vpop.f32.mrf.mxu0
        %v3280 = vadd.f32 0.0, %v3279
        %v3281 = vpop.f32.mrf.mxu0
        %3282 = vdwg.mxu0
        %v3283 = vmul.f32 %v3261, %v3241
        %v3284 = vmul.f32 %v3280, %v3242
        %3285 = vrot.lane.b32.xlu0 %v3065, 104
        %v3286 = vpop.permute.xlu0 %3285
        %3287 = vrot.lane.b32.xlu0 %v2951, 104
        %v3288 = vpop.permute.xlu0 %3287
        %v3290 = vsel %vm2209, %v3286, 0
        %v3293 = vsel %vm2209, %v3288, 0
        %3295 = vmatpush.bf16.xpose.msra.mxu0 0
        %3296 = vmatpush.bf16.xpose.msra.mxu0 0
        %3297 = vmatpush.bf16.xpose.msra.mxu0 0
        %3298 = vmatpush.bf16.xpose.msra.mxu0 0
        %3299 = vmatpush.bf16.xpose.msra.mxu0 0
        %3300 = vmatpush.bf16.xpose.msra.mxu0 0
        %3301 = vmatpush.bf16.xpose.msra.mxu0 0
        %3302 = vmatpush.bf16.xpose.msra.mxu0 %v3293
        %3303 = vmatmul.bf16.gmra.mxu0 %v3290
        %v3304 = vpop.f32.mrf.mxu0
        %v3305 = vadd.f32 %v2945, %v3304
        %v3306 = vpop.f32.mrf.mxu0
        %3307 = vdwg.mxu0
        %3308 = vrot.lane.b32.xlu0 %v3091, 104
        %v3309 = vpop.permute.xlu0 %3308
        %3310 = vrot.lane.b32.xlu0 %v2975, 104
        %v3311 = vpop.permute.xlu0 %3310
        %v3313 = vsel %vm2209, %v3309, 0
        %v3316 = vsel %vm2209, %v3311, 0
        %3318 = vmatpush.bf16.xpose.msra.mxu0 0
        %3319 = vmatpush.bf16.xpose.msra.mxu0 0
        %3320 = vmatpush.bf16.xpose.msra.mxu0 0
        %3321 = vmatpush.bf16.xpose.msra.mxu0 0
        %3322 = vmatpush.bf16.xpose.msra.mxu0 0
        %3323 = vmatpush.bf16.xpose.msra.mxu0 0
        %3324 = vmatpush.bf16.xpose.msra.mxu0 0
        %3325 = vmatpush.bf16.xpose.msra.mxu0 %v3316
        %3326 = vmatmul.bf16.gmra.mxu0 %v3313
        %v3327 = vpop.f32.mrf.mxu0
        %v3328 = vadd.f32 %v2945, %v3327
        %v3329 = vpop.f32.mrf.mxu0
        %3330 = vdwg.mxu0
        %v3331 = vsel %vm2691, %v3305, -inf
        %3332 = vmax.xlane.f32.xlu0 %v3331
        %v3333 = vpop.xlane.xlu0 %3332
        %v3334 = vsel %vm2691, %v3328, -inf
        %3335 = vmax.xlane.f32.xlu0 %v3334
        %v3336 = vpop.xlane.xlu0 %3335
        %v3337 = vsub.f32 %v3305, %v3333
        %v3338 = vsub.f32 %v3328, %v3336
        %v3339 = vmul.f32 %v3337, 1.442695
        %v3340 = vpow.pop %v3339
        %v3341 = vmul.f32 %v3338, 1.442695
        %v3342 = vpow.pop %v3341
        %v3343 = vsel %vm2691, %v3340, 0.0
        %3344 = vadd.xlane.f32.xlu0 %v3343
        %v3345 = vpop.xlane.xlu0 %3344
        %v3346 = vsel %vm2691, %v3342, 0.0
        %3347 = vadd.xlane.f32.xlu0 %v3346
        %v3348 = vpop.xlane.xlu0 %3347
        %v3349 = vrcp.pop %v3345
        %v3350 = vrcp.pop %v3348
        %v3351 = vpack.c.bf16 %v3340, %v3340
        %v3352 = vpack.c.bf16 %v3342, %v3342
        %3353 = vrot.lane.b32.xlu0 %v3021, 104
        %v3354 = vpop.permute.xlu0 %3353
        %v3357 = vsel %vm2691, %v3351, 0
        %3359 = vmatpush.bf16.msra.mxu0 0
        %3360 = vmatpush.bf16.msra.mxu0 0
        %3361 = vmatpush.bf16.msra.mxu0 0
        %3362 = vmatpush.bf16.msra.mxu0 0
        %3363 = vmatpush.bf16.msra.mxu0 0
        %3364 = vmatpush.bf16.msra.mxu0 0
        %3365 = vmatpush.bf16.msra.mxu0 0
        %3366 = vmatpush.bf16.msra.mxu0 %v3354
        %3367 = vmatmul.bf16.gmra.mxu0 %v3357
        %v3368 = vpop.f32.mrf.mxu0
        %v3369 = vadd.f32 0.0, %v3368
        %v3370 = vpop.f32.mrf.mxu0
        %3371 = vdwg.mxu0
        %3372 = vrot.lane.b32.xlu0 %v3043, 104
        %v3373 = vpop.permute.xlu0 %3372
        %v3376 = vsel %vm2691, %v3352, 0
        %3378 = vmatpush.bf16.msra.mxu0 0
        %3379 = vmatpush.bf16.msra.mxu0 0
        %3380 = vmatpush.bf16.msra.mxu0 0
        %3381 = vmatpush.bf16.msra.mxu0 0
        %3382 = vmatpush.bf16.msra.mxu0 0
        %3383 = vmatpush.bf16.msra.mxu0 0
        %3384 = vmatpush.bf16.msra.mxu0 0
        %3385 = vmatpush.bf16.msra.mxu0 %v3373
        %3386 = vmatmul.bf16.gmra.mxu0 %v3376
        %v3387 = vpop.f32.mrf.mxu0
        %v3388 = vadd.f32 0.0, %v3387
        %v3389 = vpop.f32.mrf.mxu0
        %3390 = vdwg.mxu0
        %v3391 = vmul.f32 %v3369, %v3349
        %v3392 = vmul.f32 %v3388, %v3350
        %3395 = vrot.lane.b32.xlu0 %v3175, 8
        %v3396 = vpop.permute.xlu0 %3395
        %3397 = vrot.lane.b32.xlu0 %v3176, 8
        %v3398 = vpop.permute.xlu0 %3397
        %3403 = vrot.lane.b32.xlu0 %v3283, 16
        %v3404 = vpop.permute.xlu0 %3403
        %3405 = vrot.lane.b32.xlu0 %v3284, 16
        %v3406 = vpop.permute.xlu0 %3405
        %3411 = vrot.lane.b32.xlu0 %v3391, 24
        %v3412 = vpop.permute.xlu0 %3411
        %3413 = vrot.lane.b32.xlu0 %v3392, 24
        %v3414 = vpop.permute.xlu0 %3413
        %v3417 = vsel %vm2209, %v3061, %v3396
        %v3418 = vsel %vm2209, %v3062, %v3398
        %v3419 = vsel %vm2691, %v3417, %v3404
        %v3420 = vsel %vm2691, %v3418, %v3406
        %v3421 = vsel %vm2694, %v3419, %v3412
        %v3422 = vsel %vm2694, %v3420, %v3414
        %v3423 = vpack.c.bf16 %v3422, %v3421
        %v3425 = vperm.slane %v2814, 0
        %v3431 = vunpack.c.l.b16 %v2807
        %v3432 = vunpack.c.l.b16 %v2808
        %v3433 = vunpack.c.l.b16 %v2809
        %v3434 = vunpack.c.l.b16 %v2810
        %v3435 = vpack.c.b16 %v3432, %v3431
        %v3436 = vpack.c.b16 %v3434, %v3433
        %v3440 = vsel %vm2122, %v3423, 0
        %3442 = vmatpush.bf16.msra.mxu0 0
        %3443 = vmatpush.bf16.msra.mxu0 0
        %3444 = vmatpush.bf16.msra.mxu0 0
        %3445 = vmatpush.bf16.msra.mxu0 0
        %3446 = vmatpush.bf16.msra.mxu0 0
        %3447 = vmatpush.bf16.msra.mxu0 0
        %3448 = vmatpush.bf16.msra.mxu0 %v3436
        %3449 = vmatpush.bf16.msra.mxu0 %v3435
        %3450 = vmatmul.bf16.gmra.mxu0 %v3440
        %v3451 = vpop.f32.mrf.mxu0
        %v3452 = vadd.f32 %v3425, %v3451
        %v3453 = vpop.f32.mrf.mxu0
        %v3454 = vadd.f32 %v3425, %v3453
        %3455 = vdwg.mxu0
        %v3456 = vadd.f32 %v2793, %v3452
        %v3457 = vadd.f32 %v2794, %v3454
        %v3458 = vld [vmem:[%s1924] sm:$0x1]
        %v3459 = vld [vmem:[%s1667] sm:$0x1]
        %v3460 = vsel %vm2122, %v3456, 0.0
        %3461 = vadd.xlane.f32.xlu0 %v3460
        %v3462 = vpop.xlane.xlu0 %3461
        %v3463 = vsel %vm2122, %v3457, 0.0
        %3464 = vadd.xlane.f32.xlu0 %v3463
        %v3465 = vpop.xlane.xlu0 %3464
        %v3466 = vmul.f32 %v3462, %v2746
        %v3467 = vmul.f32 %v3465, %v2746
        %v3468 = vsub.f32 %v3456, %v3466
        %v3469 = vsub.f32 %v3457, %v3467
        %v3470 = vmul.f32 %v3468, %v3468
        %v3471 = vmul.f32 %v3469, %v3469
        %v3472 = vsel %vm2122, %v3470, 0.0
        %3473 = vadd.xlane.f32.xlu0 %v3472
        %v3474 = vpop.xlane.xlu0 %3473
        %v3475 = vsel %vm2122, %v3471, 0.0
        %3476 = vadd.xlane.f32.xlu0 %v3475
        %v3477 = vpop.xlane.xlu0 %3476
        %v3478 = vmul.f32 %v3474, %v2746
        %v3479 = vmul.f32 %v3477, %v2746
        %v3480 = vadd.f32 %v3478, 1e-05
        %v3481 = vadd.f32 %v3479, 1e-05
        %v3482 = vrsqrt.pop %v3480
        %v3483 = vmul.f32 %v3482, %v3480
        %v3484 = vmul.f32 %v3483, %v3482
        %v3485 = vmul.f32 0.5, %v3484
        %v3486 = vsub.f32 1.5, %v3485
        %v3487 = vmul.f32 %v3482, %v3486
        %vm3488 = vweird.f32 %v3480
        %vm3489 = vweird.f32 %v3482
        %vm3490 = vmor %vm3488, %vm3489
        %v3491 = vsel %vm3490, %v3482, %v3487
        %v3492 = vrsqrt.pop %v3481
        %v3493 = vmul.f32 %v3492, %v3481
        %v3494 = vmul.f32 %v3493, %v3492
        %v3495 = vmul.f32 0.5, %v3494
        %v3496 = vsub.f32 1.5, %v3495
        %v3497 = vmul.f32 %v3492, %v3496
        %vm3498 = vweird.f32 %v3481
        %vm3499 = vweird.f32 %v3492
        %vm3500 = vmor %vm3498, %vm3499
        %v3501 = vsel %vm3500, %v3492, %v3497
        %v3502 = vmul.f32 %v3468, %v3491
        %v3503 = vmul.f32 %v3469, %v3501
        %v3505 = vperm.slane %v3458, 0
        %v3507 = vmul.f32 %v3502, %v3505
        %v3508 = vmul.f32 %v3503, %v3505
        %v3510 = vperm.slane %v3459, 0
        %v3512 = vadd.f32 %v3507, %v3510
        %v3513 = vadd.f32 %v3508, %v3510
        %v3514 = vld [vmem:[%s1910] sm:$0xf]
        %v3515 = vld [vmem:[%s1910 + $0x4] sm:$0xf]
        %v3516 = vld [vmem:[%s1910 + $0x8] sm:$0xf]
        %v3517 = vld [vmem:[%s1910 + $0xc] sm:$0xf]
        %v3518 = vld [vmem:[%s1649] sm:$0x1]
        %v3519 = vpack.c.bf16 %v3513, %v3512
        %v3521 = vperm.slane %v3518, 0
        %v3527 = vunpack.c.l.b16 %v3514
        %v3528 = vunpack.c.l.b16 %v3515
        %v3529 = vunpack.c.l.b16 %v3516
        %v3530 = vunpack.c.l.b16 %v3517
        %v3531 = vpack.c.b16 %v3528, %v3527
        %v3532 = vpack.c.b16 %v3530, %v3529
        %v3536 = vsel %vm2122, %v3519, 0
        %3538 = vmatpush.bf16.msra.mxu0 0
        %3539 = vmatpush.bf16.msra.mxu0 0
        %3540 = vmatpush.bf16.msra.mxu0 0
        %3541 = vmatpush.bf16.msra.mxu0 0
        %3542 = vmatpush.bf16.msra.mxu0 0
        %3543 = vmatpush.bf16.msra.mxu0 0
        %3544 = vmatpush.bf16.msra.mxu0 %v3532
        %3545 = vmatpush.bf16.msra.mxu0 %v3531
        %3546 = vmatmul.bf16.gmra.mxu0 %v3536
        %v3547 = vpop.f32.mrf.mxu0
        %v3548 = vadd.f32 %v3521, %v3547
        %v3549 = vpop.f32.mrf.mxu0
        %v3550 = vadd.f32 %v3521, %v3549
        %3551 = vdwg.mxu0
        %v3552 = vmax.f32 %v3548, 0.0
        %v3553 = vmax.f32 %v3550, 0.0
        %v3554 = vpack.c.bf16 %v3553, %v3552
        %v3555 = vld [vmem:[%s1915] sm:$0xf]
        %v3556 = vld [vmem:[%s1915 + $0x4] sm:$0xf]
        %v3557 = vld [vmem:[%s1915 + $0x8] sm:$0xf]
        %v3558 = vld [vmem:[%s1915 + $0xc] sm:$0xf]
        %v3559 = vld [vmem:[%s1915 + $0x10] sm:$0xf]
        %v3560 = vld [vmem:[%s1915 + $0x14] sm:$0xf]
        %v3561 = vld [vmem:[%s1915 + $0x18] sm:$0xf]
        %v3562 = vld [vmem:[%s1915 + $0x1c] sm:$0xf]
        %v3563 = vld [vmem:[%s1918] sm:$0x1]
        %v3565 = vperm.slane %v3563, 0
        %v3575 = vunpack.c.l.b16 %v3555
        %v3576 = vunpack.c.l.b16 %v3556
        %v3577 = vunpack.c.l.b16 %v3557
        %v3578 = vunpack.c.l.b16 %v3558
        %v3579 = vunpack.c.l.b16 %v3559
        %v3580 = vunpack.c.l.b16 %v3560
        %v3581 = vunpack.c.l.b16 %v3561
        %v3582 = vunpack.c.l.b16 %v3562
        %v3583 = vpack.c.b16 %v3576, %v3575
        %v3584 = vpack.c.b16 %v3578, %v3577
        %v3585 = vpack.c.b16 %v3580, %v3579
        %v3586 = vpack.c.b16 %v3582, %v3581
        %vm3591 = vcmask 523264
        %v3593 = vsel %vm3591, %v3554, 0
        %3595 = vmatpush.bf16.msra.mxu0 0
        %3596 = vmatpush.bf16.msra.mxu0 0
        %3597 = vmatpush.bf16.msra.mxu0 0
        %3598 = vmatpush.bf16.msra.mxu0 0
        %3599 = vmatpush.bf16.msra.mxu0 %v3586
        %3600 = vmatpush.bf16.msra.mxu0 %v3585
        %3601 = vmatpush.bf16.msra.mxu0 %v3584
        %3602 = vmatpush.bf16.msra.mxu0 %v3583
        %3603 = vmatmul.bf16.gmra.mxu0 %v3593
        %v3604 = vpop.f32.mrf.mxu0
        %v3605 = vadd.f32 %v3565, %v3604
        %v3606 = vpop.f32.mrf.mxu0
        %v3607 = vadd.f32 %v3565, %v3606
        %3608 = vdwg.mxu0
        %v3609 = vadd.f32 %v3512, %v3605
        %v3610 = vadd.f32 %v3513, %v3607
        %v3611 = vld [vmem:[%s1927] sm:$0x1]
        %v3612 = vld [vmem:[%s1676] sm:$0x1]
        %v3613 = vsel %vm2122, %v3609, 0.0
        %3614 = vadd.xlane.f32.xlu0 %v3613
        %v3615 = vpop.xlane.xlu0 %3614
        %v3616 = vsel %vm2122, %v3610, 0.0
        %3617 = vadd.xlane.f32.xlu0 %v3616
        %v3618 = vpop.xlane.xlu0 %3617
        %v3619 = vmul.f32 %v3615, %v2746
        %v3620 = vmul.f32 %v3618, %v2746
        %v3621 = vsub.f32 %v3609, %v3619
        %v3622 = vsub.f32 %v3610, %v3620
        %v3623 = vmul.f32 %v3621, %v3621
        %v3624 = vmul.f32 %v3622, %v3622
        %v3625 = vsel %vm2122, %v3623, 0.0
        %3626 = vadd.xlane.f32.xlu0 %v3625
        %v3627 = vpop.xlane.xlu0 %3626
        %v3628 = vsel %vm2122, %v3624, 0.0
        %3629 = vadd.xlane.f32.xlu0 %v3628
        %v3630 = vpop.xlane.xlu0 %3629
        %v3631 = vmul.f32 %v3627, %v2746
        %v3632 = vmul.f32 %v3630, %v2746
        %v3633 = vadd.f32 %v3631, 1e-05
        %v3634 = vadd.f32 %v3632, 1e-05
        %v3635 = vrsqrt.pop %v3633
        %v3636 = vmul.f32 %v3635, %v3633
        %v3637 = vmul.f32 %v3636, %v3635
        %v3638 = vmul.f32 0.5, %v3637
        %v3639 = vsub.f32 1.5, %v3638
        %v3640 = vmul.f32 %v3635, %v3639
        %vm3641 = vweird.f32 %v3633
        %vm3642 = vweird.f32 %v3635
        %vm3643 = vmor %vm3641, %vm3642
        %v3644 = vsel %vm3643, %v3635, %v3640
        %v3645 = vrsqrt.pop %v3634
        %v3646 = vmul.f32 %v3645, %v3634
        %v3647 = vmul.f32 %v3646, %v3645
        %v3648 = vmul.f32 0.5, %v3647
        %v3649 = vsub.f32 1.5, %v3648
        %v3650 = vmul.f32 %v3645, %v3649
        %vm3651 = vweird.f32 %v3634
        %vm3652 = vweird.f32 %v3645
        %vm3653 = vmor %vm3651, %vm3652
        %v3654 = vsel %vm3653, %v3645, %v3650
        %v3655 = vmul.f32 %v3621, %v3644
        %v3656 = vmul.f32 %v3622, %v3654
        %v3658 = vperm.slane %v3611, 0
        %v3660 = vmul.f32 %v3655, %v3658
        %v3661 = vmul.f32 %v3656, %v3658
        %v3663 = vperm.slane %v3612, 0
        %v3665 = vadd.f32 %v3660, %v3663
        %v3666 = vadd.f32 %v3661, %v3663
        %3667 = vst.msk [vmem:[#allocation2] sm:$0xff] %vm2122, %v3665
        %3668 = vst.msk [vmem:[#allocation2 + $0x8] sm:$0xff] %vm2122, %v3666
        %p3669 = scmp.eq.s32.totalorder %s118, 1
        // Predicated region
        $region253: #{tpu_custom_call.1} parent=167 // pred_check
          %p3670 = pneg %p3669
        $region254: #{tpu_custom_call.1} parent=167 // pred_check_branch
          %3672 = sbr.rel (%p3670) target = $region256
        $region255: #{tpu_custom_call.1} parent=167 // pred_region
          %v3673 = vld [vmem:[#allocation9] sm:$0x3]
          %v3674 = vperm.slane %v3673, 0
          %v3675 = vlaneseq
          %v3676 = vshrl.u32 %v3675, 7
          %3678 = vset.pattern.permute.xlu0 %v3676
          %3679 = vperm.xlu0 %3678, %v3674
          %v3680 = vpop.permute.xlu0 %3679
          %v3681 = vperm.slane %v3673, 1
          %v3682 = vlaneseq
          %v3683 = vshrl.u32 %v3682, 7
          %3685 = vset.pattern.permute.xlu0 %v3683
          %3686 = vperm.xlu0 %3685, %v3681
          %v3687 = vpop.permute.xlu0 %3686
          %v3688 = vmul.f32 %v3665, %v3680
          %v3689 = vmul.f32 %v3666, %v3687
          %v3690 = vsel %vm2122, %v3688, 0.0
          %v3691 = vrot.slane %v3690, 4
          %v3692 = vadd.f32 %v3690, %v3691
          %v3693 = vrot.slane %v3692, 2
          %v3694 = vadd.f32 %v3692, %v3693
          %v3695 = vrot.slane %v3694, 1
          %v3696 = vadd.f32 %v3694, %v3695
          %v3697 = vsel %vm2122, %v3689, 0.0
          %v3698 = vrot.slane %v3697, 4
          %v3699 = vadd.f32 %v3697, %v3698
          %v3700 = vrot.slane %v3699, 2
          %v3701 = vadd.f32 %v3699, %v3700
          %v3702 = vrot.slane %v3701, 1
          %v3703 = vadd.f32 %v3701, %v3702
          %v3704 = vld [vmem:[%s19] sm:$0xf]
          %v3705 = vld [vmem:[%s19 + $0x4] sm:$0xf]
          %v3706 = vld [vmem:[%s19 + $0x8] sm:$0xf]
          %v3707 = vld [vmem:[%s19 + $0xc] sm:$0xf]
          %v3708 = vld [vmem:[#allocation4] sm:$0x1]
          %v3709 = vpack.c.bf16 %v3696, %v3696
          %v3710 = vpack.c.bf16 %v3703, %v3703
          %v3712 = vperm.slane %v3708, 0
          %v3716 = vunpack.c.l.b16 %v3709
          %v3717 = vunpack.c.l.b16 %v3710
          %vm3718 = vcmask 1041409
          %v3719 = vsel %vm3718, %v3717, %v3716
          %v3720 = vpack.c.b16 %v3719, %v3719
          %v3725 = vunpack.c.l.b16 %v3704
          %v3726 = vunpack.c.l.b16 %v3705
          %v3727 = vunpack.c.l.b16 %v3706
          %v3728 = vunpack.c.l.b16 %v3707
          %v3729 = vpack.c.b16 %v3726, %v3725
          %v3730 = vpack.c.b16 %v3728, %v3727
          %v3734 = vsel %vm2122, %v3720, 0
          %3736 = vmatpush.bf16.msra.mxu0 0
          %3737 = vmatpush.bf16.msra.mxu0 0
          %3738 = vmatpush.bf16.msra.mxu0 0
          %3739 = vmatpush.bf16.msra.mxu0 0
          %3740 = vmatpush.bf16.msra.mxu0 0
          %3741 = vmatpush.bf16.msra.mxu0 0
          %3742 = vmatpush.bf16.msra.mxu0 %v3730
          %3743 = vmatpush.bf16.msra.mxu0 %v3729
          %3744 = vmatmul.bf16.gmra.mxu0 %v3734
          %v3745 = vpop.f32.mrf.mxu0
          %v3746 = vadd.f32 %v3712, %v3745
          %v3747 = vpop.f32.mrf.mxu0
          %3748 = vdwg.mxu0
          %vm3749 = vcmask 1024
          %3750 = vst.msk [vmem:[%s1931] sm:$0x3] %vm3749, %v3746
        $region256: #{tpu_custom_call.1} parent=167 // pred_fallthru
          _
        %p3751 = scmp.lt.s32.totalorder %s117, 0
        %s3752 = scalar_select %p3751, %s117, 0
        %s3753 = smul.addr %s3752, 2
        %s3754 = scalar_lea.vmem %s75, %s3753
        // Predicated region
        $region257: #{tpu_custom_call.1} parent=167 // pred_check
          %p3755 = pneg %p1065
        $region258: #{tpu_custom_call.1} parent=167 // pred_check_branch
          %3757 = sbr.rel (%p3755) target = $region260
        $region259: #{tpu_custom_call.1} parent=167 // pred_region
          _
        $region260: #{tpu_custom_call.1} parent=167 // pred_fallthru
          _
        // Predicated region
        $region261: #{tpu_custom_call.1} parent=167 // pred_check
          %p3758 = pneg %p1065
        $region262: #{tpu_custom_call.1} parent=167 // pred_check_branch
          %3760 = sbr.rel (%p3758) target = $region264
        $region263: #{tpu_custom_call.1} parent=167 // pred_region
          %p3761 = scmp.lt.s32.totalorder %s117, 0
          %s3762 = scalar_select %p3761, %s117, 0
          %s3763 = smul.addr %s3762, 2
          %s3764 = scalar_lea.vmem %s75, %s3763
        $region264: #{tpu_custom_call.1} parent=167 // pred_fallthru
          _
      $region168: #{tpu_custom_call.1} parent=5 // pred_fallthru
        _
      %p3765 = scmp.le.s32.totalorder 2, %s108
      // Predicated region
      $region265: #{tpu_custom_call.1} parent=5 // pred_check
        %p3766 = pneg %p3765
      $region266: #{tpu_custom_call.1} parent=5 // pred_check_branch
        %3768 = sbr.rel (%p3766) target = $region268
      $region267: #{tpu_custom_call.1} parent=5 // pred_region
        %s3769 = ssub.s32 %s108, 2
      $region268: #{tpu_custom_call.1} parent=5 // pred_fallthru
        _
    $region6: #{tpu_custom_call.1} parent=1 // loop_footer
      %s112 = sadd.s32 1, %s108
    $region7: #{tpu_custom_call.1} parent=1 // loop_footer_branch
      %107 = sbr.rel target = $region3
    $region8: #{tpu_custom_call.1} parent=1 // loop_exit
      _
    %3770 = vsyncpa [#allocation6], 1
    %s3771 = scalar_lea.sflag [#allocation6], 1
    %3772 = vsyncpa %s3771, 1
    %3773 = vsyncpa [#allocation8], 1
    %3774 = vsyncpa [#allocation11], 1
    %3775 = vsyncpa [#allocation14], 1
    %3776 = vsyncpa [#allocation17], 1
    %s3777 = scalar_lea.sflag [#allocation17], 1
    %3778 = vsyncpa %s3777, 1
    %3779 = vsyncpa [#allocation20], 1
    %s3780 = scalar_lea.sflag [#allocation20], 1
    %3781 = vsyncpa %s3780, 1
    %3782 = vsyncpa [#allocation23], 1
    %s3783 = scalar_lea.sflag [#allocation23], 1
    %3784 = vsyncpa %s3783, 1
    %3785 = vsyncpa [#allocation26], 1
    %s3786 = scalar_lea.sflag [#allocation26], 1
    %3787 = vsyncpa %s3786, 1
    %3788 = vsyncpa [#allocation29], 1
    %s3789 = scalar_lea.sflag [#allocation29], 1
    %3790 = vsyncpa %s3789, 1
    %3791 = vsyncpa [#allocation32], 1
    %s3792 = scalar_lea.sflag [#allocation32], 1
    %3793 = vsyncpa %s3792, 1
    %3794 = vsyncpa [#allocation35], 1
    %s3795 = scalar_lea.sflag [#allocation35], 1
    %3796 = vsyncpa %s3795, 1

</llo_original>
